<compile_context>
chip_gen: v7x
topology: tpu7x:2x2x1
jax: 0.10.0
libtpu: 0.0.40
codegen_flags: <defaults>
</compile_context>

<pallas_src>
import functools

import jax
import jax.numpy as jnp
from jax import lax
from jax.experimental import pallas as pl
from jax.experimental.pallas import tpu as pltpu

LANE = 128


def _round_up(x, m):
    return (x + m - 1) // m * m


def decoder_rnn_kernel(tok_ref,        # SMEM (T,)   int32  token ids
                       h0_ref,         # VMEM (1,Hp) f32    initial hidden
                       emb_ref,        # VMEM (V,Hp) f32    embedding table
                       wx_ref,         # VMEM (Hp,4Hp) f32  input->gates  [r|z|i_n|h_n]
                       wh_ref,         # VMEM (Hp,4Hp) f32  hidden->gates [r|z|i_n|h_n]
                       b_ref,          # VMEM (1,4Hp) f32   fused gate bias
                       wout_ref,       # VMEM (Hp,Op) f32   output projection (transposed)
                       bout_ref,       # VMEM (1,Op)  f32   output bias
                       logp_ref,       # OUT  (T,Op)  f32   per-step log-softmax
                       hout_ref,       # OUT  (1,Hp)  f32   final hidden
                       *, T, Hp, valid_out):
    Op = bout_ref.shape[-1]

    # ---- hoisted loop invariants (loaded / built exactly once) ----
    wx = wx_ref[...]                                   # (Hp, 4Hp)
    wh = wh_ref[...]                                   # (Hp, 4Hp)
    b = b_ref[...]                                     # (1, 4Hp)
    wout = wout_ref[...]                               # (Hp, Op)
    col = lax.broadcasted_iota(jnp.int32, (1, Op), 1)
    # output bias with padded lanes pre-set to -inf: per-step masking is a free add
    bout_masked = jnp.where(col < valid_out, bout_ref[...], -jnp.inf)

    h = h0_ref[...]                                    # (1, Hp) f32 carried value

    for t in range(T):                                 # T static -> fully unrolled
        # --- F.relu(self.embedding(input)) : in-kernel row gather ---
        tok = tok_ref[t]
        x = jnp.maximum(emb_ref[pl.ds(tok, 1), :], 0.0)            # (1, Hp)

        # --- GRU cell: two matvecs, gates [r | z | i_n | h_n] ---
        g = (jnp.dot(x, wx, preferred_element_type=jnp.float32)
             + jnp.dot(h, wh, preferred_element_type=jnp.float32)
             + b)                                                   # (1, 4Hp)
        r = jax.nn.sigmoid(g[:, 0 * Hp:1 * Hp])
        z = jax.nn.sigmoid(g[:, 1 * Hp:2 * Hp])
        n = jnp.tanh(g[:, 2 * Hp:3 * Hp] + r * g[:, 3 * Hp:4 * Hp])
        h = (1.0 - z) * n + z * h                                   # (1, Hp)

        # --- Linear + LogSoftmax(dim=1) (padded lanes already -inf) ---
        logits = jnp.dot(h, wout, preferred_element_type=jnp.float32) + bout_masked
        m = jnp.max(logits, axis=-1, keepdims=True)
        shifted = logits - m
        lse = jnp.log(jnp.sum(jnp.exp(shifted), axis=-1, keepdims=True))
        logp_ref[pl.ds(t, 1), :] = shifted - lse                    # VMEM store only

    hout_ref[...] = h                                  # single final-hidden store


def decoder_rnn_decode(token_ids, hidden, params):
    """Run T decoder steps (each step == DecoderRNN.forward) in one pallas_call.

    token_ids : (T,) int32
    hidden    : (1, 1, H) f32 (PyTorch hidden layout)
    returns   : (log_probs (T, O), hidden (1, 1, H))
    """
    H = params["hidden_size"]
    O = params["output_size"]
    Hp = params["Hp"]
    Op = params["Op"]
    T = int(token_ids.shape[0])

    h0 = jnp.zeros((1, Hp), jnp.float32).at[:, :H].set(hidden.reshape(1, H))

    kernel = functools.partial(decoder_rnn_kernel, T=T, Hp=Hp, valid_out=O)

    vmem = pltpu.MemorySpace.VMEM
    logp_p, h_final_p = pl.pallas_call(
        kernel,
        out_shape=(
            jax.ShapeDtypeStruct((T, Op), jnp.float32),
            jax.ShapeDtypeStruct((1, Hp), jnp.float32),
        ),
        in_specs=[
            pl.BlockSpec(memory_space=pltpu.MemorySpace.SMEM),   # token ids
            pl.BlockSpec(memory_space=vmem),                     # h0
            pl.BlockSpec(memory_space=vmem),                     # embedding table
            pl.BlockSpec(memory_space=vmem),                     # W_x
            pl.BlockSpec(memory_space=vmem),                     # W_h
            pl.BlockSpec(memory_space=vmem),                     # gate bias
            pl.BlockSpec(memory_space=vmem),                     # W_out^T
            pl.BlockSpec(memory_space=vmem),                     # b_out
        ],
        out_specs=(
            pl.BlockSpec(memory_space=vmem),                     # (T, Op) log-probs
            pl.BlockSpec(memory_space=vmem),                     # (1, Hp) final hidden
        ),
    )(token_ids.astype(jnp.int32), h0, params["emb_p"], params["w_x"],
      params["w_h"], params["b_big"], params["w_out_p"], params["b_out_p"])

    log_probs = logp_p[:, :O]
    hidden_out = h_final_p[:, :H].reshape(1, 1, H)
    return log_probs, hidden_out


def init_params(key, hidden_size, output_size):
    """Synthetic parameters in PyTorch layout + packed/padded TPU-side copies."""
    H, O = hidden_size, output_size
    Hp = _round_up(H, LANE)
    Op = _round_up(O, LANE)
    ks = jax.random.split(key, 7)
    scale = 0.1

    embedding = scale * jax.random.normal(ks[0], (O, H), jnp.float32)
    w_ih = scale * jax.random.normal(ks[1], (3 * H, H), jnp.float32)   # weight_ih_l0
    w_hh = scale * jax.random.normal(ks[2], (3 * H, H), jnp.float32)   # weight_hh_l0
    b_ih = scale * jax.random.normal(ks[3], (3 * H,), jnp.float32)
    b_hh = scale * jax.random.normal(ks[4], (3 * H,), jnp.float32)
    w_out = scale * jax.random.normal(ks[5], (O, H), jnp.float32)      # out.weight
    b_out = scale * jax.random.normal(ks[6], (O,), jnp.float32)

    # ---- packed / padded TPU-side parameters (f32, lane dims -> multiples of 128) ----
    emb_p = jnp.zeros((O, Hp), jnp.float32).at[:, :H].set(embedding)

    w_ih_r, w_ih_z, w_ih_n = w_ih[:H], w_ih[H:2 * H], w_ih[2 * H:]
    w_hh_r, w_hh_z, w_hh_n = w_hh[:H], w_hh[H:2 * H], w_hh[2 * H:]

    # input -> gates : cols [r | z | i_n | h_n], h_n block is zero (input has no n-path)
    w_x = jnp.zeros((Hp, 4 * Hp), jnp.float32)
    w_x = w_x.at[:H, 0 * Hp:0 * Hp + H].set(w_ih_r.T)
    w_x = w_x.at[:H, 1 * Hp:1 * Hp + H].set(w_ih_z.T)
    w_x = w_x.at[:H, 2 * Hp:2 * Hp + H].set(w_ih_n.T)

    # hidden -> gates : cols [r | z | i_n | h_n], i_n block is zero (hidden n-path is h_n)
    w_h = jnp.zeros((Hp, 4 * Hp), jnp.float32)
    w_h = w_h.at[:H, 0 * Hp:0 * Hp + H].set(w_hh_r.T)
    w_h = w_h.at[:H, 1 * Hp:1 * Hp + H].set(w_hh_z.T)
    w_h = w_h.at[:H, 3 * Hp:3 * Hp + H].set(w_hh_n.T)

    b_big = jnp.zeros((1, 4 * Hp), jnp.float32)
    b_big = b_big.at[0, 0 * Hp:0 * Hp + H].set(b_ih[:H] + b_hh[:H])
    b_big = b_big.at[0, 1 * Hp:1 * Hp + H].set(b_ih[H:2 * H] + b_hh[H:2 * H])
    b_big = b_big.at[0, 2 * Hp:2 * Hp + H].set(b_ih[2 * H:])
    b_big = b_big.at[0, 3 * Hp:3 * Hp + H].set(b_hh[2 * H:])

    w_out_p = jnp.zeros((Hp, Op), jnp.float32).at[:H, :O].set(w_out.T)
    b_out_p = jnp.zeros((1, Op), jnp.float32).at[0, :O].set(b_out)

    return dict(hidden_size=H, output_size=O, Hp=Hp, Op=Op,
                embedding=embedding, w_ih=w_ih, w_hh=w_hh, b_ih=b_ih, b_hh=b_hh,
                w_out=w_out, b_out=b_out,
                emb_p=emb_p, w_x=w_x, w_h=w_h, b_big=b_big,
                w_out_p=w_out_p, b_out_p=b_out_p)


def reference_decode(token_ids, hidden, p):
    """Pure-JAX f32 reference mirroring DecoderRNN.forward applied T times."""
    H = p["hidden_size"]
    h = hidden.reshape(1, H)
    outs = []
    for t in range(int(token_ids.shape[0])):
        x = jnp.maximum(p["embedding"][token_ids[t]].reshape(1, H), 0.0)
        gi = x @ p["w_ih"].T + p["b_ih"]
        gh = h @ p["w_hh"].T + p["b_hh"]
        i_r, i_z, i_n = gi[:, :H], gi[:, H:2 * H], gi[:, 2 * H:]
        h_r, h_z, h_n = gh[:, :H], gh[:, H:2 * H], gh[:, 2 * H:]
        r = jax.nn.sigmoid(i_r + h_r)
        z = jax.nn.sigmoid(i_z + h_z)
        n = jnp.tanh(i_n + r * h_n)
        h = (1.0 - z) * n + z * h
        logits = h @ p["w_out"].T + p["b_out"]
        outs.append(jax.nn.log_softmax(logits, axis=-1))
    return jnp.concatenate(outs, axis=0), h.reshape(1, 1, H)


if __name__ == "__main__":
    hidden_size = 32
    output_size = 64
    T = 6

    key = jax.random.PRNGKey(0)
    pkey, hkey, tkey = jax.random.split(key, 3)
    params = init_params(pkey, hidden_size, output_size)

    token_ids = jax.random.randint(tkey, (T,), 0, output_size, dtype=jnp.int32)
    hidden = 0.1 * jax.random.normal(hkey, (1, 1, hidden_size), jnp.float32)

    log_probs, new_hidden = decoder_rnn_decode(token_ids, hidden, params)
    jax.block_until_ready((log_probs, new_hidden))

    assert log_probs.shape == (T, output_size)
    assert new_hidden.shape == (1, 1, hidden_size)
    # LogSoftmax sanity: per-step probabilities sum to ~1 (padding masked correctly).
    sums = jnp.sum(jnp.exp(log_probs), axis=-1)
    assert bool(jnp.all(jnp.abs(sums - 1.0) < 1e-4))

    # Compare against a pure-JAX f32 reference.
    ref_logp, ref_hidden = reference_decode(token_ids, hidden, params)
    assert bool(jnp.max(jnp.abs(log_probs - ref_logp)) < 1e-2)
    assert bool(jnp.max(jnp.abs(new_hidden - ref_hidden)) < 1e-2)

    print("KERNEL_OK")
</pallas_src>

<mosaic_0001>
module attributes {stable_mosaic.version = 11 : i64} {
  func.func @decoder_rnn_kernel(%arg0: memref<6xi32, #tpu.memory_space<smem>>, %arg1: memref<1x128xf32, #tpu.memory_space<vmem>>, %arg2: memref<64x128xf32, #tpu.memory_space<vmem>>, %arg3: memref<128x512xf32, #tpu.memory_space<vmem>>, %arg4: memref<128x512xf32, #tpu.memory_space<vmem>>, %arg5: memref<1x512xf32, #tpu.memory_space<vmem>>, %arg6: memref<128x128xf32, #tpu.memory_space<vmem>>, %arg7: memref<1x128xf32, #tpu.memory_space<vmem>>, %arg8: memref<6x128xf32, #tpu.memory_space<vmem>>, %arg9: memref<1x128xf32, #tpu.memory_space<vmem>>) attributes {dimension_semantics = [], scalar_prefetch = 0 : i64, scratch_operands = 0 : i64, tpu.core_type = #tpu.core_type<tc>} {
    %c0 = arith.constant 0 : index
    %c0_0 = arith.constant 0 : index
    %0 = vector.load %arg3[%c0, %c0_0] : memref<128x512xf32, #tpu.memory_space<vmem>>, vector<128x512xf32>
    %c0_1 = arith.constant 0 : index
    %c0_2 = arith.constant 0 : index
    %1 = vector.load %arg4[%c0_1, %c0_2] : memref<128x512xf32, #tpu.memory_space<vmem>>, vector<128x512xf32>
    %c0_3 = arith.constant 0 : index
    %c0_4 = arith.constant 0 : index
    %2 = vector.load %arg5[%c0_3, %c0_4] : memref<1x512xf32, #tpu.memory_space<vmem>>, vector<1x512xf32>
    %c0_5 = arith.constant 0 : index
    %c0_6 = arith.constant 0 : index
    %3 = vector.load %arg6[%c0_5, %c0_6] : memref<128x128xf32, #tpu.memory_space<vmem>>, vector<128x128xf32>
    %4 = tpu.iota {dimensions = array<i32: 1>} : vector<1x128xi32>
    %c64_i32 = arith.constant 64 : i32
    %5 = vector.broadcast %c64_i32 : i32 to vector<1x128xi32>
    %6 = arith.cmpi slt, %4, %5 : vector<1x128xi32>
    %c0_7 = arith.constant 0 : index
    %c0_8 = arith.constant 0 : index
    %7 = vector.load %arg7[%c0_7, %c0_8] : memref<1x128xf32, #tpu.memory_space<vmem>>, vector<1x128xf32>
    %cst = arith.constant 0xFF800000 : f32
    %8 = vector.broadcast %cst : f32 to vector<1x128xf32>
    %9 = arith.select %6, %7, %8 : vector<1x128xi1>, vector<1x128xf32>
    %c0_9 = arith.constant 0 : index
    %c0_10 = arith.constant 0 : index
    %10 = vector.load %arg1[%c0_9, %c0_10] : memref<1x128xf32, #tpu.memory_space<vmem>>, vector<1x128xf32>
    %c0_11 = arith.constant 0 : index
    %11 = memref.load %arg0[%c0_11] : memref<6xi32, #tpu.memory_space<smem>>
    %12 = arith.index_cast %11 : i32 to index
    %c0_12 = arith.constant 0 : index
    %13 = vector.load %arg2[%12, %c0_12] : memref<64x128xf32, #tpu.memory_space<vmem>>, vector<1x128xf32>
    %cst_13 = arith.constant 0.000000e+00 : f32
    %14 = vector.broadcast %cst_13 : f32 to vector<1x128xf32>
    %15 = arith.maximumf %13, %14 : vector<1x128xf32>
    %cst_14 = arith.constant dense<0.000000e+00> : vector<1x512xf32>
    %16 = tpu.matmul %15, %0, %cst_14 {dimension_numbers = #tpu.dot_dimension_numbers<[1], [0], [0], [1], [0, 0, 1, 1], [], []>} : vector<1x128xf32>, vector<128x512xf32>, vector<1x512xf32> -> vector<1x512xf32>
    %cst_15 = arith.constant dense<0.000000e+00> : vector<1x512xf32>
    %17 = tpu.matmul %10, %1, %cst_15 {dimension_numbers = #tpu.dot_dimension_numbers<[1], [0], [0], [1], [0, 0, 1, 1], [], []>} : vector<1x128xf32>, vector<128x512xf32>, vector<1x512xf32> -> vector<1x512xf32>
    %18 = arith.addf %16, %17 : vector<1x512xf32>
    %19 = arith.addf %18, %2 : vector<1x512xf32>
    %20 = vector.extract_strided_slice %19 {offsets = [0, 0], sizes = [1, 128], strides = [1, 1]} : vector<1x512xf32> to vector<1x128xf32>
    %21 = arith.negf %20 : vector<1x128xf32>
    %22 = math.exp %21 : vector<1x128xf32>
    %cst_16 = arith.constant 1.000000e+00 : f32
    %23 = vector.broadcast %cst_16 : f32 to vector<1x128xf32>
    %24 = arith.addf %23, %22 : vector<1x128xf32>
    %25 = arith.divf %23, %24 : vector<1x128xf32>
    %26 = vector.extract_strided_slice %19 {offsets = [0, 128], sizes = [1, 128], strides = [1, 1]} : vector<1x512xf32> to vector<1x128xf32>
    %27 = arith.negf %26 : vector<1x128xf32>
    %28 = math.exp %27 : vector<1x128xf32>
    %cst_17 = arith.constant 1.000000e+00 : f32
    %29 = vector.broadcast %cst_17 : f32 to vector<1x128xf32>
    %30 = arith.addf %29, %28 : vector<1x128xf32>
    %31 = arith.divf %29, %30 : vector<1x128xf32>
    %32 = vector.extract_strided_slice %19 {offsets = [0, 256], sizes = [1, 128], strides = [1, 1]} : vector<1x512xf32> to vector<1x128xf32>
    %33 = vector.extract_strided_slice %19 {offsets = [0, 384], sizes = [1, 128], strides = [1, 1]} : vector<1x512xf32> to vector<1x128xf32>
    %34 = arith.mulf %25, %33 : vector<1x128xf32>
    %35 = arith.addf %32, %34 : vector<1x128xf32>
    %36 = math.tanh %35 : vector<1x128xf32>
    %cst_18 = arith.constant 1.000000e+00 : f32
    %37 = vector.broadcast %cst_18 : f32 to vector<1x128xf32>
    %38 = arith.subf %37, %31 : vector<1x128xf32>
    %39 = arith.mulf %38, %36 : vector<1x128xf32>
    %40 = arith.mulf %31, %10 : vector<1x128xf32>
    %41 = arith.addf %39, %40 : vector<1x128xf32>
    %cst_19 = arith.constant dense<0.000000e+00> : vector<1x128xf32>
    %42 = tpu.matmul %41, %3, %cst_19 {dimension_numbers = #tpu.dot_dimension_numbers<[1], [0], [0], [1], [0, 0, 1, 1], [], []>} : vector<1x128xf32>, vector<128x128xf32>, vector<1x128xf32> -> vector<1x128xf32>
    %43 = arith.addf %42, %9 : vector<1x128xf32>
    %cst_20 = arith.constant dense<0xFF800000> : vector<1xf32>
    %44 = vector.multi_reduction <maximumf>, %43, %cst_20 [1] : vector<1x128xf32> to vector<1xf32>
    %45 = vector.shape_cast %44 : vector<1xf32> to vector<1x1xf32>
    %46 = vector.broadcast %45 : vector<1x1xf32> to vector<1x128xf32>
    %47 = arith.subf %43, %46 : vector<1x128xf32>
    %48 = math.exp %47 : vector<1x128xf32>
    %cst_21 = arith.constant dense<0.000000e+00> : vector<1xf32>
    %49 = vector.multi_reduction <add>, %48, %cst_21 [1] : vector<1x128xf32> to vector<1xf32>
    %50 = vector.shape_cast %49 : vector<1xf32> to vector<1x1xf32>
    %51 = math.log %50 : vector<1x1xf32>
    %52 = vector.broadcast %51 : vector<1x1xf32> to vector<1x128xf32>
    %53 = arith.subf %47, %52 : vector<1x128xf32>
    %c0_22 = arith.constant 0 : index
    %c0_23 = arith.constant 0 : index
    %54 = vector.load %arg8[%c0_22, %c0_23] : memref<6x128xf32, #tpu.memory_space<vmem>>, vector<1x128xf32>
    tpu.vector_store %arg8[%c0_22, %c0_23], %53 {strides = array<i32>} : memref<6x128xf32, #tpu.memory_space<vmem>>, vector<1x128xf32>,
    %c1 = arith.constant 1 : index
    %55 = memref.load %arg0[%c1] : memref<6xi32, #tpu.memory_space<smem>>
    %56 = arith.index_cast %55 : i32 to index
    %c0_24 = arith.constant 0 : index
    %57 = vector.load %arg2[%56, %c0_24] : memref<64x128xf32, #tpu.memory_space<vmem>>, vector<1x128xf32>
    %cst_25 = arith.constant 0.000000e+00 : f32
    %58 = vector.broadcast %cst_25 : f32 to vector<1x128xf32>
    %59 = arith.maximumf %57, %58 : vector<1x128xf32>
    %cst_26 = arith.constant dense<0.000000e+00> : vector<1x512xf32>
    %60 = tpu.matmul %59, %0, %cst_26 {dimension_numbers = #tpu.dot_dimension_numbers<[1], [0], [0], [1], [0, 0, 1, 1], [], []>} : vector<1x128xf32>, vector<128x512xf32>, vector<1x512xf32> -> vector<1x512xf32>
    %cst_27 = arith.constant dense<0.000000e+00> : vector<1x512xf32>
    %61 = tpu.matmul %41, %1, %cst_27 {dimension_numbers = #tpu.dot_dimension_numbers<[1], [0], [0], [1], [0, 0, 1, 1], [], []>} : vector<1x128xf32>, vector<128x512xf32>, vector<1x512xf32> -> vector<1x512xf32>
    %62 = arith.addf %60, %61 : vector<1x512xf32>
    %63 = arith.addf %62, %2 : vector<1x512xf32>
    %64 = vector.extract_strided_slice %63 {offsets = [0, 0], sizes = [1, 128], strides = [1, 1]} : vector<1x512xf32> to vector<1x128xf32>
    %65 = arith.negf %64 : vector<1x128xf32>
    %66 = math.exp %65 : vector<1x128xf32>
    %cst_28 = arith.constant 1.000000e+00 : f32
    %67 = vector.broadcast %cst_28 : f32 to vector<1x128xf32>
    %68 = arith.addf %67, %66 : vector<1x128xf32>
    %69 = arith.divf %67, %68 : vector<1x128xf32>
    %70 = vector.extract_strided_slice %63 {offsets = [0, 128], sizes = [1, 128], strides = [1, 1]} : vector<1x512xf32> to vector<1x128xf32>
    %71 = arith.negf %70 : vector<1x128xf32>
    %72 = math.exp %71 : vector<1x128xf32>
    %cst_29 = arith.constant 1.000000e+00 : f32
    %73 = vector.broadcast %cst_29 : f32 to vector<1x128xf32>
    %74 = arith.addf %73, %72 : vector<1x128xf32>
    %75 = arith.divf %73, %74 : vector<1x128xf32>
    %76 = vector.extract_strided_slice %63 {offsets = [0, 256], sizes = [1, 128], strides = [1, 1]} : vector<1x512xf32> to vector<1x128xf32>
    %77 = vector.extract_strided_slice %63 {offsets = [0, 384], sizes = [1, 128], strides = [1, 1]} : vector<1x512xf32> to vector<1x128xf32>
    %78 = arith.mulf %69, %77 : vector<1x128xf32>
    %79 = arith.addf %76, %78 : vector<1x128xf32>
    %80 = math.tanh %79 : vector<1x128xf32>
    %cst_30 = arith.constant 1.000000e+00 : f32
    %81 = vector.broadcast %cst_30 : f32 to vector<1x128xf32>
    %82 = arith.subf %81, %75 : vector<1x128xf32>
    %83 = arith.mulf %82, %80 : vector<1x128xf32>
    %84 = arith.mulf %75, %41 : vector<1x128xf32>
    %85 = arith.addf %83, %84 : vector<1x128xf32>
    %cst_31 = arith.constant dense<0.000000e+00> : vector<1x128xf32>
    %86 = tpu.matmul %85, %3, %cst_31 {dimension_numbers = #tpu.dot_dimension_numbers<[1], [0], [0], [1], [0, 0, 1, 1], [], []>} : vector<1x128xf32>, vector<128x128xf32>, vector<1x128xf32> -> vector<1x128xf32>
    %87 = arith.addf %86, %9 : vector<1x128xf32>
    %cst_32 = arith.constant dense<0xFF800000> : vector<1xf32>
    %88 = vector.multi_reduction <maximumf>, %87, %cst_32 [1] : vector<1x128xf32> to vector<1xf32>
    %89 = vector.shape_cast %88 : vector<1xf32> to vector<1x1xf32>
    %90 = vector.broadcast %89 : vector<1x1xf32> to vector<1x128xf32>
    %91 = arith.subf %87, %90 : vector<1x128xf32>
    %92 = math.exp %91 : vector<1x128xf32>
    %cst_33 = arith.constant dense<0.000000e+00> : vector<1xf32>
    %93 = vector.multi_reduction <add>, %92, %cst_33 [1] : vector<1x128xf32> to vector<1xf32>
    %94 = vector.shape_cast %93 : vector<1xf32> to vector<1x1xf32>
    %95 = math.log %94 : vector<1x1xf32>
    %96 = vector.broadcast %95 : vector<1x1xf32> to vector<1x128xf32>
    %97 = arith.subf %91, %96 : vector<1x128xf32>
    %c1_34 = arith.constant 1 : index
    %c0_35 = arith.constant 0 : index
    %98 = vector.load %arg8[%c1_34, %c0_35] : memref<6x128xf32, #tpu.memory_space<vmem>>, vector<1x128xf32>
    tpu.vector_store %arg8[%c1_34, %c0_35], %97 {strides = array<i32>} : memref<6x128xf32, #tpu.memory_space<vmem>>, vector<1x128xf32>,
    %c2 = arith.constant 2 : index
    %99 = memref.load %arg0[%c2] : memref<6xi32, #tpu.memory_space<smem>>
    %100 = arith.index_cast %99 : i32 to index
    %c0_36 = arith.constant 0 : index
    %101 = vector.load %arg2[%100, %c0_36] : memref<64x128xf32, #tpu.memory_space<vmem>>, vector<1x128xf32>
    %cst_37 = arith.constant 0.000000e+00 : f32
    %102 = vector.broadcast %cst_37 : f32 to vector<1x128xf32>
    %103 = arith.maximumf %101, %102 : vector<1x128xf32>
    %cst_38 = arith.constant dense<0.000000e+00> : vector<1x512xf32>
    %104 = tpu.matmul %103, %0, %cst_38 {dimension_numbers = #tpu.dot_dimension_numbers<[1], [0], [0], [1], [0, 0, 1, 1], [], []>} : vector<1x128xf32>, vector<128x512xf32>, vector<1x512xf32> -> vector<1x512xf32>
    %cst_39 = arith.constant dense<0.000000e+00> : vector<1x512xf32>
    %105 = tpu.matmul %85, %1, %cst_39 {dimension_numbers = #tpu.dot_dimension_numbers<[1], [0], [0], [1], [0, 0, 1, 1], [], []>} : vector<1x128xf32>, vector<128x512xf32>, vector<1x512xf32> -> vector<1x512xf32>
    %106 = arith.addf %104, %105 : vector<1x512xf32>
    %107 = arith.addf %106, %2 : vector<1x512xf32>
    %108 = vector.extract_strided_slice %107 {offsets = [0, 0], sizes = [1, 128], strides = [1, 1]} : vector<1x512xf32> to vector<1x128xf32>
    %109 = arith.negf %108 : vector<1x128xf32>
    %110 = math.exp %109 : vector<1x128xf32>
    %cst_40 = arith.constant 1.000000e+00 : f32
    %111 = vector.broadcast %cst_40 : f32 to vector<1x128xf32>
    %112 = arith.addf %111, %110 : vector<1x128xf32>
    %113 = arith.divf %111, %112 : vector<1x128xf32>
    %114 = vector.extract_strided_slice %107 {offsets = [0, 128], sizes = [1, 128], strides = [1, 1]} : vector<1x512xf32> to vector<1x128xf32>
    %115 = arith.negf %114 : vector<1x128xf32>
    %116 = math.exp %115 : vector<1x128xf32>
    %cst_41 = arith.constant 1.000000e+00 : f32
    %117 = vector.broadcast %cst_41 : f32 to vector<1x128xf32>
    %118 = arith.addf %117, %116 : vector<1x128xf32>
    %119 = arith.divf %117, %118 : vector<1x128xf32>
    %120 = vector.extract_strided_slice %107 {offsets = [0, 256], sizes = [1, 128], strides = [1, 1]} : vector<1x512xf32> to vector<1x128xf32>
    %121 = vector.extract_strided_slice %107 {offsets = [0, 384], sizes = [1, 128], strides = [1, 1]} : vector<1x512xf32> to vector<1x128xf32>
    %122 = arith.mulf %113, %121 : vector<1x128xf32>
    %123 = arith.addf %120, %122 : vector<1x128xf32>
    %124 = math.tanh %123 : vector<1x128xf32>
    %cst_42 = arith.constant 1.000000e+00 : f32
    %125 = vector.broadcast %cst_42 : f32 to vector<1x128xf32>
    %126 = arith.subf %125, %119 : vector<1x128xf32>
    %127 = arith.mulf %126, %124 : vector<1x128xf32>
    %128 = arith.mulf %119, %85 : vector<1x128xf32>
    %129 = arith.addf %127, %128 : vector<1x128xf32>
    %cst_43 = arith.constant dense<0.000000e+00> : vector<1x128xf32>
    %130 = tpu.matmul %129, %3, %cst_43 {dimension_numbers = #tpu.dot_dimension_numbers<[1], [0], [0], [1], [0, 0, 1, 1], [], []>} : vector<1x128xf32>, vector<128x128xf32>, vector<1x128xf32> -> vector<1x128xf32>
    %131 = arith.addf %130, %9 : vector<1x128xf32>
    %cst_44 = arith.constant dense<0xFF800000> : vector<1xf32>
    %132 = vector.multi_reduction <maximumf>, %131, %cst_44 [1] : vector<1x128xf32> to vector<1xf32>
    %133 = vector.shape_cast %132 : vector<1xf32> to vector<1x1xf32>
    %134 = vector.broadcast %133 : vector<1x1xf32> to vector<1x128xf32>
    %135 = arith.subf %131, %134 : vector<1x128xf32>
    %136 = math.exp %135 : vector<1x128xf32>
    %cst_45 = arith.constant dense<0.000000e+00> : vector<1xf32>
    %137 = vector.multi_reduction <add>, %136, %cst_45 [1] : vector<1x128xf32> to vector<1xf32>
    %138 = vector.shape_cast %137 : vector<1xf32> to vector<1x1xf32>
    %139 = math.log %138 : vector<1x1xf32>
    %140 = vector.broadcast %139 : vector<1x1xf32> to vector<1x128xf32>
    %141 = arith.subf %135, %140 : vector<1x128xf32>
    %c2_46 = arith.constant 2 : index
    %c0_47 = arith.constant 0 : index
    %142 = vector.load %arg8[%c2_46, %c0_47] : memref<6x128xf32, #tpu.memory_space<vmem>>, vector<1x128xf32>
    tpu.vector_store %arg8[%c2_46, %c0_47], %141 {strides = array<i32>} : memref<6x128xf32, #tpu.memory_space<vmem>>, vector<1x128xf32>,
    %c3 = arith.constant 3 : index
    %143 = memref.load %arg0[%c3] : memref<6xi32, #tpu.memory_space<smem>>
    %144 = arith.index_cast %143 : i32 to index
    %c0_48 = arith.constant 0 : index
    %145 = vector.load %arg2[%144, %c0_48] : memref<64x128xf32, #tpu.memory_space<vmem>>, vector<1x128xf32>
    %cst_49 = arith.constant 0.000000e+00 : f32
    %146 = vector.broadcast %cst_49 : f32 to vector<1x128xf32>
    %147 = arith.maximumf %145, %146 : vector<1x128xf32>
    %cst_50 = arith.constant dense<0.000000e+00> : vector<1x512xf32>
    %148 = tpu.matmul %147, %0, %cst_50 {dimension_numbers = #tpu.dot_dimension_numbers<[1], [0], [0], [1], [0, 0, 1, 1], [], []>} : vector<1x128xf32>, vector<128x512xf32>, vector<1x512xf32> -> vector<1x512xf32>
    %cst_51 = arith.constant dense<0.000000e+00> : vector<1x512xf32>
    %149 = tpu.matmul %129, %1, %cst_51 {dimension_numbers = #tpu.dot_dimension_numbers<[1], [0], [0], [1], [0, 0, 1, 1], [], []>} : vector<1x128xf32>, vector<128x512xf32>, vector<1x512xf32> -> vector<1x512xf32>
    %150 = arith.addf %148, %149 : vector<1x512xf32>
    %151 = arith.addf %150, %2 : vector<1x512xf32>
    %152 = vector.extract_strided_slice %151 {offsets = [0, 0], sizes = [1, 128], strides = [1, 1]} : vector<1x512xf32> to vector<1x128xf32>
    %153 = arith.negf %152 : vector<1x128xf32>
    %154 = math.exp %153 : vector<1x128xf32>
    %cst_52 = arith.constant 1.000000e+00 : f32
    %155 = vector.broadcast %cst_52 : f32 to vector<1x128xf32>
    %156 = arith.addf %155, %154 : vector<1x128xf32>
    %157 = arith.divf %155, %156 : vector<1x128xf32>
    %158 = vector.extract_strided_slice %151 {offsets = [0, 128], sizes = [1, 128], strides = [1, 1]} : vector<1x512xf32> to vector<1x128xf32>
    %159 = arith.negf %158 : vector<1x128xf32>
    %160 = math.exp %159 : vector<1x128xf32>
    %cst_53 = arith.constant 1.000000e+00 : f32
    %161 = vector.broadcast %cst_53 : f32 to vector<1x128xf32>
    %162 = arith.addf %161, %160 : vector<1x128xf32>
    %163 = arith.divf %161, %162 : vector<1x128xf32>
    %164 = vector.extract_strided_slice %151 {offsets = [0, 256], sizes = [1, 128], strides = [1, 1]} : vector<1x512xf32> to vector<1x128xf32>
    %165 = vector.extract_strided_slice %151 {offsets = [0, 384], sizes = [1, 128], strides = [1, 1]} : vector<1x512xf32> to vector<1x128xf32>
    %166 = arith.mulf %157, %165 : vector<1x128xf32>
    %167 = arith.addf %164, %166 : vector<1x128xf32>
    %168 = math.tanh %167 : vector<1x128xf32>
    %cst_54 = arith.constant 1.000000e+00 : f32
    %169 = vector.broadcast %cst_54 : f32 to vector<1x128xf32>
    %170 = arith.subf %169, %163 : vector<1x128xf32>
    %171 = arith.mulf %170, %168 : vector<1x128xf32>
    %172 = arith.mulf %163, %129 : vector<1x128xf32>
    %173 = arith.addf %171, %172 : vector<1x128xf32>
    %cst_55 = arith.constant dense<0.000000e+00> : vector<1x128xf32>
    %174 = tpu.matmul %173, %3, %cst_55 {dimension_numbers = #tpu.dot_dimension_numbers<[1], [0], [0], [1], [0, 0, 1, 1], [], []>} : vector<1x128xf32>, vector<128x128xf32>, vector<1x128xf32> -> vector<1x128xf32>
    %175 = arith.addf %174, %9 : vector<1x128xf32>
    %cst_56 = arith.constant dense<0xFF800000> : vector<1xf32>
    %176 = vector.multi_reduction <maximumf>, %175, %cst_56 [1] : vector<1x128xf32> to vector<1xf32>
    %177 = vector.shape_cast %176 : vector<1xf32> to vector<1x1xf32>
    %178 = vector.broadcast %177 : vector<1x1xf32> to vector<1x128xf32>
    %179 = arith.subf %175, %178 : vector<1x128xf32>
    %180 = math.exp %179 : vector<1x128xf32>
    %cst_57 = arith.constant dense<0.000000e+00> : vector<1xf32>
    %181 = vector.multi_reduction <add>, %180, %cst_57 [1] : vector<1x128xf32> to vector<1xf32>
    %182 = vector.shape_cast %181 : vector<1xf32> to vector<1x1xf32>
    %183 = math.log %182 : vector<1x1xf32>
    %184 = vector.broadcast %183 : vector<1x1xf32> to vector<1x128xf32>
    %185 = arith.subf %179, %184 : vector<1x128xf32>
    %c3_58 = arith.constant 3 : index
    %c0_59 = arith.constant 0 : index
    %186 = vector.load %arg8[%c3_58, %c0_59] : memref<6x128xf32, #tpu.memory_space<vmem>>, vector<1x128xf32>
    tpu.vector_store %arg8[%c3_58, %c0_59], %185 {strides = array<i32>} : memref<6x128xf32, #tpu.memory_space<vmem>>, vector<1x128xf32>,
    %c4 = arith.constant 4 : index
    %187 = memref.load %arg0[%c4] : memref<6xi32, #tpu.memory_space<smem>>
    %188 = arith.index_cast %187 : i32 to index
    %c0_60 = arith.constant 0 : index
    %189 = vector.load %arg2[%188, %c0_60] : memref<64x128xf32, #tpu.memory_space<vmem>>, vector<1x128xf32>
    %cst_61 = arith.constant 0.000000e+00 : f32
    %190 = vector.broadcast %cst_61 : f32 to vector<1x128xf32>
    %191 = arith.maximumf %189, %190 : vector<1x128xf32>
    %cst_62 = arith.constant dense<0.000000e+00> : vector<1x512xf32>
    %192 = tpu.matmul %191, %0, %cst_62 {dimension_numbers = #tpu.dot_dimension_numbers<[1], [0], [0], [1], [0, 0, 1, 1], [], []>} : vector<1x128xf32>, vector<128x512xf32>, vector<1x512xf32> -> vector<1x512xf32>
    %cst_63 = arith.constant dense<0.000000e+00> : vector<1x512xf32>
    %193 = tpu.matmul %173, %1, %cst_63 {dimension_numbers = #tpu.dot_dimension_numbers<[1], [0], [0], [1], [0, 0, 1, 1], [], []>} : vector<1x128xf32>, vector<128x512xf32>, vector<1x512xf32> -> vector<1x512xf32>
    %194 = arith.addf %192, %193 : vector<1x512xf32>
    %195 = arith.addf %194, %2 : vector<1x512xf32>
    %196 = vector.extract_strided_slice %195 {offsets = [0, 0], sizes = [1, 128], strides = [1, 1]} : vector<1x512xf32> to vector<1x128xf32>
    %197 = arith.negf %196 : vector<1x128xf32>
    %198 = math.exp %197 : vector<1x128xf32>
    %cst_64 = arith.constant 1.000000e+00 : f32
    %199 = vector.broadcast %cst_64 : f32 to vector<1x128xf32>
    %200 = arith.addf %199, %198 : vector<1x128xf32>
    %201 = arith.divf %199, %200 : vector<1x128xf32>
    %202 = vector.extract_strided_slice %195 {offsets = [0, 128], sizes = [1, 128], strides = [1, 1]} : vector<1x512xf32> to vector<1x128xf32>
    %203 = arith.negf %202 : vector<1x128xf32>
    %204 = math.exp %203 : vector<1x128xf32>
    %cst_65 = arith.constant 1.000000e+00 : f32
    %205 = vector.broadcast %cst_65 : f32 to vector<1x128xf32>
    %206 = arith.addf %205, %204 : vector<1x128xf32>
    %207 = arith.divf %205, %206 : vector<1x128xf32>
    %208 = vector.extract_strided_slice %195 {offsets = [0, 256], sizes = [1, 128], strides = [1, 1]} : vector<1x512xf32> to vector<1x128xf32>
    %209 = vector.extract_strided_slice %195 {offsets = [0, 384], sizes = [1, 128], strides = [1, 1]} : vector<1x512xf32> to vector<1x128xf32>
    %210 = arith.mulf %201, %209 : vector<1x128xf32>
    %211 = arith.addf %208, %210 : vector<1x128xf32>
    %212 = math.tanh %211 : vector<1x128xf32>
    %cst_66 = arith.constant 1.000000e+00 : f32
    %213 = vector.broadcast %cst_66 : f32 to vector<1x128xf32>
    %214 = arith.subf %213, %207 : vector<1x128xf32>
    %215 = arith.mulf %214, %212 : vector<1x128xf32>
    %216 = arith.mulf %207, %173 : vector<1x128xf32>
    %217 = arith.addf %215, %216 : vector<1x128xf32>
    %cst_67 = arith.constant dense<0.000000e+00> : vector<1x128xf32>
    %218 = tpu.matmul %217, %3, %cst_67 {dimension_numbers = #tpu.dot_dimension_numbers<[1], [0], [0], [1], [0, 0, 1, 1], [], []>} : vector<1x128xf32>, vector<128x128xf32>, vector<1x128xf32> -> vector<1x128xf32>
    %219 = arith.addf %218, %9 : vector<1x128xf32>
    %cst_68 = arith.constant dense<0xFF800000> : vector<1xf32>
    %220 = vector.multi_reduction <maximumf>, %219, %cst_68 [1] : vector<1x128xf32> to vector<1xf32>
    %221 = vector.shape_cast %220 : vector<1xf32> to vector<1x1xf32>
    %222 = vector.broadcast %221 : vector<1x1xf32> to vector<1x128xf32>
    %223 = arith.subf %219, %222 : vector<1x128xf32>
    %224 = math.exp %223 : vector<1x128xf32>
    %cst_69 = arith.constant dense<0.000000e+00> : vector<1xf32>
    %225 = vector.multi_reduction <add>, %224, %cst_69 [1] : vector<1x128xf32> to vector<1xf32>
    %226 = vector.shape_cast %225 : vector<1xf32> to vector<1x1xf32>
    %227 = math.log %226 : vector<1x1xf32>
    %228 = vector.broadcast %227 : vector<1x1xf32> to vector<1x128xf32>
    %229 = arith.subf %223, %228 : vector<1x128xf32>
    %c4_70 = arith.constant 4 : index
    %c0_71 = arith.constant 0 : index
    %230 = vector.load %arg8[%c4_70, %c0_71] : memref<6x128xf32, #tpu.memory_space<vmem>>, vector<1x128xf32>
    tpu.vector_store %arg8[%c4_70, %c0_71], %229 {strides = array<i32>} : memref<6x128xf32, #tpu.memory_space<vmem>>, vector<1x128xf32>,
    %c5 = arith.constant 5 : index
    %231 = memref.load %arg0[%c5] : memref<6xi32, #tpu.memory_space<smem>>
    %232 = arith.index_cast %231 : i32 to index
    %c0_72 = arith.constant 0 : index
    %233 = vector.load %arg2[%232, %c0_72] : memref<64x128xf32, #tpu.memory_space<vmem>>, vector<1x128xf32>
    %cst_73 = arith.constant 0.000000e+00 : f32
    %234 = vector.broadcast %cst_73 : f32 to vector<1x128xf32>
    %235 = arith.maximumf %233, %234 : vector<1x128xf32>
    %cst_74 = arith.constant dense<0.000000e+00> : vector<1x512xf32>
    %236 = tpu.matmul %235, %0, %cst_74 {dimension_numbers = #tpu.dot_dimension_numbers<[1], [0], [0], [1], [0, 0, 1, 1], [], []>} : vector<1x128xf32>, vector<128x512xf32>, vector<1x512xf32> -> vector<1x512xf32>
    %cst_75 = arith.constant dense<0.000000e+00> : vector<1x512xf32>
    %237 = tpu.matmul %217, %1, %cst_75 {dimension_numbers = #tpu.dot_dimension_numbers<[1], [0], [0], [1], [0, 0, 1, 1], [], []>} : vector<1x128xf32>, vector<128x512xf32>, vector<1x512xf32> -> vector<1x512xf32>
    %238 = arith.addf %236, %237 : vector<1x512xf32>
    %239 = arith.addf %238, %2 : vector<1x512xf32>
    %240 = vector.extract_strided_slice %239 {offsets = [0, 0], sizes = [1, 128], strides = [1, 1]} : vector<1x512xf32> to vector<1x128xf32>
    %241 = arith.negf %240 : vector<1x128xf32>
    %242 = math.exp %241 : vector<1x128xf32>
    %cst_76 = arith.constant 1.000000e+00 : f32
    %243 = vector.broadcast %cst_76 : f32 to vector<1x128xf32>
    %244 = arith.addf %243, %242 : vector<1x128xf32>
    %245 = arith.divf %243, %244 : vector<1x128xf32>
    %246 = vector.extract_strided_slice %239 {offsets = [0, 128], sizes = [1, 128], strides = [1, 1]} : vector<1x512xf32> to vector<1x128xf32>
    %247 = arith.negf %246 : vector<1x128xf32>
    %248 = math.exp %247 : vector<1x128xf32>
    %cst_77 = arith.constant 1.000000e+00 : f32
    %249 = vector.broadcast %cst_77 : f32 to vector<1x128xf32>
    %250 = arith.addf %249, %248 : vector<1x128xf32>
    %251 = arith.divf %249, %250 : vector<1x128xf32>
    %252 = vector.extract_strided_slice %239 {offsets = [0, 256], sizes = [1, 128], strides = [1, 1]} : vector<1x512xf32> to vector<1x128xf32>
    %253 = vector.extract_strided_slice %239 {offsets = [0, 384], sizes = [1, 128], strides = [1, 1]} : vector<1x512xf32> to vector<1x128xf32>
    %254 = arith.mulf %245, %253 : vector<1x128xf32>
    %255 = arith.addf %252, %254 : vector<1x128xf32>
    %256 = math.tanh %255 : vector<1x128xf32>
    %cst_78 = arith.constant 1.000000e+00 : f32
    %257 = vector.broadcast %cst_78 : f32 to vector<1x128xf32>
    %258 = arith.subf %257, %251 : vector<1x128xf32>
    %259 = arith.mulf %258, %256 : vector<1x128xf32>
    %260 = arith.mulf %251, %217 : vector<1x128xf32>
    %261 = arith.addf %259, %260 : vector<1x128xf32>
    %cst_79 = arith.constant dense<0.000000e+00> : vector<1x128xf32>
    %262 = tpu.matmul %261, %3, %cst_79 {dimension_numbers = #tpu.dot_dimension_numbers<[1], [0], [0], [1], [0, 0, 1, 1], [], []>} : vector<1x128xf32>, vector<128x128xf32>, vector<1x128xf32> -> vector<1x128xf32>
    %263 = arith.addf %262, %9 : vector<1x128xf32>
    %cst_80 = arith.constant dense<0xFF800000> : vector<1xf32>
    %264 = vector.multi_reduction <maximumf>, %263, %cst_80 [1] : vector<1x128xf32> to vector<1xf32>
    %265 = vector.shape_cast %264 : vector<1xf32> to vector<1x1xf32>
    %266 = vector.broadcast %265 : vector<1x1xf32> to vector<1x128xf32>
    %267 = arith.subf %263, %266 : vector<1x128xf32>
    %268 = math.exp %267 : vector<1x128xf32>
    %cst_81 = arith.constant dense<0.000000e+00> : vector<1xf32>
    %269 = vector.multi_reduction <add>, %268, %cst_81 [1] : vector<1x128xf32> to vector<1xf32>
    %270 = vector.shape_cast %269 : vector<1xf32> to vector<1x1xf32>
    %271 = math.log %270 : vector<1x1xf32>
    %272 = vector.broadcast %271 : vector<1x1xf32> to vector<1x128xf32>
    %273 = arith.subf %267, %272 : vector<1x128xf32>
    %c5_82 = arith.constant 5 : index
    %c0_83 = arith.constant 0 : index
    %274 = vector.load %arg8[%c5_82, %c0_83] : memref<6x128xf32, #tpu.memory_space<vmem>>, vector<1x128xf32>
    tpu.vector_store %arg8[%c5_82, %c0_83], %273 {strides = array<i32>} : memref<6x128xf32, #tpu.memory_space<vmem>>, vector<1x128xf32>,
    %c0_84 = arith.constant 0 : index
    %c0_85 = arith.constant 0 : index
    %275 = vector.load %arg9[%c0_84, %c0_85] : memref<1x128xf32, #tpu.memory_space<vmem>>, vector<1x128xf32>
    tpu.vector_store %arg9[%c0_84, %c0_85], %261 {strides = array<i32>} : memref<1x128xf32, #tpu.memory_space<vmem>>, vector<1x128xf32>,
    return
  }
}

</mosaic_0001>

<llo_original>
// kernel: tpu_custom_call.1
$region0: #{tpu_custom_call.1}
  #allocation0 [shape = 'u32[]', space=smem, size = 0x4, offset = 0x4, fixed_abs, tag = 'smem constant byte address 0x4 - core index']
  #allocation1 [shape = 'u32[144,128]{1,0:T(1,128)}', space=vmem, size = 0x12000, scoped, tag = 'internal scratch']
  %s0 = inlined_call_operand.hbm [shape: s32[6], index: 0, kind: input, shape index: {}]
  %s1 = inlined_call_operand.vmem [shape: f32[1,128], index: 1, kind: input, shape index: {}]
  %s2 = inlined_call_operand.hbm [shape: f32[64,128], index: 2, kind: input, shape index: {}]
  %s3 = inlined_call_operand.hbm [shape: f32[128,512], index: 3, kind: input, shape index: {}]
  %s4 = inlined_call_operand.hbm [shape: f32[128,512], index: 4, kind: input, shape index: {}]
  %s5 = inlined_call_operand.vmem [shape: f32[1,512], index: 5, kind: input, shape index: {}]
  %s6 = inlined_call_operand.hbm [shape: f32[128,128], index: 6, kind: input, shape index: {}]
  %s7 = inlined_call_operand.vmem [shape: f32[1,128], index: 7, kind: input, shape index: {}]
  %s8 = inlined_call_operand.hbm [shape: f32[6,128], index: 8, kind: output, shape index: {0}]
  %s9 = inlined_call_operand.hbm [shape: f32[1,128], index: 9, kind: output, shape index: {1}]
  %10 = xla_tuple %s8, %s9
  %s11 = sld [smem:[#allocation0]]
  $region70: #{tpu_custom_call.1} parent=0
    _
  %s13 = ssub.s32 1, %s11
  %s14 = scalar_select 0, %s13, %s11
  $region1: #{tpu_custom_call.1} parent=0
    #allocation2 [shape = 'u8[512]{0}', space=smem, size = 0x200, scoped, tag = 'input window, operand 0, single buffered']
    #allocation3 [shape = 's32[1]{0}', space=sflag, size = 0x4, scoped, tag = 'scoped memory for tpu_custom_call.1']
    #allocation4 [shape = 's32[1]{0}', space=sflag, size = 0x4, scoped, tag = 'scoped memory for tpu_custom_call.1']
    #allocation5 [shape = 's32[1]{0}', space=sflag, size = 0x4, scoped, tag = 'scoped memory for tpu_custom_call.1']
    #allocation6 [shape = 'u8[32768]{0}', space=vmem, size = 0x8000, scoped, tag = 'input window, operand 2, single buffered']
    #allocation7 [shape = 'u8[262144]{0}', space=vmem, size = 0x40000, scoped, tag = 'input window, operand 3, single buffered']
    #allocation8 [shape = 's32[1]{0}', space=sflag, size = 0x4, scoped, tag = 'scoped memory for tpu_custom_call.1']
    #allocation9 [shape = 'u8[262144]{0}', space=vmem, size = 0x40000, scoped, tag = 'input window, operand 4, single buffered']
    #allocation10 [shape = 'u8[65536]{0}', space=vmem, size = 0x10000, scoped, tag = 'input window, operand 6, single buffered']
    #allocation11 [shape = 's32[1]{0}', space=sflag, size = 0x4, scoped, tag = 'scoped memory for tpu_custom_call.1']
    #allocation12 [shape = 'u8[4096]{0}', space=vmem, size = 0x1000, scoped, tag = 'output window, operand 0, single buffered']
    #allocation13 [shape = 'u8[512]{0}', space=vmem, size = 0x400, scoped, tag = 'output window, operand 1, single buffered']
    #allocation14 [shape = 's32[1]{0}', space=sflag, size = 0x4, scoped, tag = 'scoped memory for tpu_custom_call.1']
    %15 = vsyncpa [#allocation5], 0
    %16 = vsyncpa [#allocation3], 0
    %17 = vsyncpa [#allocation8], 0
    %18 = vsyncpa [#allocation11], 0
    %19 = vsyncpa [#allocation4], 0
    %20 = vsyncpa [#allocation14], 0
    // Predicated region
    $region2: #{tpu_custom_call.1} parent=1 // pred_check
      _
    $region3: #{tpu_custom_call.1} parent=1 // pred_check_branch
      %22 = sbr.rel (0) target = $region5
    $region4: #{tpu_custom_call.1} parent=1 // pred_region
      %s24 = ssub.s32 16, 16
      %25 = vsyncadd [#allocation5], %s24
      %28 = dma.hbm_to_smem %s0, 16, [#allocation2], [#allocation5]
    $region5: #{tpu_custom_call.1} parent=1 // pred_fallthru
      _
    // Predicated region
    $region6: #{tpu_custom_call.1} parent=1 // pred_check
      _
    $region7: #{tpu_custom_call.1} parent=1 // pred_check_branch
      %30 = sbr.rel (0) target = $region9
    $region8: #{tpu_custom_call.1} parent=1 // pred_region
      _
    $region9: #{tpu_custom_call.1} parent=1 // pred_fallthru
      _
    // Predicated region
    $region10: #{tpu_custom_call.1} parent=1 // pred_check
      _
    $region11: #{tpu_custom_call.1} parent=1 // pred_check_branch
      %32 = sbr.rel (0) target = $region13
    $region12: #{tpu_custom_call.1} parent=1 // pred_region
      %s34 = ssub.s32 1024, 1024
      %35 = vsyncadd [#allocation3], %s34
      %s36 = sshll.u32 [#allocation6], 4
      %s37 = int_to_ptr.vmem [resolvable:$true] %s36
      %42 = dma.hbm_to_vmem [thread:$0]  %s2, 1024, %s37, [#allocation3], 128, 128, 8
    $region13: #{tpu_custom_call.1} parent=1 // pred_fallthru
      _
    // Predicated region
    $region14: #{tpu_custom_call.1} parent=1 // pred_check
      _
    $region15: #{tpu_custom_call.1} parent=1 // pred_check_branch
      %44 = sbr.rel (0) target = $region17
    $region16: #{tpu_custom_call.1} parent=1 // pred_region
      %s46 = ssub.s32 8192, 8192
      %47 = vsyncadd [#allocation8], %s46
      %s48 = sshll.u32 [#allocation7], 4
      %s49 = int_to_ptr.vmem [resolvable:$true] %s48
      %54 = dma.hbm_to_vmem [thread:$0]  %s3, 8192, %s49, [#allocation8], 512, 512, 32
    $region17: #{tpu_custom_call.1} parent=1 // pred_fallthru
      _
    // Predicated region
    $region18: #{tpu_custom_call.1} parent=1 // pred_check
      _
    $region19: #{tpu_custom_call.1} parent=1 // pred_check_branch
      %56 = sbr.rel (0) target = $region21
    $region20: #{tpu_custom_call.1} parent=1 // pred_region
      %s58 = ssub.s32 8192, 8192
      %59 = vsyncadd [#allocation8], %s58
      %s60 = sshll.u32 [#allocation9], 4
      %s61 = int_to_ptr.vmem [resolvable:$true] %s60
      %66 = dma.hbm_to_vmem [thread:$0]  %s4, 8192, %s61, [#allocation8], 512, 512, 32
    $region21: #{tpu_custom_call.1} parent=1 // pred_fallthru
      _
    // Predicated region
    $region22: #{tpu_custom_call.1} parent=1 // pred_check
      _
    $region23: #{tpu_custom_call.1} parent=1 // pred_check_branch
      %68 = sbr.rel (0) target = $region25
    $region24: #{tpu_custom_call.1} parent=1 // pred_region
      _
    $region25: #{tpu_custom_call.1} parent=1 // pred_fallthru
      _
    // Predicated region
    $region26: #{tpu_custom_call.1} parent=1 // pred_check
      _
    $region27: #{tpu_custom_call.1} parent=1 // pred_check_branch
      %70 = sbr.rel (0) target = $region29
    $region28: #{tpu_custom_call.1} parent=1 // pred_region
      %s72 = ssub.s32 2048, 2048
      %73 = vsyncadd [#allocation11], %s72
      %s74 = sshll.u32 [#allocation10], 4
      %s75 = int_to_ptr.vmem [resolvable:$true] %s74
      %80 = dma.hbm_to_vmem [thread:$0]  %s6, 2048, %s75, [#allocation11], 128, 128, 8
    $region29: #{tpu_custom_call.1} parent=1 // pred_fallthru
      _
    // Predicated region
    $region30: #{tpu_custom_call.1} parent=1 // pred_check
      _
    $region31: #{tpu_custom_call.1} parent=1 // pred_check_branch
      %82 = sbr.rel (0) target = $region33
    $region32: #{tpu_custom_call.1} parent=1 // pred_region
      _
    $region33: #{tpu_custom_call.1} parent=1 // pred_fallthru
      _
    // Predicated region
    $region34: #{tpu_custom_call.1} parent=1 // pred_check
      _
    $region35: #{tpu_custom_call.1} parent=1 // pred_check_branch
      %84 = sbr.rel (0) target = $region37
    $region36: #{tpu_custom_call.1} parent=1 // pred_region
      %85 = dma.done [#allocation5], 16
    $region37: #{tpu_custom_call.1} parent=1 // pred_fallthru
      _
    // Predicated region
    $region38: #{tpu_custom_call.1} parent=1 // pred_check
      _
    $region39: #{tpu_custom_call.1} parent=1 // pred_check_branch
      %87 = sbr.rel (0) target = $region41
    $region40: #{tpu_custom_call.1} parent=1 // pred_region
      %88 = dma.done [#allocation3], 1024
    $region41: #{tpu_custom_call.1} parent=1 // pred_fallthru
      _
    // Predicated region
    $region42: #{tpu_custom_call.1} parent=1 // pred_check
      _
    $region43: #{tpu_custom_call.1} parent=1 // pred_check_branch
      %90 = sbr.rel (0) target = $region45
    $region44: #{tpu_custom_call.1} parent=1 // pred_region
      %91 = dma.done [#allocation8], 8192
    $region45: #{tpu_custom_call.1} parent=1 // pred_fallthru
      _
    // Predicated region
    $region46: #{tpu_custom_call.1} parent=1 // pred_check
      _
    $region47: #{tpu_custom_call.1} parent=1 // pred_check_branch
      %93 = sbr.rel (0) target = $region49
    $region48: #{tpu_custom_call.1} parent=1 // pred_region
      %94 = dma.done [#allocation8], 8192
    $region49: #{tpu_custom_call.1} parent=1 // pred_fallthru
      _
    // Predicated region
    $region50: #{tpu_custom_call.1} parent=1 // pred_check
      _
    $region51: #{tpu_custom_call.1} parent=1 // pred_check_branch
      %96 = sbr.rel (0) target = $region53
    $region52: #{tpu_custom_call.1} parent=1 // pred_region
      %97 = dma.done [#allocation11], 2048
    $region53: #{tpu_custom_call.1} parent=1 // pred_fallthru
      _
    %98 = sfence
    %v99 = vld [vmem:[#allocation7] sm:$0xff]
    %v100 = vld [vmem:[#allocation7 + $0x8] sm:$0xff]
    %v101 = vld [vmem:[#allocation7 + $0x10] sm:$0xff]
    %v102 = vld [vmem:[#allocation7 + $0x18] sm:$0xff]
    %v103 = vld [vmem:[#allocation7 + $0x20] sm:$0xff]
    %v104 = vld [vmem:[#allocation7 + $0x28] sm:$0xff]
    %v105 = vld [vmem:[#allocation7 + $0x30] sm:$0xff]
    %v106 = vld [vmem:[#allocation7 + $0x38] sm:$0xff]
    %v107 = vld [vmem:[#allocation7 + $0x40] sm:$0xff]
    %v108 = vld [vmem:[#allocation7 + $0x48] sm:$0xff]
    %v109 = vld [vmem:[#allocation7 + $0x50] sm:$0xff]
    %v110 = vld [vmem:[#allocation7 + $0x58] sm:$0xff]
    %v111 = vld [vmem:[#allocation7 + $0x60] sm:$0xff]
    %v112 = vld [vmem:[#allocation7 + $0x68] sm:$0xff]
    %v113 = vld [vmem:[#allocation7 + $0x70] sm:$0xff]
    %v114 = vld [vmem:[#allocation7 + $0x78] sm:$0xff]
    %v115 = vld [vmem:[#allocation7 + $0x80] sm:$0xff]
    %v116 = vld [vmem:[#allocation7 + $0x88] sm:$0xff]
    %v117 = vld [vmem:[#allocation7 + $0x90] sm:$0xff]
    %v118 = vld [vmem:[#allocation7 + $0x98] sm:$0xff]
    %v119 = vld [vmem:[#allocation7 + $0xa0] sm:$0xff]
    %v120 = vld [vmem:[#allocation7 + $0xa8] sm:$0xff]
    %v121 = vld [vmem:[#allocation7 + $0xb0] sm:$0xff]
    %v122 = vld [vmem:[#allocation7 + $0xb8] sm:$0xff]
    %v123 = vld [vmem:[#allocation7 + $0xc0] sm:$0xff]
    %v124 = vld [vmem:[#allocation7 + $0xc8] sm:$0xff]
    %v125 = vld [vmem:[#allocation7 + $0xd0] sm:$0xff]
    %v126 = vld [vmem:[#allocation7 + $0xd8] sm:$0xff]
    %v127 = vld [vmem:[#allocation7 + $0xe0] sm:$0xff]
    %v128 = vld [vmem:[#allocation7 + $0xe8] sm:$0xff]
    %v129 = vld [vmem:[#allocation7 + $0xf0] sm:$0xff]
    %v130 = vld [vmem:[#allocation7 + $0xf8] sm:$0xff]
    %v131 = vld [vmem:[#allocation7 + $0x100] sm:$0xff]
    %v132 = vld [vmem:[#allocation7 + $0x108] sm:$0xff]
    %v133 = vld [vmem:[#allocation7 + $0x110] sm:$0xff]
    %v134 = vld [vmem:[#allocation7 + $0x118] sm:$0xff]
    %v135 = vld [vmem:[#allocation7 + $0x120] sm:$0xff]
    %v136 = vld [vmem:[#allocation7 + $0x128] sm:$0xff]
    %v137 = vld [vmem:[#allocation7 + $0x130] sm:$0xff]
    %v138 = vld [vmem:[#allocation7 + $0x138] sm:$0xff]
    %v139 = vld [vmem:[#allocation7 + $0x140] sm:$0xff]
    %v140 = vld [vmem:[#allocation7 + $0x148] sm:$0xff]
    %v141 = vld [vmem:[#allocation7 + $0x150] sm:$0xff]
    %v142 = vld [vmem:[#allocation7 + $0x158] sm:$0xff]
    %v143 = vld [vmem:[#allocation7 + $0x160] sm:$0xff]
    %v144 = vld [vmem:[#allocation7 + $0x168] sm:$0xff]
    %v145 = vld [vmem:[#allocation7 + $0x170] sm:$0xff]
    %v146 = vld [vmem:[#allocation7 + $0x178] sm:$0xff]
    %v147 = vld [vmem:[#allocation7 + $0x180] sm:$0xff]
    %v148 = vld [vmem:[#allocation7 + $0x188] sm:$0xff]
    %v149 = vld [vmem:[#allocation7 + $0x190] sm:$0xff]
    %v150 = vld [vmem:[#allocation7 + $0x198] sm:$0xff]
    %v151 = vld [vmem:[#allocation7 + $0x1a0] sm:$0xff]
    %v152 = vld [vmem:[#allocation7 + $0x1a8] sm:$0xff]
    %v153 = vld [vmem:[#allocation7 + $0x1b0] sm:$0xff]
    %v154 = vld [vmem:[#allocation7 + $0x1b8] sm:$0xff]
    %v155 = vld [vmem:[#allocation7 + $0x1c0] sm:$0xff]
    %v156 = vld [vmem:[#allocation7 + $0x1c8] sm:$0xff]
    %v157 = vld [vmem:[#allocation7 + $0x1d0] sm:$0xff]
    %v158 = vld [vmem:[#allocation7 + $0x1d8] sm:$0xff]
    %v159 = vld [vmem:[#allocation7 + $0x1e0] sm:$0xff]
    %v160 = vld [vmem:[#allocation7 + $0x1e8] sm:$0xff]
    %v161 = vld [vmem:[#allocation7 + $0x1f0] sm:$0xff]
    %v162 = vld [vmem:[#allocation7 + $0x1f8] sm:$0xff]
    %v163 = vld [vmem:[#allocation9] sm:$0xff]
    %v164 = vld [vmem:[#allocation9 + $0x8] sm:$0xff]
    %v165 = vld [vmem:[#allocation9 + $0x10] sm:$0xff]
    %v166 = vld [vmem:[#allocation9 + $0x18] sm:$0xff]
    %v167 = vld [vmem:[#allocation9 + $0x20] sm:$0xff]
    %v168 = vld [vmem:[#allocation9 + $0x28] sm:$0xff]
    %v169 = vld [vmem:[#allocation9 + $0x30] sm:$0xff]
    %v170 = vld [vmem:[#allocation9 + $0x38] sm:$0xff]
    %v171 = vld [vmem:[#allocation9 + $0x40] sm:$0xff]
    %v172 = vld [vmem:[#allocation9 + $0x48] sm:$0xff]
    %v173 = vld [vmem:[#allocation9 + $0x50] sm:$0xff]
    %v174 = vld [vmem:[#allocation9 + $0x58] sm:$0xff]
    %v175 = vld [vmem:[#allocation9 + $0x60] sm:$0xff]
    %v176 = vld [vmem:[#allocation9 + $0x68] sm:$0xff]
    %v177 = vld [vmem:[#allocation9 + $0x70] sm:$0xff]
    %v178 = vld [vmem:[#allocation9 + $0x78] sm:$0xff]
    %v179 = vld [vmem:[#allocation9 + $0x80] sm:$0xff]
    %v180 = vld [vmem:[#allocation9 + $0x88] sm:$0xff]
    %v181 = vld [vmem:[#allocation9 + $0x90] sm:$0xff]
    %v182 = vld [vmem:[#allocation9 + $0x98] sm:$0xff]
    %v183 = vld [vmem:[#allocation9 + $0xa0] sm:$0xff]
    %v184 = vld [vmem:[#allocation9 + $0xa8] sm:$0xff]
    %v185 = vld [vmem:[#allocation9 + $0xb0] sm:$0xff]
    %v186 = vld [vmem:[#allocation9 + $0xb8] sm:$0xff]
    %v187 = vld [vmem:[#allocation9 + $0xc0] sm:$0xff]
    %v188 = vld [vmem:[#allocation9 + $0xc8] sm:$0xff]
    %v189 = vld [vmem:[#allocation9 + $0xd0] sm:$0xff]
    %v190 = vld [vmem:[#allocation9 + $0xd8] sm:$0xff]
    %v191 = vld [vmem:[#allocation9 + $0xe0] sm:$0xff]
    %v192 = vld [vmem:[#allocation9 + $0xe8] sm:$0xff]
    %v193 = vld [vmem:[#allocation9 + $0xf0] sm:$0xff]
    %v194 = vld [vmem:[#allocation9 + $0xf8] sm:$0xff]
    %v195 = vld [vmem:[#allocation9 + $0x100] sm:$0xff]
    %v196 = vld [vmem:[#allocation9 + $0x108] sm:$0xff]
    %v197 = vld [vmem:[#allocation9 + $0x110] sm:$0xff]
    %v198 = vld [vmem:[#allocation9 + $0x118] sm:$0xff]
    %v199 = vld [vmem:[#allocation9 + $0x120] sm:$0xff]
    %v200 = vld [vmem:[#allocation9 + $0x128] sm:$0xff]
    %v201 = vld [vmem:[#allocation9 + $0x130] sm:$0xff]
    %v202 = vld [vmem:[#allocation9 + $0x138] sm:$0xff]
    %v203 = vld [vmem:[#allocation9 + $0x140] sm:$0xff]
    %v204 = vld [vmem:[#allocation9 + $0x148] sm:$0xff]
    %v205 = vld [vmem:[#allocation9 + $0x150] sm:$0xff]
    %v206 = vld [vmem:[#allocation9 + $0x158] sm:$0xff]
    %v207 = vld [vmem:[#allocation9 + $0x160] sm:$0xff]
    %v208 = vld [vmem:[#allocation9 + $0x168] sm:$0xff]
    %v209 = vld [vmem:[#allocation9 + $0x170] sm:$0xff]
    %v210 = vld [vmem:[#allocation9 + $0x178] sm:$0xff]
    %v211 = vld [vmem:[#allocation9 + $0x180] sm:$0xff]
    %v212 = vld [vmem:[#allocation9 + $0x188] sm:$0xff]
    %v213 = vld [vmem:[#allocation9 + $0x190] sm:$0xff]
    %v214 = vld [vmem:[#allocation9 + $0x198] sm:$0xff]
    %v215 = vld [vmem:[#allocation9 + $0x1a0] sm:$0xff]
    %v216 = vld [vmem:[#allocation9 + $0x1a8] sm:$0xff]
    %v217 = vld [vmem:[#allocation9 + $0x1b0] sm:$0xff]
    %v218 = vld [vmem:[#allocation9 + $0x1b8] sm:$0xff]
    %v219 = vld [vmem:[#allocation9 + $0x1c0] sm:$0xff]
    %v220 = vld [vmem:[#allocation9 + $0x1c8] sm:$0xff]
    %v221 = vld [vmem:[#allocation9 + $0x1d0] sm:$0xff]
    %v222 = vld [vmem:[#allocation9 + $0x1d8] sm:$0xff]
    %v223 = vld [vmem:[#allocation9 + $0x1e0] sm:$0xff]
    %v224 = vld [vmem:[#allocation9 + $0x1e8] sm:$0xff]
    %v225 = vld [vmem:[#allocation9 + $0x1f0] sm:$0xff]
    %v226 = vld [vmem:[#allocation9 + $0x1f8] sm:$0xff]
    %v227 = vld [vmem:[%s5] sm:$0xf]
    %v228 = vld [vmem:[#allocation10] sm:$0xff]
    %v229 = vld [vmem:[#allocation10 + $0x8] sm:$0xff]
    %v230 = vld [vmem:[#allocation10 + $0x10] sm:$0xff]
    %v231 = vld [vmem:[#allocation10 + $0x18] sm:$0xff]
    %v232 = vld [vmem:[#allocation10 + $0x20] sm:$0xff]
    %v233 = vld [vmem:[#allocation10 + $0x28] sm:$0xff]
    %v234 = vld [vmem:[#allocation10 + $0x30] sm:$0xff]
    %v235 = vld [vmem:[#allocation10 + $0x38] sm:$0xff]
    %v236 = vld [vmem:[#allocation10 + $0x40] sm:$0xff]
    %v237 = vld [vmem:[#allocation10 + $0x48] sm:$0xff]
    %v238 = vld [vmem:[#allocation10 + $0x50] sm:$0xff]
    %v239 = vld [vmem:[#allocation10 + $0x58] sm:$0xff]
    %v240 = vld [vmem:[#allocation10 + $0x60] sm:$0xff]
    %v241 = vld [vmem:[#allocation10 + $0x68] sm:$0xff]
    %v242 = vld [vmem:[#allocation10 + $0x70] sm:$0xff]
    %v243 = vld [vmem:[#allocation10 + $0x78] sm:$0xff]
    %v244 = vlaneseq
    %v245 = vand.u32 %v244, 127
    %vm246 = vcmp.lt.s32.totalorder %v245, 64
    %v247 = vld [vmem:[%s7] sm:$0x1]
    %v248 = vsel %vm246, %v247, -inf
    %v249 = vld [vmem:[%s1] sm:$0x1]
    %s250 = sld [smem:[#allocation2]]
    %s251 = scalar_lea.vmem [#allocation6], %s250
    %v252 = vld [vmem:[%s251] sm:$0x1]
    %v253 = vmax.f32 %v252, 0.0
    %254 = vmatprep.subr.mxu0 %v164
    %255 = vmatpush1.msra.mxu0 %v163
    %256 = vmatprep.subr.mxu0 %v168
    %257 = vmatpush1.msra.mxu0 %v167
    %258 = vmatprep.subr.mxu0 %v172
    %259 = vmatpush1.msra.mxu0 %v171
    %260 = vmatprep.subr.mxu0 %v176
    %261 = vmatpush1.msra.mxu0 %v175
    %262 = vmatprep.subr.mxu0 %v180
    %263 = vmatpush1.msra.mxu0 %v179
    %264 = vmatprep.subr.mxu0 %v184
    %265 = vmatpush1.msra.mxu0 %v183
    %266 = vmatprep.subr.mxu0 %v188
    %267 = vmatpush1.msra.mxu0 %v187
    %268 = vmatprep.subr.mxu0 %v192
    %269 = vmatpush1.msra.mxu0 %v191
    %270 = vmatprep.subr.mxu0 %v196
    %271 = vmatpush1.msra.mxu0 %v195
    %272 = vmatprep.subr.mxu0 %v200
    %273 = vmatpush1.msra.mxu0 %v199
    %274 = vmatprep.subr.mxu0 %v204
    %275 = vmatpush1.msra.mxu0 %v203
    %276 = vmatprep.subr.mxu0 %v208
    %277 = vmatpush1.msra.mxu0 %v207
    %278 = vmatprep.subr.mxu0 %v212
    %279 = vmatpush1.msra.mxu0 %v211
    %280 = vmatprep.subr.mxu0 %v216
    %281 = vmatpush1.msra.mxu0 %v215
    %282 = vmatprep.subr.mxu0 %v220
    %283 = vmatpush1.msra.mxu0 %v219
    %284 = vmatprep.subr.mxu0 %v224
    %285 = vmatpush1.msra.mxu0 %v223
    %286 = vmatprep.subr.mxu0 0.0
    %287 = vmatpush1.msra.mxu0 0.0
    %288 = vmatprep.subr.mxu0 0.0
    %289 = vmatpush1.msra.mxu0 0.0
    %290 = vmatprep.subr.mxu0 0.0
    %291 = vmatpush1.msra.mxu0 0.0
    %292 = vmatprep.subr.mxu0 0.0
    %293 = vmatpush1.msra.mxu0 0.0
    %294 = vmatprep.subr.mxu0 0.0
    %295 = vmatpush1.msra.mxu0 0.0
    %296 = vmatprep.subr.mxu0 0.0
    %297 = vmatpush1.msra.mxu0 0.0
    %298 = vmatprep.subr.mxu0 0.0
    %299 = vmatpush1.msra.mxu0 0.0
    %300 = vmatprep.subr.mxu0 0.0
    %301 = vmatpush1.msra.mxu0 0.0
    %302 = vmatprep.subr.mxu0 0.0
    %303 = vmatpush1.msra.mxu0 0.0
    %304 = vmatprep.subr.mxu0 0.0
    %305 = vmatpush1.msra.mxu0 0.0
    %306 = vmatprep.subr.mxu0 0.0
    %307 = vmatpush1.msra.mxu0 0.0
    %308 = vmatprep.subr.mxu0 0.0
    %309 = vmatpush1.msra.mxu0 0.0
    %310 = vmatprep.subr.mxu0 0.0
    %311 = vmatpush1.msra.mxu0 0.0
    %312 = vmatprep.subr.mxu0 0.0
    %313 = vmatpush1.msra.mxu0 0.0
    %314 = vmatprep.subr.mxu0 0.0
    %315 = vmatpush1.msra.mxu0 0.0
    %316 = vmatprep.subr.mxu0 0.0
    %317 = vmatpush1.msra.mxu0 0.0
    %318 = vmatprep.mubr.f32.mxu0 0.0
    %319 = vmatmul.mubr.f32.gmra.mrb[0].mxu0 %v249
    %v320 = vpop.f32.mrb[0].mxu0
    %v321 = vadd.f32 0.0, %v320
    %v322 = vpop.f32.mrb[0].mxu0
    %v323 = vadd.f32 0.0, %v322
    %324 = vdwg.mxu0
    %325 = vmatprep.subr.mxu0 %v166
    %326 = vmatpush1.msra.mxu0 %v165
    %327 = vmatprep.subr.mxu0 %v170
    %328 = vmatpush1.msra.mxu0 %v169
    %329 = vmatprep.subr.mxu0 %v174
    %330 = vmatpush1.msra.mxu0 %v173
    %331 = vmatprep.subr.mxu0 %v178
    %332 = vmatpush1.msra.mxu0 %v177
    %333 = vmatprep.subr.mxu0 %v182
    %334 = vmatpush1.msra.mxu0 %v181
    %335 = vmatprep.subr.mxu0 %v186
    %336 = vmatpush1.msra.mxu0 %v185
    %337 = vmatprep.subr.mxu0 %v190
    %338 = vmatpush1.msra.mxu0 %v189
    %339 = vmatprep.subr.mxu0 %v194
    %340 = vmatpush1.msra.mxu0 %v193
    %341 = vmatprep.subr.mxu0 %v198
    %342 = vmatpush1.msra.mxu0 %v197
    %343 = vmatprep.subr.mxu0 %v202
    %344 = vmatpush1.msra.mxu0 %v201
    %345 = vmatprep.subr.mxu0 %v206
    %346 = vmatpush1.msra.mxu0 %v205
    %347 = vmatprep.subr.mxu0 %v210
    %348 = vmatpush1.msra.mxu0 %v209
    %349 = vmatprep.subr.mxu0 %v214
    %350 = vmatpush1.msra.mxu0 %v213
    %351 = vmatprep.subr.mxu0 %v218
    %352 = vmatpush1.msra.mxu0 %v217
    %353 = vmatprep.subr.mxu0 %v222
    %354 = vmatpush1.msra.mxu0 %v221
    %355 = vmatprep.subr.mxu0 %v226
    %356 = vmatpush1.msra.mxu0 %v225
    %357 = vmatprep.subr.mxu0 0.0
    %358 = vmatpush1.msra.mxu0 0.0
    %359 = vmatprep.subr.mxu0 0.0
    %360 = vmatpush1.msra.mxu0 0.0
    %361 = vmatprep.subr.mxu0 0.0
    %362 = vmatpush1.msra.mxu0 0.0
    %363 = vmatprep.subr.mxu0 0.0
    %364 = vmatpush1.msra.mxu0 0.0
    %365 = vmatprep.subr.mxu0 0.0
    %366 = vmatpush1.msra.mxu0 0.0
    %367 = vmatprep.subr.mxu0 0.0
    %368 = vmatpush1.msra.mxu0 0.0
    %369 = vmatprep.subr.mxu0 0.0
    %370 = vmatpush1.msra.mxu0 0.0
    %371 = vmatprep.subr.mxu0 0.0
    %372 = vmatpush1.msra.mxu0 0.0
    %373 = vmatprep.subr.mxu0 0.0
    %374 = vmatpush1.msra.mxu0 0.0
    %375 = vmatprep.subr.mxu0 0.0
    %376 = vmatpush1.msra.mxu0 0.0
    %377 = vmatprep.subr.mxu0 0.0
    %378 = vmatpush1.msra.mxu0 0.0
    %379 = vmatprep.subr.mxu0 0.0
    %380 = vmatpush1.msra.mxu0 0.0
    %381 = vmatprep.subr.mxu0 0.0
    %382 = vmatpush1.msra.mxu0 0.0
    %383 = vmatprep.subr.mxu0 0.0
    %384 = vmatpush1.msra.mxu0 0.0
    %385 = vmatprep.subr.mxu0 0.0
    %386 = vmatpush1.msra.mxu0 0.0
    %387 = vmatprep.subr.mxu0 0.0
    %388 = vmatpush1.msra.mxu0 0.0
    %389 = vmatprep.mubr.f32.mxu0 0.0
    %390 = vmatmul.mubr.f32.gmra.mrb[0].mxu0 %v249
    %v391 = vpop.f32.mrb[0].mxu0
    %v392 = vadd.f32 0.0, %v391
    %v393 = vpop.f32.mrb[0].mxu0
    %v394 = vadd.f32 0.0, %v393
    %395 = vdwg.mxu0
    %396 = vmatprep.subr.mxu0 %v100
    %397 = vmatpush1.msra.mxu0 %v99
    %398 = vmatprep.subr.mxu0 %v104
    %399 = vmatpush1.msra.mxu0 %v103
    %400 = vmatprep.subr.mxu0 %v108
    %401 = vmatpush1.msra.mxu0 %v107
    %402 = vmatprep.subr.mxu0 %v112
    %403 = vmatpush1.msra.mxu0 %v111
    %404 = vmatprep.subr.mxu0 %v116
    %405 = vmatpush1.msra.mxu0 %v115
    %406 = vmatprep.subr.mxu0 %v120
    %407 = vmatpush1.msra.mxu0 %v119
    %408 = vmatprep.subr.mxu0 %v124
    %409 = vmatpush1.msra.mxu0 %v123
    %410 = vmatprep.subr.mxu0 %v128
    %411 = vmatpush1.msra.mxu0 %v127
    %412 = vmatprep.subr.mxu0 %v132
    %413 = vmatpush1.msra.mxu0 %v131
    %414 = vmatprep.subr.mxu0 %v136
    %415 = vmatpush1.msra.mxu0 %v135
    %416 = vmatprep.subr.mxu0 %v140
    %417 = vmatpush1.msra.mxu0 %v139
    %418 = vmatprep.subr.mxu0 %v144
    %419 = vmatpush1.msra.mxu0 %v143
    %420 = vmatprep.subr.mxu0 %v148
    %421 = vmatpush1.msra.mxu0 %v147
    %422 = vmatprep.subr.mxu0 %v152
    %423 = vmatpush1.msra.mxu0 %v151
    %424 = vmatprep.subr.mxu0 %v156
    %425 = vmatpush1.msra.mxu0 %v155
    %426 = vmatprep.subr.mxu0 %v160
    %427 = vmatpush1.msra.mxu0 %v159
    %428 = vmatprep.subr.mxu0 0.0
    %429 = vmatpush1.msra.mxu0 0.0
    %430 = vmatprep.subr.mxu0 0.0
    %431 = vmatpush1.msra.mxu0 0.0
    %432 = vmatprep.subr.mxu0 0.0
    %433 = vmatpush1.msra.mxu0 0.0
    %434 = vmatprep.subr.mxu0 0.0
    %435 = vmatpush1.msra.mxu0 0.0
    %436 = vmatprep.subr.mxu0 0.0
    %437 = vmatpush1.msra.mxu0 0.0
    %438 = vmatprep.subr.mxu0 0.0
    %439 = vmatpush1.msra.mxu0 0.0
    %440 = vmatprep.subr.mxu0 0.0
    %441 = vmatpush1.msra.mxu0 0.0
    %442 = vmatprep.subr.mxu0 0.0
    %443 = vmatpush1.msra.mxu0 0.0
    %444 = vmatprep.subr.mxu0 0.0
    %445 = vmatpush1.msra.mxu0 0.0
    %446 = vmatprep.subr.mxu0 0.0
    %447 = vmatpush1.msra.mxu0 0.0
    %448 = vmatprep.subr.mxu0 0.0
    %449 = vmatpush1.msra.mxu0 0.0
    %450 = vmatprep.subr.mxu0 0.0
    %451 = vmatpush1.msra.mxu0 0.0
    %452 = vmatprep.subr.mxu0 0.0
    %453 = vmatpush1.msra.mxu0 0.0
    %454 = vmatprep.subr.mxu0 0.0
    %455 = vmatpush1.msra.mxu0 0.0
    %456 = vmatprep.subr.mxu0 0.0
    %457 = vmatpush1.msra.mxu0 0.0
    %458 = vmatprep.subr.mxu0 0.0
    %459 = vmatpush1.msra.mxu0 0.0
    %460 = vmatprep.mubr.f32.mxu0 0.0
    %461 = vmatmul.mubr.f32.gmra.mrb[0].mxu0 %v253
    %v462 = vpop.f32.mrb[0].mxu0
    %v463 = vadd.f32 %v321, %v462
    %v464 = vpop.f32.mrb[0].mxu0
    %v465 = vadd.f32 %v323, %v464
    %466 = vdwg.mxu0
    %467 = vmatprep.subr.mxu0 %v102
    %468 = vmatpush1.msra.mxu0 %v101
    %469 = vmatprep.subr.mxu0 %v106
    %470 = vmatpush1.msra.mxu0 %v105
    %471 = vmatprep.subr.mxu0 %v110
    %472 = vmatpush1.msra.mxu0 %v109
    %473 = vmatprep.subr.mxu0 %v114
    %474 = vmatpush1.msra.mxu0 %v113
    %475 = vmatprep.subr.mxu0 %v118
    %476 = vmatpush1.msra.mxu0 %v117
    %477 = vmatprep.subr.mxu0 %v122
    %478 = vmatpush1.msra.mxu0 %v121
    %479 = vmatprep.subr.mxu0 %v126
    %480 = vmatpush1.msra.mxu0 %v125
    %481 = vmatprep.subr.mxu0 %v130
    %482 = vmatpush1.msra.mxu0 %v129
    %483 = vmatprep.subr.mxu0 %v134
    %484 = vmatpush1.msra.mxu0 %v133
    %485 = vmatprep.subr.mxu0 %v138
    %486 = vmatpush1.msra.mxu0 %v137
    %487 = vmatprep.subr.mxu0 %v142
    %488 = vmatpush1.msra.mxu0 %v141
    %489 = vmatprep.subr.mxu0 %v146
    %490 = vmatpush1.msra.mxu0 %v145
    %491 = vmatprep.subr.mxu0 %v150
    %492 = vmatpush1.msra.mxu0 %v149
    %493 = vmatprep.subr.mxu0 %v154
    %494 = vmatpush1.msra.mxu0 %v153
    %495 = vmatprep.subr.mxu0 %v158
    %496 = vmatpush1.msra.mxu0 %v157
    %497 = vmatprep.subr.mxu0 %v162
    %498 = vmatpush1.msra.mxu0 %v161
    %499 = vmatprep.subr.mxu0 0.0
    %500 = vmatpush1.msra.mxu0 0.0
    %501 = vmatprep.subr.mxu0 0.0
    %502 = vmatpush1.msra.mxu0 0.0
    %503 = vmatprep.subr.mxu0 0.0
    %504 = vmatpush1.msra.mxu0 0.0
    %505 = vmatprep.subr.mxu0 0.0
    %506 = vmatpush1.msra.mxu0 0.0
    %507 = vmatprep.subr.mxu0 0.0
    %508 = vmatpush1.msra.mxu0 0.0
    %509 = vmatprep.subr.mxu0 0.0
    %510 = vmatpush1.msra.mxu0 0.0
    %511 = vmatprep.subr.mxu0 0.0
    %512 = vmatpush1.msra.mxu0 0.0
    %513 = vmatprep.subr.mxu0 0.0
    %514 = vmatpush1.msra.mxu0 0.0
    %515 = vmatprep.subr.mxu0 0.0
    %516 = vmatpush1.msra.mxu0 0.0
    %517 = vmatprep.subr.mxu0 0.0
    %518 = vmatpush1.msra.mxu0 0.0
    %519 = vmatprep.subr.mxu0 0.0
    %520 = vmatpush1.msra.mxu0 0.0
    %521 = vmatprep.subr.mxu0 0.0
    %522 = vmatpush1.msra.mxu0 0.0
    %523 = vmatprep.subr.mxu0 0.0
    %524 = vmatpush1.msra.mxu0 0.0
    %525 = vmatprep.subr.mxu0 0.0
    %526 = vmatpush1.msra.mxu0 0.0
    %527 = vmatprep.subr.mxu0 0.0
    %528 = vmatpush1.msra.mxu0 0.0
    %529 = vmatprep.subr.mxu0 0.0
    %530 = vmatpush1.msra.mxu0 0.0
    %531 = vmatprep.mubr.f32.mxu0 0.0
    %532 = vmatmul.mubr.f32.gmra.mrb[0].mxu0 %v253
    %v533 = vpop.f32.mrb[0].mxu0
    %v534 = vadd.f32 %v392, %v533
    %v535 = vpop.f32.mrb[0].mxu0
    %v536 = vadd.f32 %v394, %v535
    %537 = vdwg.mxu0
    %v539 = vlaneseq
    %v540 = vshrl.u32 %v539, 7
    %v541 = vsub.s32 0, %v540
    %v542 = vrot.slane %v227, %v541
    %v543 = vlaneseq
    %v544 = vshrl.u32 %v543, 7
    %v545 = vsub.s32 1, %v544
    %v546 = vrot.slane %v227, %v545
    %v547 = vlaneseq
    %v548 = vshrl.u32 %v547, 7
    %v549 = vsub.s32 2, %v548
    %v550 = vrot.slane %v227, %v549
    %v551 = vlaneseq
    %v552 = vshrl.u32 %v551, 7
    %v553 = vsub.s32 3, %v552
    %v554 = vrot.slane %v227, %v553
    %v559 = vadd.f32 %v463, %v542
    %v560 = vadd.f32 %v465, %v546
    %v561 = vadd.f32 %v534, %v550
    %v562 = vadd.f32 %v536, %v554
    %v563 = vxor.u32 %v559, 2147483648
    %v564 = vmul.f32 %v563, 1.442695
    %v565 = vpow.pop %v564
    %v566 = vadd.f32 %v565, 1.0
    %v567 = vrcp.pop %v566
    %v568 = vmul.f32 1.0, %v567
    %v569 = vxor.u32 %v560, 2147483648
    %v570 = vmul.f32 %v569, 1.442695
    %v571 = vpow.pop %v570
    %v572 = vadd.f32 %v571, 1.0
    %v573 = vrcp.pop %v572
    %v574 = vmul.f32 1.0, %v573
    %v575 = vmul.f32 %v568, %v562
    %v576 = vadd.f32 %v561, %v575
    %v577 = vtanh.pop %v576
    %v578 = vsub.f32 1.0, %v574
    %v579 = vmul.f32 %v578, %v577
    %v580 = vmul.f32 %v574, %v249
    %v581 = vadd.f32 %v579, %v580
    %582 = vmatprep.subr.mxu0 0.0
    %583 = vmatpush1.msra.mxu0 %v228
    %584 = vmatprep.subr.mxu0 0.0
    %585 = vmatpush1.msra.mxu0 %v229
    %586 = vmatprep.subr.mxu0 0.0
    %587 = vmatpush1.msra.mxu0 %v230
    %588 = vmatprep.subr.mxu0 0.0
    %589 = vmatpush1.msra.mxu0 %v231
    %590 = vmatprep.subr.mxu0 0.0
    %591 = vmatpush1.msra.mxu0 %v232
    %592 = vmatprep.subr.mxu0 0.0
    %593 = vmatpush1.msra.mxu0 %v233
    %594 = vmatprep.subr.mxu0 0.0
    %595 = vmatpush1.msra.mxu0 %v234
    %596 = vmatprep.subr.mxu0 0.0
    %597 = vmatpush1.msra.mxu0 %v235
    %598 = vmatprep.subr.mxu0 0.0
    %599 = vmatpush1.msra.mxu0 %v236
    %600 = vmatprep.subr.mxu0 0.0
    %601 = vmatpush1.msra.mxu0 %v237
    %602 = vmatprep.subr.mxu0 0.0
    %603 = vmatpush1.msra.mxu0 %v238
    %604 = vmatprep.subr.mxu0 0.0
    %605 = vmatpush1.msra.mxu0 %v239
    %606 = vmatprep.subr.mxu0 0.0
    %607 = vmatpush1.msra.mxu0 %v240
    %608 = vmatprep.subr.mxu0 0.0
    %609 = vmatpush1.msra.mxu0 %v241
    %610 = vmatprep.subr.mxu0 0.0
    %611 = vmatpush1.msra.mxu0 %v242
    %612 = vmatprep.subr.mxu0 0.0
    %613 = vmatpush1.msra.mxu0 %v243
    %614 = vmatprep.subr.mxu0 0.0
    %615 = vmatpush1.msra.mxu0 0.0
    %616 = vmatprep.subr.mxu0 0.0
    %617 = vmatpush1.msra.mxu0 0.0
    %618 = vmatprep.subr.mxu0 0.0
    %619 = vmatpush1.msra.mxu0 0.0
    %620 = vmatprep.subr.mxu0 0.0
    %621 = vmatpush1.msra.mxu0 0.0
    %622 = vmatprep.subr.mxu0 0.0
    %623 = vmatpush1.msra.mxu0 0.0
    %624 = vmatprep.subr.mxu0 0.0
    %625 = vmatpush1.msra.mxu0 0.0
    %626 = vmatprep.subr.mxu0 0.0
    %627 = vmatpush1.msra.mxu0 0.0
    %628 = vmatprep.subr.mxu0 0.0
    %629 = vmatpush1.msra.mxu0 0.0
    %630 = vmatprep.subr.mxu0 0.0
    %631 = vmatpush1.msra.mxu0 0.0
    %632 = vmatprep.subr.mxu0 0.0
    %633 = vmatpush1.msra.mxu0 0.0
    %634 = vmatprep.subr.mxu0 0.0
    %635 = vmatpush1.msra.mxu0 0.0
    %636 = vmatprep.subr.mxu0 0.0
    %637 = vmatpush1.msra.mxu0 0.0
    %638 = vmatprep.subr.mxu0 0.0
    %639 = vmatpush1.msra.mxu0 0.0
    %640 = vmatprep.subr.mxu0 0.0
    %641 = vmatpush1.msra.mxu0 0.0
    %642 = vmatprep.subr.mxu0 0.0
    %643 = vmatpush1.msra.mxu0 0.0
    %644 = vmatprep.subr.mxu0 0.0
    %645 = vmatpush1.msra.mxu0 0.0
    %646 = vmatprep.mubr.f32.mxu0 0.0
    %647 = vmatmul.mubr.f32.gmra.mrb[0].mxu0 %v581
    %v648 = vpop.f32.mrb[0].mxu0
    %v649 = vadd.f32 %v248, %v648
    %v650 = vpop.f32.mrb[0].mxu0
    %651 = vdwg.mxu0
    %vm652 = vcmask 1040384
    %v653 = vsel %vm652, %v649, -inf
    %654 = vmax.xlane.f32.xlu0 %v653
    %v655 = vpop.xlane.xlu0 %654
    %v656 = vsub.f32 %v649, %v655
    %v657 = vmul.f32 %v656, 1.442695
    %v658 = vpow.pop %v657
    %v659 = vsel %vm652, %v658, 0.0
    %660 = vadd.xlane.f32.xlu0 %v659
    %v661 = vpop.xlane.xlu0 %660
    %v662 = vlog2.pop %v661
    %v663 = vmul.f32 %v662, 0.6931472
    %v664 = vsub.f32 %v656, %v663
    %665 = vst [vmem:[#allocation12] sm:$0x1] %v664
    %s666 = sld [smem:[#allocation2 + $0x1]]
    %s667 = scalar_lea.vmem [#allocation6], %s666
    %v668 = vld [vmem:[%s667] sm:$0x1]
    %v669 = vmax.f32 %v668, 0.0
    %670 = vmatprep.subr.mxu0 %v164
    %671 = vmatpush1.msra.mxu0 %v163
    %672 = vmatprep.subr.mxu0 %v168
    %673 = vmatpush1.msra.mxu0 %v167
    %674 = vmatprep.subr.mxu0 %v172
    %675 = vmatpush1.msra.mxu0 %v171
    %676 = vmatprep.subr.mxu0 %v176
    %677 = vmatpush1.msra.mxu0 %v175
    %678 = vmatprep.subr.mxu0 %v180
    %679 = vmatpush1.msra.mxu0 %v179
    %680 = vmatprep.subr.mxu0 %v184
    %681 = vmatpush1.msra.mxu0 %v183
    %682 = vmatprep.subr.mxu0 %v188
    %683 = vmatpush1.msra.mxu0 %v187
    %684 = vmatprep.subr.mxu0 %v192
    %685 = vmatpush1.msra.mxu0 %v191
    %686 = vmatprep.subr.mxu0 %v196
    %687 = vmatpush1.msra.mxu0 %v195
    %688 = vmatprep.subr.mxu0 %v200
    %689 = vmatpush1.msra.mxu0 %v199
    %690 = vmatprep.subr.mxu0 %v204
    %691 = vmatpush1.msra.mxu0 %v203
    %692 = vmatprep.subr.mxu0 %v208
    %693 = vmatpush1.msra.mxu0 %v207
    %694 = vmatprep.subr.mxu0 %v212
    %695 = vmatpush1.msra.mxu0 %v211
    %696 = vmatprep.subr.mxu0 %v216
    %697 = vmatpush1.msra.mxu0 %v215
    %698 = vmatprep.subr.mxu0 %v220
    %699 = vmatpush1.msra.mxu0 %v219
    %700 = vmatprep.subr.mxu0 %v224
    %701 = vmatpush1.msra.mxu0 %v223
    %702 = vmatprep.subr.mxu0 0.0
    %703 = vmatpush1.msra.mxu0 0.0
    %704 = vmatprep.subr.mxu0 0.0
    %705 = vmatpush1.msra.mxu0 0.0
    %706 = vmatprep.subr.mxu0 0.0
    %707 = vmatpush1.msra.mxu0 0.0
    %708 = vmatprep.subr.mxu0 0.0
    %709 = vmatpush1.msra.mxu0 0.0
    %710 = vmatprep.subr.mxu0 0.0
    %711 = vmatpush1.msra.mxu0 0.0
    %712 = vmatprep.subr.mxu0 0.0
    %713 = vmatpush1.msra.mxu0 0.0
    %714 = vmatprep.subr.mxu0 0.0
    %715 = vmatpush1.msra.mxu0 0.0
    %716 = vmatprep.subr.mxu0 0.0
    %717 = vmatpush1.msra.mxu0 0.0
    %718 = vmatprep.subr.mxu0 0.0
    %719 = vmatpush1.msra.mxu0 0.0
    %720 = vmatprep.subr.mxu0 0.0
    %721 = vmatpush1.msra.mxu0 0.0
    %722 = vmatprep.subr.mxu0 0.0
    %723 = vmatpush1.msra.mxu0 0.0
    %724 = vmatprep.subr.mxu0 0.0
    %725 = vmatpush1.msra.mxu0 0.0
    %726 = vmatprep.subr.mxu0 0.0
    %727 = vmatpush1.msra.mxu0 0.0
    %728 = vmatprep.subr.mxu0 0.0
    %729 = vmatpush1.msra.mxu0 0.0
    %730 = vmatprep.subr.mxu0 0.0
    %731 = vmatpush1.msra.mxu0 0.0
    %732 = vmatprep.subr.mxu0 0.0
    %733 = vmatpush1.msra.mxu0 0.0
    %734 = vmatprep.mubr.f32.mxu0 0.0
    %735 = vmatmul.mubr.f32.gmra.mrb[0].mxu0 %v581
    %v736 = vpop.f32.mrb[0].mxu0
    %v737 = vadd.f32 0.0, %v736
    %v738 = vpop.f32.mrb[0].mxu0
    %v739 = vadd.f32 0.0, %v738
    %740 = vdwg.mxu0
    %741 = vmatprep.subr.mxu0 %v166
    %742 = vmatpush1.msra.mxu0 %v165
    %743 = vmatprep.subr.mxu0 %v170
    %744 = vmatpush1.msra.mxu0 %v169
    %745 = vmatprep.subr.mxu0 %v174
    %746 = vmatpush1.msra.mxu0 %v173
    %747 = vmatprep.subr.mxu0 %v178
    %748 = vmatpush1.msra.mxu0 %v177
    %749 = vmatprep.subr.mxu0 %v182
    %750 = vmatpush1.msra.mxu0 %v181
    %751 = vmatprep.subr.mxu0 %v186
    %752 = vmatpush1.msra.mxu0 %v185
    %753 = vmatprep.subr.mxu0 %v190
    %754 = vmatpush1.msra.mxu0 %v189
    %755 = vmatprep.subr.mxu0 %v194
    %756 = vmatpush1.msra.mxu0 %v193
    %757 = vmatprep.subr.mxu0 %v198
    %758 = vmatpush1.msra.mxu0 %v197
    %759 = vmatprep.subr.mxu0 %v202
    %760 = vmatpush1.msra.mxu0 %v201
    %761 = vmatprep.subr.mxu0 %v206
    %762 = vmatpush1.msra.mxu0 %v205
    %763 = vmatprep.subr.mxu0 %v210
    %764 = vmatpush1.msra.mxu0 %v209
    %765 = vmatprep.subr.mxu0 %v214
    %766 = vmatpush1.msra.mxu0 %v213
    %767 = vmatprep.subr.mxu0 %v218
    %768 = vmatpush1.msra.mxu0 %v217
    %769 = vmatprep.subr.mxu0 %v222
    %770 = vmatpush1.msra.mxu0 %v221
    %771 = vmatprep.subr.mxu0 %v226
    %772 = vmatpush1.msra.mxu0 %v225
    %773 = vmatprep.subr.mxu0 0.0
    %774 = vmatpush1.msra.mxu0 0.0
    %775 = vmatprep.subr.mxu0 0.0
    %776 = vmatpush1.msra.mxu0 0.0
    %777 = vmatprep.subr.mxu0 0.0
    %778 = vmatpush1.msra.mxu0 0.0
    %779 = vmatprep.subr.mxu0 0.0
    %780 = vmatpush1.msra.mxu0 0.0
    %781 = vmatprep.subr.mxu0 0.0
    %782 = vmatpush1.msra.mxu0 0.0
    %783 = vmatprep.subr.mxu0 0.0
    %784 = vmatpush1.msra.mxu0 0.0
    %785 = vmatprep.subr.mxu0 0.0
    %786 = vmatpush1.msra.mxu0 0.0
    %787 = vmatprep.subr.mxu0 0.0
    %788 = vmatpush1.msra.mxu0 0.0
    %789 = vmatprep.subr.mxu0 0.0
    %790 = vmatpush1.msra.mxu0 0.0
    %791 = vmatprep.subr.mxu0 0.0
    %792 = vmatpush1.msra.mxu0 0.0
    %793 = vmatprep.subr.mxu0 0.0
    %794 = vmatpush1.msra.mxu0 0.0
    %795 = vmatprep.subr.mxu0 0.0
    %796 = vmatpush1.msra.mxu0 0.0
    %797 = vmatprep.subr.mxu0 0.0
    %798 = vmatpush1.msra.mxu0 0.0
    %799 = vmatprep.subr.mxu0 0.0
    %800 = vmatpush1.msra.mxu0 0.0
    %801 = vmatprep.subr.mxu0 0.0
    %802 = vmatpush1.msra.mxu0 0.0
    %803 = vmatprep.subr.mxu0 0.0
    %804 = vmatpush1.msra.mxu0 0.0
    %805 = vmatprep.mubr.f32.mxu0 0.0
    %806 = vmatmul.mubr.f32.gmra.mrb[0].mxu0 %v581
    %v807 = vpop.f32.mrb[0].mxu0
    %v808 = vadd.f32 0.0, %v807
    %v809 = vpop.f32.mrb[0].mxu0
    %v810 = vadd.f32 0.0, %v809
    %811 = vdwg.mxu0
    %812 = vmatprep.subr.mxu0 %v100
    %813 = vmatpush1.msra.mxu0 %v99
    %814 = vmatprep.subr.mxu0 %v104
    %815 = vmatpush1.msra.mxu0 %v103
    %816 = vmatprep.subr.mxu0 %v108
    %817 = vmatpush1.msra.mxu0 %v107
    %818 = vmatprep.subr.mxu0 %v112
    %819 = vmatpush1.msra.mxu0 %v111
    %820 = vmatprep.subr.mxu0 %v116
    %821 = vmatpush1.msra.mxu0 %v115
    %822 = vmatprep.subr.mxu0 %v120
    %823 = vmatpush1.msra.mxu0 %v119
    %824 = vmatprep.subr.mxu0 %v124
    %825 = vmatpush1.msra.mxu0 %v123
    %826 = vmatprep.subr.mxu0 %v128
    %827 = vmatpush1.msra.mxu0 %v127
    %828 = vmatprep.subr.mxu0 %v132
    %829 = vmatpush1.msra.mxu0 %v131
    %830 = vmatprep.subr.mxu0 %v136
    %831 = vmatpush1.msra.mxu0 %v135
    %832 = vmatprep.subr.mxu0 %v140
    %833 = vmatpush1.msra.mxu0 %v139
    %834 = vmatprep.subr.mxu0 %v144
    %835 = vmatpush1.msra.mxu0 %v143
    %836 = vmatprep.subr.mxu0 %v148
    %837 = vmatpush1.msra.mxu0 %v147
    %838 = vmatprep.subr.mxu0 %v152
    %839 = vmatpush1.msra.mxu0 %v151
    %840 = vmatprep.subr.mxu0 %v156
    %841 = vmatpush1.msra.mxu0 %v155
    %842 = vmatprep.subr.mxu0 %v160
    %843 = vmatpush1.msra.mxu0 %v159
    %844 = vmatprep.subr.mxu0 0.0
    %845 = vmatpush1.msra.mxu0 0.0
    %846 = vmatprep.subr.mxu0 0.0
    %847 = vmatpush1.msra.mxu0 0.0
    %848 = vmatprep.subr.mxu0 0.0
    %849 = vmatpush1.msra.mxu0 0.0
    %850 = vmatprep.subr.mxu0 0.0
    %851 = vmatpush1.msra.mxu0 0.0
    %852 = vmatprep.subr.mxu0 0.0
    %853 = vmatpush1.msra.mxu0 0.0
    %854 = vmatprep.subr.mxu0 0.0
    %855 = vmatpush1.msra.mxu0 0.0
    %856 = vmatprep.subr.mxu0 0.0
    %857 = vmatpush1.msra.mxu0 0.0
    %858 = vmatprep.subr.mxu0 0.0
    %859 = vmatpush1.msra.mxu0 0.0
    %860 = vmatprep.subr.mxu0 0.0
    %861 = vmatpush1.msra.mxu0 0.0
    %862 = vmatprep.subr.mxu0 0.0
    %863 = vmatpush1.msra.mxu0 0.0
    %864 = vmatprep.subr.mxu0 0.0
    %865 = vmatpush1.msra.mxu0 0.0
    %866 = vmatprep.subr.mxu0 0.0
    %867 = vmatpush1.msra.mxu0 0.0
    %868 = vmatprep.subr.mxu0 0.0
    %869 = vmatpush1.msra.mxu0 0.0
    %870 = vmatprep.subr.mxu0 0.0
    %871 = vmatpush1.msra.mxu0 0.0
    %872 = vmatprep.subr.mxu0 0.0
    %873 = vmatpush1.msra.mxu0 0.0
    %874 = vmatprep.subr.mxu0 0.0
    %875 = vmatpush1.msra.mxu0 0.0
    %876 = vmatprep.mubr.f32.mxu0 0.0
    %877 = vmatmul.mubr.f32.gmra.mrb[0].mxu0 %v669
    %v878 = vpop.f32.mrb[0].mxu0
    %v879 = vadd.f32 %v737, %v878
    %v880 = vpop.f32.mrb[0].mxu0
    %v881 = vadd.f32 %v739, %v880
    %882 = vdwg.mxu0
    %883 = vmatprep.subr.mxu0 %v102
    %884 = vmatpush1.msra.mxu0 %v101
    %885 = vmatprep.subr.mxu0 %v106
    %886 = vmatpush1.msra.mxu0 %v105
    %887 = vmatprep.subr.mxu0 %v110
    %888 = vmatpush1.msra.mxu0 %v109
    %889 = vmatprep.subr.mxu0 %v114
    %890 = vmatpush1.msra.mxu0 %v113
    %891 = vmatprep.subr.mxu0 %v118
    %892 = vmatpush1.msra.mxu0 %v117
    %893 = vmatprep.subr.mxu0 %v122
    %894 = vmatpush1.msra.mxu0 %v121
    %895 = vmatprep.subr.mxu0 %v126
    %896 = vmatpush1.msra.mxu0 %v125
    %897 = vmatprep.subr.mxu0 %v130
    %898 = vmatpush1.msra.mxu0 %v129
    %899 = vmatprep.subr.mxu0 %v134
    %900 = vmatpush1.msra.mxu0 %v133
    %901 = vmatprep.subr.mxu0 %v138
    %902 = vmatpush1.msra.mxu0 %v137
    %903 = vmatprep.subr.mxu0 %v142
    %904 = vmatpush1.msra.mxu0 %v141
    %905 = vmatprep.subr.mxu0 %v146
    %906 = vmatpush1.msra.mxu0 %v145
    %907 = vmatprep.subr.mxu0 %v150
    %908 = vmatpush1.msra.mxu0 %v149
    %909 = vmatprep.subr.mxu0 %v154
    %910 = vmatpush1.msra.mxu0 %v153
    %911 = vmatprep.subr.mxu0 %v158
    %912 = vmatpush1.msra.mxu0 %v157
    %913 = vmatprep.subr.mxu0 %v162
    %914 = vmatpush1.msra.mxu0 %v161
    %915 = vmatprep.subr.mxu0 0.0
    %916 = vmatpush1.msra.mxu0 0.0
    %917 = vmatprep.subr.mxu0 0.0
    %918 = vmatpush1.msra.mxu0 0.0
    %919 = vmatprep.subr.mxu0 0.0
    %920 = vmatpush1.msra.mxu0 0.0
    %921 = vmatprep.subr.mxu0 0.0
    %922 = vmatpush1.msra.mxu0 0.0
    %923 = vmatprep.subr.mxu0 0.0
    %924 = vmatpush1.msra.mxu0 0.0
    %925 = vmatprep.subr.mxu0 0.0
    %926 = vmatpush1.msra.mxu0 0.0
    %927 = vmatprep.subr.mxu0 0.0
    %928 = vmatpush1.msra.mxu0 0.0
    %929 = vmatprep.subr.mxu0 0.0
    %930 = vmatpush1.msra.mxu0 0.0
    %931 = vmatprep.subr.mxu0 0.0
    %932 = vmatpush1.msra.mxu0 0.0
    %933 = vmatprep.subr.mxu0 0.0
    %934 = vmatpush1.msra.mxu0 0.0
    %935 = vmatprep.subr.mxu0 0.0
    %936 = vmatpush1.msra.mxu0 0.0
    %937 = vmatprep.subr.mxu0 0.0
    %938 = vmatpush1.msra.mxu0 0.0
    %939 = vmatprep.subr.mxu0 0.0
    %940 = vmatpush1.msra.mxu0 0.0
    %941 = vmatprep.subr.mxu0 0.0
    %942 = vmatpush1.msra.mxu0 0.0
    %943 = vmatprep.subr.mxu0 0.0
    %944 = vmatpush1.msra.mxu0 0.0
    %945 = vmatprep.subr.mxu0 0.0
    %946 = vmatpush1.msra.mxu0 0.0
    %947 = vmatprep.mubr.f32.mxu0 0.0
    %948 = vmatmul.mubr.f32.gmra.mrb[0].mxu0 %v669
    %v949 = vpop.f32.mrb[0].mxu0
    %v950 = vadd.f32 %v808, %v949
    %v951 = vpop.f32.mrb[0].mxu0
    %v952 = vadd.f32 %v810, %v951
    %953 = vdwg.mxu0
    %v954 = vadd.f32 %v879, %v542
    %v955 = vadd.f32 %v881, %v546
    %v956 = vadd.f32 %v950, %v550
    %v957 = vadd.f32 %v952, %v554
    %v958 = vxor.u32 %v954, 2147483648
    %v959 = vmul.f32 %v958, 1.442695
    %v960 = vpow.pop %v959
    %v961 = vadd.f32 %v960, 1.0
    %v962 = vrcp.pop %v961
    %v963 = vmul.f32 1.0, %v962
    %v964 = vxor.u32 %v955, 2147483648
    %v965 = vmul.f32 %v964, 1.442695
    %v966 = vpow.pop %v965
    %v967 = vadd.f32 %v966, 1.0
    %v968 = vrcp.pop %v967
    %v969 = vmul.f32 1.0, %v968
    %v970 = vmul.f32 %v963, %v957
    %v971 = vadd.f32 %v956, %v970
    %v972 = vtanh.pop %v971
    %v973 = vsub.f32 1.0, %v969
    %v974 = vmul.f32 %v973, %v972
    %v975 = vmul.f32 %v969, %v581
    %v976 = vadd.f32 %v974, %v975
    %977 = vmatprep.subr.mxu0 0.0
    %978 = vmatpush1.msra.mxu0 %v228
    %979 = vmatprep.subr.mxu0 0.0
    %980 = vmatpush1.msra.mxu0 %v229
    %981 = vmatprep.subr.mxu0 0.0
    %982 = vmatpush1.msra.mxu0 %v230
    %983 = vmatprep.subr.mxu0 0.0
    %984 = vmatpush1.msra.mxu0 %v231
    %985 = vmatprep.subr.mxu0 0.0
    %986 = vmatpush1.msra.mxu0 %v232
    %987 = vmatprep.subr.mxu0 0.0
    %988 = vmatpush1.msra.mxu0 %v233
    %989 = vmatprep.subr.mxu0 0.0
    %990 = vmatpush1.msra.mxu0 %v234
    %991 = vmatprep.subr.mxu0 0.0
    %992 = vmatpush1.msra.mxu0 %v235
    %993 = vmatprep.subr.mxu0 0.0
    %994 = vmatpush1.msra.mxu0 %v236
    %995 = vmatprep.subr.mxu0 0.0
    %996 = vmatpush1.msra.mxu0 %v237
    %997 = vmatprep.subr.mxu0 0.0
    %998 = vmatpush1.msra.mxu0 %v238
    %999 = vmatprep.subr.mxu0 0.0
    %1000 = vmatpush1.msra.mxu0 %v239
    %1001 = vmatprep.subr.mxu0 0.0
    %1002 = vmatpush1.msra.mxu0 %v240
    %1003 = vmatprep.subr.mxu0 0.0
    %1004 = vmatpush1.msra.mxu0 %v241
    %1005 = vmatprep.subr.mxu0 0.0
    %1006 = vmatpush1.msra.mxu0 %v242
    %1007 = vmatprep.subr.mxu0 0.0
    %1008 = vmatpush1.msra.mxu0 %v243
    %1009 = vmatprep.subr.mxu0 0.0
    %1010 = vmatpush1.msra.mxu0 0.0
    %1011 = vmatprep.subr.mxu0 0.0
    %1012 = vmatpush1.msra.mxu0 0.0
    %1013 = vmatprep.subr.mxu0 0.0
    %1014 = vmatpush1.msra.mxu0 0.0
    %1015 = vmatprep.subr.mxu0 0.0
    %1016 = vmatpush1.msra.mxu0 0.0
    %1017 = vmatprep.subr.mxu0 0.0
    %1018 = vmatpush1.msra.mxu0 0.0
    %1019 = vmatprep.subr.mxu0 0.0
    %1020 = vmatpush1.msra.mxu0 0.0
    %1021 = vmatprep.subr.mxu0 0.0
    %1022 = vmatpush1.msra.mxu0 0.0
    %1023 = vmatprep.subr.mxu0 0.0
    %1024 = vmatpush1.msra.mxu0 0.0
    %1025 = vmatprep.subr.mxu0 0.0
    %1026 = vmatpush1.msra.mxu0 0.0
    %1027 = vmatprep.subr.mxu0 0.0
    %1028 = vmatpush1.msra.mxu0 0.0
    %1029 = vmatprep.subr.mxu0 0.0
    %1030 = vmatpush1.msra.mxu0 0.0
    %1031 = vmatprep.subr.mxu0 0.0
    %1032 = vmatpush1.msra.mxu0 0.0
    %1033 = vmatprep.subr.mxu0 0.0
    %1034 = vmatpush1.msra.mxu0 0.0
    %1035 = vmatprep.subr.mxu0 0.0
    %1036 = vmatpush1.msra.mxu0 0.0
    %1037 = vmatprep.subr.mxu0 0.0
    %1038 = vmatpush1.msra.mxu0 0.0
    %1039 = vmatprep.subr.mxu0 0.0
    %1040 = vmatpush1.msra.mxu0 0.0
    %1041 = vmatprep.mubr.f32.mxu0 0.0
    %1042 = vmatmul.mubr.f32.gmra.mrb[0].mxu0 %v976
    %v1043 = vpop.f32.mrb[0].mxu0
    %v1044 = vadd.f32 %v248, %v1043
    %v1045 = vpop.f32.mrb[0].mxu0
    %1046 = vdwg.mxu0
    %v1047 = vsel %vm652, %v1044, -inf
    %1048 = vmax.xlane.f32.xlu0 %v1047
    %v1049 = vpop.xlane.xlu0 %1048
    %v1050 = vsub.f32 %v1044, %v1049
    %v1051 = vmul.f32 %v1050, 1.442695
    %v1052 = vpow.pop %v1051
    %v1053 = vsel %vm652, %v1052, 0.0
    %1054 = vadd.xlane.f32.xlu0 %v1053
    %v1055 = vpop.xlane.xlu0 %1054
    %v1056 = vlog2.pop %v1055
    %v1057 = vmul.f32 %v1056, 0.6931472
    %v1058 = vsub.f32 %v1050, %v1057
    %1059 = vst [vmem:[#allocation12 + $0x1] sm:$0x1] %v1058
    %s1060 = sld [smem:[#allocation2 + $0x2]]
    %s1061 = scalar_lea.vmem [#allocation6], %s1060
    %v1062 = vld [vmem:[%s1061] sm:$0x1]
    %v1063 = vmax.f32 %v1062, 0.0
    %1064 = vmatprep.subr.mxu0 %v164
    %1065 = vmatpush1.msra.mxu0 %v163
    %1066 = vmatprep.subr.mxu0 %v168
    %1067 = vmatpush1.msra.mxu0 %v167
    %1068 = vmatprep.subr.mxu0 %v172
    %1069 = vmatpush1.msra.mxu0 %v171
    %1070 = vmatprep.subr.mxu0 %v176
    %1071 = vmatpush1.msra.mxu0 %v175
    %1072 = vmatprep.subr.mxu0 %v180
    %1073 = vmatpush1.msra.mxu0 %v179
    %1074 = vmatprep.subr.mxu0 %v184
    %1075 = vmatpush1.msra.mxu0 %v183
    %1076 = vmatprep.subr.mxu0 %v188
    %1077 = vmatpush1.msra.mxu0 %v187
    %1078 = vmatprep.subr.mxu0 %v192
    %1079 = vmatpush1.msra.mxu0 %v191
    %1080 = vmatprep.subr.mxu0 %v196
    %1081 = vmatpush1.msra.mxu0 %v195
    %1082 = vmatprep.subr.mxu0 %v200
    %1083 = vmatpush1.msra.mxu0 %v199
    %1084 = vmatprep.subr.mxu0 %v204
    %1085 = vmatpush1.msra.mxu0 %v203
    %1086 = vmatprep.subr.mxu0 %v208
    %1087 = vmatpush1.msra.mxu0 %v207
    %1088 = vmatprep.subr.mxu0 %v212
    %1089 = vmatpush1.msra.mxu0 %v211
    %1090 = vmatprep.subr.mxu0 %v216
    %1091 = vmatpush1.msra.mxu0 %v215
    %1092 = vmatprep.subr.mxu0 %v220
    %1093 = vmatpush1.msra.mxu0 %v219
    %1094 = vmatprep.subr.mxu0 %v224
    %1095 = vmatpush1.msra.mxu0 %v223
    %1096 = vmatprep.subr.mxu0 0.0
    %1097 = vmatpush1.msra.mxu0 0.0
    %1098 = vmatprep.subr.mxu0 0.0
    %1099 = vmatpush1.msra.mxu0 0.0
    %1100 = vmatprep.subr.mxu0 0.0
    %1101 = vmatpush1.msra.mxu0 0.0
    %1102 = vmatprep.subr.mxu0 0.0
    %1103 = vmatpush1.msra.mxu0 0.0
    %1104 = vmatprep.subr.mxu0 0.0
    %1105 = vmatpush1.msra.mxu0 0.0
    %1106 = vmatprep.subr.mxu0 0.0
    %1107 = vmatpush1.msra.mxu0 0.0
    %1108 = vmatprep.subr.mxu0 0.0
    %1109 = vmatpush1.msra.mxu0 0.0
    %1110 = vmatprep.subr.mxu0 0.0
    %1111 = vmatpush1.msra.mxu0 0.0
    %1112 = vmatprep.subr.mxu0 0.0
    %1113 = vmatpush1.msra.mxu0 0.0
    %1114 = vmatprep.subr.mxu0 0.0
    %1115 = vmatpush1.msra.mxu0 0.0
    %1116 = vmatprep.subr.mxu0 0.0
    %1117 = vmatpush1.msra.mxu0 0.0
    %1118 = vmatprep.subr.mxu0 0.0
    %1119 = vmatpush1.msra.mxu0 0.0
    %1120 = vmatprep.subr.mxu0 0.0
    %1121 = vmatpush1.msra.mxu0 0.0
    %1122 = vmatprep.subr.mxu0 0.0
    %1123 = vmatpush1.msra.mxu0 0.0
    %1124 = vmatprep.subr.mxu0 0.0
    %1125 = vmatpush1.msra.mxu0 0.0
    %1126 = vmatprep.subr.mxu0 0.0
    %1127 = vmatpush1.msra.mxu0 0.0
    %1128 = vmatprep.mubr.f32.mxu0 0.0
    %1129 = vmatmul.mubr.f32.gmra.mrb[0].mxu0 %v976
    %v1130 = vpop.f32.mrb[0].mxu0
    %v1131 = vadd.f32 0.0, %v1130
    %v1132 = vpop.f32.mrb[0].mxu0
    %v1133 = vadd.f32 0.0, %v1132
    %1134 = vdwg.mxu0
    %1135 = vmatprep.subr.mxu0 %v166
    %1136 = vmatpush1.msra.mxu0 %v165
    %1137 = vmatprep.subr.mxu0 %v170
    %1138 = vmatpush1.msra.mxu0 %v169
    %1139 = vmatprep.subr.mxu0 %v174
    %1140 = vmatpush1.msra.mxu0 %v173
    %1141 = vmatprep.subr.mxu0 %v178
    %1142 = vmatpush1.msra.mxu0 %v177
    %1143 = vmatprep.subr.mxu0 %v182
    %1144 = vmatpush1.msra.mxu0 %v181
    %1145 = vmatprep.subr.mxu0 %v186
    %1146 = vmatpush1.msra.mxu0 %v185
    %1147 = vmatprep.subr.mxu0 %v190
    %1148 = vmatpush1.msra.mxu0 %v189
    %1149 = vmatprep.subr.mxu0 %v194
    %1150 = vmatpush1.msra.mxu0 %v193
    %1151 = vmatprep.subr.mxu0 %v198
    %1152 = vmatpush1.msra.mxu0 %v197
    %1153 = vmatprep.subr.mxu0 %v202
    %1154 = vmatpush1.msra.mxu0 %v201
    %1155 = vmatprep.subr.mxu0 %v206
    %1156 = vmatpush1.msra.mxu0 %v205
    %1157 = vmatprep.subr.mxu0 %v210
    %1158 = vmatpush1.msra.mxu0 %v209
    %1159 = vmatprep.subr.mxu0 %v214
    %1160 = vmatpush1.msra.mxu0 %v213
    %1161 = vmatprep.subr.mxu0 %v218
    %1162 = vmatpush1.msra.mxu0 %v217
    %1163 = vmatprep.subr.mxu0 %v222
    %1164 = vmatpush1.msra.mxu0 %v221
    %1165 = vmatprep.subr.mxu0 %v226
    %1166 = vmatpush1.msra.mxu0 %v225
    %1167 = vmatprep.subr.mxu0 0.0
    %1168 = vmatpush1.msra.mxu0 0.0
    %1169 = vmatprep.subr.mxu0 0.0
    %1170 = vmatpush1.msra.mxu0 0.0
    %1171 = vmatprep.subr.mxu0 0.0
    %1172 = vmatpush1.msra.mxu0 0.0
    %1173 = vmatprep.subr.mxu0 0.0
    %1174 = vmatpush1.msra.mxu0 0.0
    %1175 = vmatprep.subr.mxu0 0.0
    %1176 = vmatpush1.msra.mxu0 0.0
    %1177 = vmatprep.subr.mxu0 0.0
    %1178 = vmatpush1.msra.mxu0 0.0
    %1179 = vmatprep.subr.mxu0 0.0
    %1180 = vmatpush1.msra.mxu0 0.0
    %1181 = vmatprep.subr.mxu0 0.0
    %1182 = vmatpush1.msra.mxu0 0.0
    %1183 = vmatprep.subr.mxu0 0.0
    %1184 = vmatpush1.msra.mxu0 0.0
    %1185 = vmatprep.subr.mxu0 0.0
    %1186 = vmatpush1.msra.mxu0 0.0
    %1187 = vmatprep.subr.mxu0 0.0
    %1188 = vmatpush1.msra.mxu0 0.0
    %1189 = vmatprep.subr.mxu0 0.0
    %1190 = vmatpush1.msra.mxu0 0.0
    %1191 = vmatprep.subr.mxu0 0.0
    %1192 = vmatpush1.msra.mxu0 0.0
    %1193 = vmatprep.subr.mxu0 0.0
    %1194 = vmatpush1.msra.mxu0 0.0
    %1195 = vmatprep.subr.mxu0 0.0
    %1196 = vmatpush1.msra.mxu0 0.0
    %1197 = vmatprep.subr.mxu0 0.0
    %1198 = vmatpush1.msra.mxu0 0.0
    %1199 = vmatprep.mubr.f32.mxu0 0.0
    %1200 = vmatmul.mubr.f32.gmra.mrb[0].mxu0 %v976
    %v1201 = vpop.f32.mrb[0].mxu0
    %v1202 = vadd.f32 0.0, %v1201
    %v1203 = vpop.f32.mrb[0].mxu0
    %v1204 = vadd.f32 0.0, %v1203
    %1205 = vdwg.mxu0
    %1206 = vmatprep.subr.mxu0 %v100
    %1207 = vmatpush1.msra.mxu0 %v99
    %1208 = vmatprep.subr.mxu0 %v104
    %1209 = vmatpush1.msra.mxu0 %v103
    %1210 = vmatprep.subr.mxu0 %v108
    %1211 = vmatpush1.msra.mxu0 %v107
    %1212 = vmatprep.subr.mxu0 %v112
    %1213 = vmatpush1.msra.mxu0 %v111
    %1214 = vmatprep.subr.mxu0 %v116
    %1215 = vmatpush1.msra.mxu0 %v115
    %1216 = vmatprep.subr.mxu0 %v120
    %1217 = vmatpush1.msra.mxu0 %v119
    %1218 = vmatprep.subr.mxu0 %v124
    %1219 = vmatpush1.msra.mxu0 %v123
    %1220 = vmatprep.subr.mxu0 %v128
    %1221 = vmatpush1.msra.mxu0 %v127
    %1222 = vmatprep.subr.mxu0 %v132
    %1223 = vmatpush1.msra.mxu0 %v131
    %1224 = vmatprep.subr.mxu0 %v136
    %1225 = vmatpush1.msra.mxu0 %v135
    %1226 = vmatprep.subr.mxu0 %v140
    %1227 = vmatpush1.msra.mxu0 %v139
    %1228 = vmatprep.subr.mxu0 %v144
    %1229 = vmatpush1.msra.mxu0 %v143
    %1230 = vmatprep.subr.mxu0 %v148
    %1231 = vmatpush1.msra.mxu0 %v147
    %1232 = vmatprep.subr.mxu0 %v152
    %1233 = vmatpush1.msra.mxu0 %v151
    %1234 = vmatprep.subr.mxu0 %v156
    %1235 = vmatpush1.msra.mxu0 %v155
    %1236 = vmatprep.subr.mxu0 %v160
    %1237 = vmatpush1.msra.mxu0 %v159
    %1238 = vmatprep.subr.mxu0 0.0
    %1239 = vmatpush1.msra.mxu0 0.0
    %1240 = vmatprep.subr.mxu0 0.0
    %1241 = vmatpush1.msra.mxu0 0.0
    %1242 = vmatprep.subr.mxu0 0.0
    %1243 = vmatpush1.msra.mxu0 0.0
    %1244 = vmatprep.subr.mxu0 0.0
    %1245 = vmatpush1.msra.mxu0 0.0
    %1246 = vmatprep.subr.mxu0 0.0
    %1247 = vmatpush1.msra.mxu0 0.0
    %1248 = vmatprep.subr.mxu0 0.0
    %1249 = vmatpush1.msra.mxu0 0.0
    %1250 = vmatprep.subr.mxu0 0.0
    %1251 = vmatpush1.msra.mxu0 0.0
    %1252 = vmatprep.subr.mxu0 0.0
    %1253 = vmatpush1.msra.mxu0 0.0
    %1254 = vmatprep.subr.mxu0 0.0
    %1255 = vmatpush1.msra.mxu0 0.0
    %1256 = vmatprep.subr.mxu0 0.0
    %1257 = vmatpush1.msra.mxu0 0.0
    %1258 = vmatprep.subr.mxu0 0.0
    %1259 = vmatpush1.msra.mxu0 0.0
    %1260 = vmatprep.subr.mxu0 0.0
    %1261 = vmatpush1.msra.mxu0 0.0
    %1262 = vmatprep.subr.mxu0 0.0
    %1263 = vmatpush1.msra.mxu0 0.0
    %1264 = vmatprep.subr.mxu0 0.0
    %1265 = vmatpush1.msra.mxu0 0.0
    %1266 = vmatprep.subr.mxu0 0.0
    %1267 = vmatpush1.msra.mxu0 0.0
    %1268 = vmatprep.subr.mxu0 0.0
    %1269 = vmatpush1.msra.mxu0 0.0
    %1270 = vmatprep.mubr.f32.mxu0 0.0
    %1271 = vmatmul.mubr.f32.gmra.mrb[0].mxu0 %v1063
    %v1272 = vpop.f32.mrb[0].mxu0
    %v1273 = vadd.f32 %v1131, %v1272
    %v1274 = vpop.f32.mrb[0].mxu0
    %v1275 = vadd.f32 %v1133, %v1274
    %1276 = vdwg.mxu0
    %1277 = vmatprep.subr.mxu0 %v102
    %1278 = vmatpush1.msra.mxu0 %v101
    %1279 = vmatprep.subr.mxu0 %v106
    %1280 = vmatpush1.msra.mxu0 %v105
    %1281 = vmatprep.subr.mxu0 %v110
    %1282 = vmatpush1.msra.mxu0 %v109
    %1283 = vmatprep.subr.mxu0 %v114
    %1284 = vmatpush1.msra.mxu0 %v113
    %1285 = vmatprep.subr.mxu0 %v118
    %1286 = vmatpush1.msra.mxu0 %v117
    %1287 = vmatprep.subr.mxu0 %v122
    %1288 = vmatpush1.msra.mxu0 %v121
    %1289 = vmatprep.subr.mxu0 %v126
    %1290 = vmatpush1.msra.mxu0 %v125
    %1291 = vmatprep.subr.mxu0 %v130
    %1292 = vmatpush1.msra.mxu0 %v129
    %1293 = vmatprep.subr.mxu0 %v134
    %1294 = vmatpush1.msra.mxu0 %v133
    %1295 = vmatprep.subr.mxu0 %v138
    %1296 = vmatpush1.msra.mxu0 %v137
    %1297 = vmatprep.subr.mxu0 %v142
    %1298 = vmatpush1.msra.mxu0 %v141
    %1299 = vmatprep.subr.mxu0 %v146
    %1300 = vmatpush1.msra.mxu0 %v145
    %1301 = vmatprep.subr.mxu0 %v150
    %1302 = vmatpush1.msra.mxu0 %v149
    %1303 = vmatprep.subr.mxu0 %v154
    %1304 = vmatpush1.msra.mxu0 %v153
    %1305 = vmatprep.subr.mxu0 %v158
    %1306 = vmatpush1.msra.mxu0 %v157
    %1307 = vmatprep.subr.mxu0 %v162
    %1308 = vmatpush1.msra.mxu0 %v161
    %1309 = vmatprep.subr.mxu0 0.0
    %1310 = vmatpush1.msra.mxu0 0.0
    %1311 = vmatprep.subr.mxu0 0.0
    %1312 = vmatpush1.msra.mxu0 0.0
    %1313 = vmatprep.subr.mxu0 0.0
    %1314 = vmatpush1.msra.mxu0 0.0
    %1315 = vmatprep.subr.mxu0 0.0
    %1316 = vmatpush1.msra.mxu0 0.0
    %1317 = vmatprep.subr.mxu0 0.0
    %1318 = vmatpush1.msra.mxu0 0.0
    %1319 = vmatprep.subr.mxu0 0.0
    %1320 = vmatpush1.msra.mxu0 0.0
    %1321 = vmatprep.subr.mxu0 0.0
    %1322 = vmatpush1.msra.mxu0 0.0
    %1323 = vmatprep.subr.mxu0 0.0
    %1324 = vmatpush1.msra.mxu0 0.0
    %1325 = vmatprep.subr.mxu0 0.0
    %1326 = vmatpush1.msra.mxu0 0.0
    %1327 = vmatprep.subr.mxu0 0.0
    %1328 = vmatpush1.msra.mxu0 0.0
    %1329 = vmatprep.subr.mxu0 0.0
    %1330 = vmatpush1.msra.mxu0 0.0
    %1331 = vmatprep.subr.mxu0 0.0
    %1332 = vmatpush1.msra.mxu0 0.0
    %1333 = vmatprep.subr.mxu0 0.0
    %1334 = vmatpush1.msra.mxu0 0.0
    %1335 = vmatprep.subr.mxu0 0.0
    %1336 = vmatpush1.msra.mxu0 0.0
    %1337 = vmatprep.subr.mxu0 0.0
    %1338 = vmatpush1.msra.mxu0 0.0
    %1339 = vmatprep.subr.mxu0 0.0
    %1340 = vmatpush1.msra.mxu0 0.0
    %1341 = vmatprep.mubr.f32.mxu0 0.0
    %1342 = vmatmul.mubr.f32.gmra.mrb[0].mxu0 %v1063
    %v1343 = vpop.f32.mrb[0].mxu0
    %v1344 = vadd.f32 %v1202, %v1343
    %v1345 = vpop.f32.mrb[0].mxu0
    %v1346 = vadd.f32 %v1204, %v1345
    %1347 = vdwg.mxu0
    %v1348 = vadd.f32 %v1273, %v542
    %v1349 = vadd.f32 %v1275, %v546
    %v1350 = vadd.f32 %v1344, %v550
    %v1351 = vadd.f32 %v1346, %v554
    %v1352 = vxor.u32 %v1348, 2147483648
    %v1353 = vmul.f32 %v1352, 1.442695
    %v1354 = vpow.pop %v1353
    %v1355 = vadd.f32 %v1354, 1.0
    %v1356 = vrcp.pop %v1355
    %v1357 = vmul.f32 1.0, %v1356
    %v1358 = vxor.u32 %v1349, 2147483648
    %v1359 = vmul.f32 %v1358, 1.442695
    %v1360 = vpow.pop %v1359
    %v1361 = vadd.f32 %v1360, 1.0
    %v1362 = vrcp.pop %v1361
    %v1363 = vmul.f32 1.0, %v1362
    %v1364 = vmul.f32 %v1357, %v1351
    %v1365 = vadd.f32 %v1350, %v1364
    %v1366 = vtanh.pop %v1365
    %v1367 = vsub.f32 1.0, %v1363
    %v1368 = vmul.f32 %v1367, %v1366
    %v1369 = vmul.f32 %v1363, %v976
    %v1370 = vadd.f32 %v1368, %v1369
    %1371 = vmatprep.subr.mxu0 0.0
    %1372 = vmatpush1.msra.mxu0 %v228
    %1373 = vmatprep.subr.mxu0 0.0
    %1374 = vmatpush1.msra.mxu0 %v229
    %1375 = vmatprep.subr.mxu0 0.0
    %1376 = vmatpush1.msra.mxu0 %v230
    %1377 = vmatprep.subr.mxu0 0.0
    %1378 = vmatpush1.msra.mxu0 %v231
    %1379 = vmatprep.subr.mxu0 0.0
    %1380 = vmatpush1.msra.mxu0 %v232
    %1381 = vmatprep.subr.mxu0 0.0
    %1382 = vmatpush1.msra.mxu0 %v233
    %1383 = vmatprep.subr.mxu0 0.0
    %1384 = vmatpush1.msra.mxu0 %v234
    %1385 = vmatprep.subr.mxu0 0.0
    %1386 = vmatpush1.msra.mxu0 %v235
    %1387 = vmatprep.subr.mxu0 0.0
    %1388 = vmatpush1.msra.mxu0 %v236
    %1389 = vmatprep.subr.mxu0 0.0
    %1390 = vmatpush1.msra.mxu0 %v237
    %1391 = vmatprep.subr.mxu0 0.0
    %1392 = vmatpush1.msra.mxu0 %v238
    %1393 = vmatprep.subr.mxu0 0.0
    %1394 = vmatpush1.msra.mxu0 %v239
    %1395 = vmatprep.subr.mxu0 0.0
    %1396 = vmatpush1.msra.mxu0 %v240
    %1397 = vmatprep.subr.mxu0 0.0
    %1398 = vmatpush1.msra.mxu0 %v241
    %1399 = vmatprep.subr.mxu0 0.0
    %1400 = vmatpush1.msra.mxu0 %v242
    %1401 = vmatprep.subr.mxu0 0.0
    %1402 = vmatpush1.msra.mxu0 %v243
    %1403 = vmatprep.subr.mxu0 0.0
    %1404 = vmatpush1.msra.mxu0 0.0
    %1405 = vmatprep.subr.mxu0 0.0
    %1406 = vmatpush1.msra.mxu0 0.0
    %1407 = vmatprep.subr.mxu0 0.0
    %1408 = vmatpush1.msra.mxu0 0.0
    %1409 = vmatprep.subr.mxu0 0.0
    %1410 = vmatpush1.msra.mxu0 0.0
    %1411 = vmatprep.subr.mxu0 0.0
    %1412 = vmatpush1.msra.mxu0 0.0
    %1413 = vmatprep.subr.mxu0 0.0
    %1414 = vmatpush1.msra.mxu0 0.0
    %1415 = vmatprep.subr.mxu0 0.0
    %1416 = vmatpush1.msra.mxu0 0.0
    %1417 = vmatprep.subr.mxu0 0.0
    %1418 = vmatpush1.msra.mxu0 0.0
    %1419 = vmatprep.subr.mxu0 0.0
    %1420 = vmatpush1.msra.mxu0 0.0
    %1421 = vmatprep.subr.mxu0 0.0
    %1422 = vmatpush1.msra.mxu0 0.0
    %1423 = vmatprep.subr.mxu0 0.0
    %1424 = vmatpush1.msra.mxu0 0.0
    %1425 = vmatprep.subr.mxu0 0.0
    %1426 = vmatpush1.msra.mxu0 0.0
    %1427 = vmatprep.subr.mxu0 0.0
    %1428 = vmatpush1.msra.mxu0 0.0
    %1429 = vmatprep.subr.mxu0 0.0
    %1430 = vmatpush1.msra.mxu0 0.0
    %1431 = vmatprep.subr.mxu0 0.0
    %1432 = vmatpush1.msra.mxu0 0.0
    %1433 = vmatprep.subr.mxu0 0.0
    %1434 = vmatpush1.msra.mxu0 0.0
    %1435 = vmatprep.mubr.f32.mxu0 0.0
    %1436 = vmatmul.mubr.f32.gmra.mrb[0].mxu0 %v1370
    %v1437 = vpop.f32.mrb[0].mxu0
    %v1438 = vadd.f32 %v248, %v1437
    %v1439 = vpop.f32.mrb[0].mxu0
    %1440 = vdwg.mxu0
    %v1441 = vsel %vm652, %v1438, -inf
    %1442 = vmax.xlane.f32.xlu0 %v1441
    %v1443 = vpop.xlane.xlu0 %1442
    %v1444 = vsub.f32 %v1438, %v1443
    %v1445 = vmul.f32 %v1444, 1.442695
    %v1446 = vpow.pop %v1445
    %v1447 = vsel %vm652, %v1446, 0.0
    %1448 = vadd.xlane.f32.xlu0 %v1447
    %v1449 = vpop.xlane.xlu0 %1448
    %v1450 = vlog2.pop %v1449
    %v1451 = vmul.f32 %v1450, 0.6931472
    %v1452 = vsub.f32 %v1444, %v1451
    %1453 = vst [vmem:[#allocation12 + $0x2] sm:$0x1] %v1452
    %s1454 = sld [smem:[#allocation2 + $0x3]]
    %s1455 = scalar_lea.vmem [#allocation6], %s1454
    %v1456 = vld [vmem:[%s1455] sm:$0x1]
    %v1457 = vmax.f32 %v1456, 0.0
    %1458 = vmatprep.subr.mxu0 %v164
    %1459 = vmatpush1.msra.mxu0 %v163
    %1460 = vmatprep.subr.mxu0 %v168
    %1461 = vmatpush1.msra.mxu0 %v167
    %1462 = vmatprep.subr.mxu0 %v172
    %1463 = vmatpush1.msra.mxu0 %v171
    %1464 = vmatprep.subr.mxu0 %v176
    %1465 = vmatpush1.msra.mxu0 %v175
    %1466 = vmatprep.subr.mxu0 %v180
    %1467 = vmatpush1.msra.mxu0 %v179
    %1468 = vmatprep.subr.mxu0 %v184
    %1469 = vmatpush1.msra.mxu0 %v183
    %1470 = vmatprep.subr.mxu0 %v188
    %1471 = vmatpush1.msra.mxu0 %v187
    %1472 = vmatprep.subr.mxu0 %v192
    %1473 = vmatpush1.msra.mxu0 %v191
    %1474 = vmatprep.subr.mxu0 %v196
    %1475 = vmatpush1.msra.mxu0 %v195
    %1476 = vmatprep.subr.mxu0 %v200
    %1477 = vmatpush1.msra.mxu0 %v199
    %1478 = vmatprep.subr.mxu0 %v204
    %1479 = vmatpush1.msra.mxu0 %v203
    %1480 = vmatprep.subr.mxu0 %v208
    %1481 = vmatpush1.msra.mxu0 %v207
    %1482 = vmatprep.subr.mxu0 %v212
    %1483 = vmatpush1.msra.mxu0 %v211
    %1484 = vmatprep.subr.mxu0 %v216
    %1485 = vmatpush1.msra.mxu0 %v215
    %1486 = vmatprep.subr.mxu0 %v220
    %1487 = vmatpush1.msra.mxu0 %v219
    %1488 = vmatprep.subr.mxu0 %v224
    %1489 = vmatpush1.msra.mxu0 %v223
    %1490 = vmatprep.subr.mxu0 0.0
    %1491 = vmatpush1.msra.mxu0 0.0
    %1492 = vmatprep.subr.mxu0 0.0
    %1493 = vmatpush1.msra.mxu0 0.0
    %1494 = vmatprep.subr.mxu0 0.0
    %1495 = vmatpush1.msra.mxu0 0.0
    %1496 = vmatprep.subr.mxu0 0.0
    %1497 = vmatpush1.msra.mxu0 0.0
    %1498 = vmatprep.subr.mxu0 0.0
    %1499 = vmatpush1.msra.mxu0 0.0
    %1500 = vmatprep.subr.mxu0 0.0
    %1501 = vmatpush1.msra.mxu0 0.0
    %1502 = vmatprep.subr.mxu0 0.0
    %1503 = vmatpush1.msra.mxu0 0.0
    %1504 = vmatprep.subr.mxu0 0.0
    %1505 = vmatpush1.msra.mxu0 0.0
    %1506 = vmatprep.subr.mxu0 0.0
    %1507 = vmatpush1.msra.mxu0 0.0
    %1508 = vmatprep.subr.mxu0 0.0
    %1509 = vmatpush1.msra.mxu0 0.0
    %1510 = vmatprep.subr.mxu0 0.0
    %1511 = vmatpush1.msra.mxu0 0.0
    %1512 = vmatprep.subr.mxu0 0.0
    %1513 = vmatpush1.msra.mxu0 0.0
    %1514 = vmatprep.subr.mxu0 0.0
    %1515 = vmatpush1.msra.mxu0 0.0
    %1516 = vmatprep.subr.mxu0 0.0
    %1517 = vmatpush1.msra.mxu0 0.0
    %1518 = vmatprep.subr.mxu0 0.0
    %1519 = vmatpush1.msra.mxu0 0.0
    %1520 = vmatprep.subr.mxu0 0.0
    %1521 = vmatpush1.msra.mxu0 0.0
    %1522 = vmatprep.mubr.f32.mxu0 0.0
    %1523 = vmatmul.mubr.f32.gmra.mrb[0].mxu0 %v1370
    %v1524 = vpop.f32.mrb[0].mxu0
    %v1525 = vadd.f32 0.0, %v1524
    %v1526 = vpop.f32.mrb[0].mxu0
    %v1527 = vadd.f32 0.0, %v1526
    %1528 = vdwg.mxu0
    %1529 = vmatprep.subr.mxu0 %v166
    %1530 = vmatpush1.msra.mxu0 %v165
    %1531 = vmatprep.subr.mxu0 %v170
    %1532 = vmatpush1.msra.mxu0 %v169
    %1533 = vmatprep.subr.mxu0 %v174
    %1534 = vmatpush1.msra.mxu0 %v173
    %1535 = vmatprep.subr.mxu0 %v178
    %1536 = vmatpush1.msra.mxu0 %v177
    %1537 = vmatprep.subr.mxu0 %v182
    %1538 = vmatpush1.msra.mxu0 %v181
    %1539 = vmatprep.subr.mxu0 %v186
    %1540 = vmatpush1.msra.mxu0 %v185
    %1541 = vmatprep.subr.mxu0 %v190
    %1542 = vmatpush1.msra.mxu0 %v189
    %1543 = vmatprep.subr.mxu0 %v194
    %1544 = vmatpush1.msra.mxu0 %v193
    %1545 = vmatprep.subr.mxu0 %v198
    %1546 = vmatpush1.msra.mxu0 %v197
    %1547 = vmatprep.subr.mxu0 %v202
    %1548 = vmatpush1.msra.mxu0 %v201
    %1549 = vmatprep.subr.mxu0 %v206
    %1550 = vmatpush1.msra.mxu0 %v205
    %1551 = vmatprep.subr.mxu0 %v210
    %1552 = vmatpush1.msra.mxu0 %v209
    %1553 = vmatprep.subr.mxu0 %v214
    %1554 = vmatpush1.msra.mxu0 %v213
    %1555 = vmatprep.subr.mxu0 %v218
    %1556 = vmatpush1.msra.mxu0 %v217
    %1557 = vmatprep.subr.mxu0 %v222
    %1558 = vmatpush1.msra.mxu0 %v221
    %1559 = vmatprep.subr.mxu0 %v226
    %1560 = vmatpush1.msra.mxu0 %v225
    %1561 = vmatprep.subr.mxu0 0.0
    %1562 = vmatpush1.msra.mxu0 0.0
    %1563 = vmatprep.subr.mxu0 0.0
    %1564 = vmatpush1.msra.mxu0 0.0
    %1565 = vmatprep.subr.mxu0 0.0
    %1566 = vmatpush1.msra.mxu0 0.0
    %1567 = vmatprep.subr.mxu0 0.0
    %1568 = vmatpush1.msra.mxu0 0.0
    %1569 = vmatprep.subr.mxu0 0.0
    %1570 = vmatpush1.msra.mxu0 0.0
    %1571 = vmatprep.subr.mxu0 0.0
    %1572 = vmatpush1.msra.mxu0 0.0
    %1573 = vmatprep.subr.mxu0 0.0
    %1574 = vmatpush1.msra.mxu0 0.0
    %1575 = vmatprep.subr.mxu0 0.0
    %1576 = vmatpush1.msra.mxu0 0.0
    %1577 = vmatprep.subr.mxu0 0.0
    %1578 = vmatpush1.msra.mxu0 0.0
    %1579 = vmatprep.subr.mxu0 0.0
    %1580 = vmatpush1.msra.mxu0 0.0
    %1581 = vmatprep.subr.mxu0 0.0
    %1582 = vmatpush1.msra.mxu0 0.0
    %1583 = vmatprep.subr.mxu0 0.0
    %1584 = vmatpush1.msra.mxu0 0.0
    %1585 = vmatprep.subr.mxu0 0.0
    %1586 = vmatpush1.msra.mxu0 0.0
    %1587 = vmatprep.subr.mxu0 0.0
    %1588 = vmatpush1.msra.mxu0 0.0
    %1589 = vmatprep.subr.mxu0 0.0
    %1590 = vmatpush1.msra.mxu0 0.0
    %1591 = vmatprep.subr.mxu0 0.0
    %1592 = vmatpush1.msra.mxu0 0.0
    %1593 = vmatprep.mubr.f32.mxu0 0.0
    %1594 = vmatmul.mubr.f32.gmra.mrb[0].mxu0 %v1370
    %v1595 = vpop.f32.mrb[0].mxu0
    %v1596 = vadd.f32 0.0, %v1595
    %v1597 = vpop.f32.mrb[0].mxu0
    %v1598 = vadd.f32 0.0, %v1597
    %1599 = vdwg.mxu0
    %1600 = vmatprep.subr.mxu0 %v100
    %1601 = vmatpush1.msra.mxu0 %v99
    %1602 = vmatprep.subr.mxu0 %v104
    %1603 = vmatpush1.msra.mxu0 %v103
    %1604 = vmatprep.subr.mxu0 %v108
    %1605 = vmatpush1.msra.mxu0 %v107
    %1606 = vmatprep.subr.mxu0 %v112
    %1607 = vmatpush1.msra.mxu0 %v111
    %1608 = vmatprep.subr.mxu0 %v116
    %1609 = vmatpush1.msra.mxu0 %v115
    %1610 = vmatprep.subr.mxu0 %v120
    %1611 = vmatpush1.msra.mxu0 %v119
    %1612 = vmatprep.subr.mxu0 %v124
    %1613 = vmatpush1.msra.mxu0 %v123
    %1614 = vmatprep.subr.mxu0 %v128
    %1615 = vmatpush1.msra.mxu0 %v127
    %1616 = vmatprep.subr.mxu0 %v132
    %1617 = vmatpush1.msra.mxu0 %v131
    %1618 = vmatprep.subr.mxu0 %v136
    %1619 = vmatpush1.msra.mxu0 %v135
    %1620 = vmatprep.subr.mxu0 %v140
    %1621 = vmatpush1.msra.mxu0 %v139
    %1622 = vmatprep.subr.mxu0 %v144
    %1623 = vmatpush1.msra.mxu0 %v143
    %1624 = vmatprep.subr.mxu0 %v148
    %1625 = vmatpush1.msra.mxu0 %v147
    %1626 = vmatprep.subr.mxu0 %v152
    %1627 = vmatpush1.msra.mxu0 %v151
    %1628 = vmatprep.subr.mxu0 %v156
    %1629 = vmatpush1.msra.mxu0 %v155
    %1630 = vmatprep.subr.mxu0 %v160
    %1631 = vmatpush1.msra.mxu0 %v159
    %1632 = vmatprep.subr.mxu0 0.0
    %1633 = vmatpush1.msra.mxu0 0.0
    %1634 = vmatprep.subr.mxu0 0.0
    %1635 = vmatpush1.msra.mxu0 0.0
    %1636 = vmatprep.subr.mxu0 0.0
    %1637 = vmatpush1.msra.mxu0 0.0
    %1638 = vmatprep.subr.mxu0 0.0
    %1639 = vmatpush1.msra.mxu0 0.0
    %1640 = vmatprep.subr.mxu0 0.0
    %1641 = vmatpush1.msra.mxu0 0.0
    %1642 = vmatprep.subr.mxu0 0.0
    %1643 = vmatpush1.msra.mxu0 0.0
    %1644 = vmatprep.subr.mxu0 0.0
    %1645 = vmatpush1.msra.mxu0 0.0
    %1646 = vmatprep.subr.mxu0 0.0
    %1647 = vmatpush1.msra.mxu0 0.0
    %1648 = vmatprep.subr.mxu0 0.0
    %1649 = vmatpush1.msra.mxu0 0.0
    %1650 = vmatprep.subr.mxu0 0.0
    %1651 = vmatpush1.msra.mxu0 0.0
    %1652 = vmatprep.subr.mxu0 0.0
    %1653 = vmatpush1.msra.mxu0 0.0
    %1654 = vmatprep.subr.mxu0 0.0
    %1655 = vmatpush1.msra.mxu0 0.0
    %1656 = vmatprep.subr.mxu0 0.0
    %1657 = vmatpush1.msra.mxu0 0.0
    %1658 = vmatprep.subr.mxu0 0.0
    %1659 = vmatpush1.msra.mxu0 0.0
    %1660 = vmatprep.subr.mxu0 0.0
    %1661 = vmatpush1.msra.mxu0 0.0
    %1662 = vmatprep.subr.mxu0 0.0
    %1663 = vmatpush1.msra.mxu0 0.0
    %1664 = vmatprep.mubr.f32.mxu0 0.0
    %1665 = vmatmul.mubr.f32.gmra.mrb[0].mxu0 %v1457
    %v1666 = vpop.f32.mrb[0].mxu0
    %v1667 = vadd.f32 %v1525, %v1666
    %v1668 = vpop.f32.mrb[0].mxu0
    %v1669 = vadd.f32 %v1527, %v1668
    %1670 = vdwg.mxu0
    %1671 = vmatprep.subr.mxu0 %v102
    %1672 = vmatpush1.msra.mxu0 %v101
    %1673 = vmatprep.subr.mxu0 %v106
    %1674 = vmatpush1.msra.mxu0 %v105
    %1675 = vmatprep.subr.mxu0 %v110
    %1676 = vmatpush1.msra.mxu0 %v109
    %1677 = vmatprep.subr.mxu0 %v114
    %1678 = vmatpush1.msra.mxu0 %v113
    %1679 = vmatprep.subr.mxu0 %v118
    %1680 = vmatpush1.msra.mxu0 %v117
    %1681 = vmatprep.subr.mxu0 %v122
    %1682 = vmatpush1.msra.mxu0 %v121
    %1683 = vmatprep.subr.mxu0 %v126
    %1684 = vmatpush1.msra.mxu0 %v125
    %1685 = vmatprep.subr.mxu0 %v130
    %1686 = vmatpush1.msra.mxu0 %v129
    %1687 = vmatprep.subr.mxu0 %v134
    %1688 = vmatpush1.msra.mxu0 %v133
    %1689 = vmatprep.subr.mxu0 %v138
    %1690 = vmatpush1.msra.mxu0 %v137
    %1691 = vmatprep.subr.mxu0 %v142
    %1692 = vmatpush1.msra.mxu0 %v141
    %1693 = vmatprep.subr.mxu0 %v146
    %1694 = vmatpush1.msra.mxu0 %v145
    %1695 = vmatprep.subr.mxu0 %v150
    %1696 = vmatpush1.msra.mxu0 %v149
    %1697 = vmatprep.subr.mxu0 %v154
    %1698 = vmatpush1.msra.mxu0 %v153
    %1699 = vmatprep.subr.mxu0 %v158
    %1700 = vmatpush1.msra.mxu0 %v157
    %1701 = vmatprep.subr.mxu0 %v162
    %1702 = vmatpush1.msra.mxu0 %v161
    %1703 = vmatprep.subr.mxu0 0.0
    %1704 = vmatpush1.msra.mxu0 0.0
    %1705 = vmatprep.subr.mxu0 0.0
    %1706 = vmatpush1.msra.mxu0 0.0
    %1707 = vmatprep.subr.mxu0 0.0
    %1708 = vmatpush1.msra.mxu0 0.0
    %1709 = vmatprep.subr.mxu0 0.0
    %1710 = vmatpush1.msra.mxu0 0.0
    %1711 = vmatprep.subr.mxu0 0.0
    %1712 = vmatpush1.msra.mxu0 0.0
    %1713 = vmatprep.subr.mxu0 0.0
    %1714 = vmatpush1.msra.mxu0 0.0
    %1715 = vmatprep.subr.mxu0 0.0
    %1716 = vmatpush1.msra.mxu0 0.0
    %1717 = vmatprep.subr.mxu0 0.0
    %1718 = vmatpush1.msra.mxu0 0.0
    %1719 = vmatprep.subr.mxu0 0.0
    %1720 = vmatpush1.msra.mxu0 0.0
    %1721 = vmatprep.subr.mxu0 0.0
    %1722 = vmatpush1.msra.mxu0 0.0
    %1723 = vmatprep.subr.mxu0 0.0
    %1724 = vmatpush1.msra.mxu0 0.0
    %1725 = vmatprep.subr.mxu0 0.0
    %1726 = vmatpush1.msra.mxu0 0.0
    %1727 = vmatprep.subr.mxu0 0.0
    %1728 = vmatpush1.msra.mxu0 0.0
    %1729 = vmatprep.subr.mxu0 0.0
    %1730 = vmatpush1.msra.mxu0 0.0
    %1731 = vmatprep.subr.mxu0 0.0
    %1732 = vmatpush1.msra.mxu0 0.0
    %1733 = vmatprep.subr.mxu0 0.0
    %1734 = vmatpush1.msra.mxu0 0.0
    %1735 = vmatprep.mubr.f32.mxu0 0.0
    %1736 = vmatmul.mubr.f32.gmra.mrb[0].mxu0 %v1457
    %v1737 = vpop.f32.mrb[0].mxu0
    %v1738 = vadd.f32 %v1596, %v1737
    %v1739 = vpop.f32.mrb[0].mxu0
    %v1740 = vadd.f32 %v1598, %v1739
    %1741 = vdwg.mxu0
    %v1742 = vadd.f32 %v1667, %v542
    %v1743 = vadd.f32 %v1669, %v546
    %v1744 = vadd.f32 %v1738, %v550
    %v1745 = vadd.f32 %v1740, %v554
    %v1746 = vxor.u32 %v1742, 2147483648
    %v1747 = vmul.f32 %v1746, 1.442695
    %v1748 = vpow.pop %v1747
    %v1749 = vadd.f32 %v1748, 1.0
    %v1750 = vrcp.pop %v1749
    %v1751 = vmul.f32 1.0, %v1750
    %v1752 = vxor.u32 %v1743, 2147483648
    %v1753 = vmul.f32 %v1752, 1.442695
    %v1754 = vpow.pop %v1753
    %v1755 = vadd.f32 %v1754, 1.0
    %v1756 = vrcp.pop %v1755
    %v1757 = vmul.f32 1.0, %v1756
    %v1758 = vmul.f32 %v1751, %v1745
    %v1759 = vadd.f32 %v1744, %v1758
    %v1760 = vtanh.pop %v1759
    %v1761 = vsub.f32 1.0, %v1757
    %v1762 = vmul.f32 %v1761, %v1760
    %v1763 = vmul.f32 %v1757, %v1370
    %v1764 = vadd.f32 %v1762, %v1763
    %1765 = vmatprep.subr.mxu0 0.0
    %1766 = vmatpush1.msra.mxu0 %v228
    %1767 = vmatprep.subr.mxu0 0.0
    %1768 = vmatpush1.msra.mxu0 %v229
    %1769 = vmatprep.subr.mxu0 0.0
    %1770 = vmatpush1.msra.mxu0 %v230
    %1771 = vmatprep.subr.mxu0 0.0
    %1772 = vmatpush1.msra.mxu0 %v231
    %1773 = vmatprep.subr.mxu0 0.0
    %1774 = vmatpush1.msra.mxu0 %v232
    %1775 = vmatprep.subr.mxu0 0.0
    %1776 = vmatpush1.msra.mxu0 %v233
    %1777 = vmatprep.subr.mxu0 0.0
    %1778 = vmatpush1.msra.mxu0 %v234
    %1779 = vmatprep.subr.mxu0 0.0
    %1780 = vmatpush1.msra.mxu0 %v235
    %1781 = vmatprep.subr.mxu0 0.0
    %1782 = vmatpush1.msra.mxu0 %v236
    %1783 = vmatprep.subr.mxu0 0.0
    %1784 = vmatpush1.msra.mxu0 %v237
    %1785 = vmatprep.subr.mxu0 0.0
    %1786 = vmatpush1.msra.mxu0 %v238
    %1787 = vmatprep.subr.mxu0 0.0
    %1788 = vmatpush1.msra.mxu0 %v239
    %1789 = vmatprep.subr.mxu0 0.0
    %1790 = vmatpush1.msra.mxu0 %v240
    %1791 = vmatprep.subr.mxu0 0.0
    %1792 = vmatpush1.msra.mxu0 %v241
    %1793 = vmatprep.subr.mxu0 0.0
    %1794 = vmatpush1.msra.mxu0 %v242
    %1795 = vmatprep.subr.mxu0 0.0
    %1796 = vmatpush1.msra.mxu0 %v243
    %1797 = vmatprep.subr.mxu0 0.0
    %1798 = vmatpush1.msra.mxu0 0.0
    %1799 = vmatprep.subr.mxu0 0.0
    %1800 = vmatpush1.msra.mxu0 0.0
    %1801 = vmatprep.subr.mxu0 0.0
    %1802 = vmatpush1.msra.mxu0 0.0
    %1803 = vmatprep.subr.mxu0 0.0
    %1804 = vmatpush1.msra.mxu0 0.0
    %1805 = vmatprep.subr.mxu0 0.0
    %1806 = vmatpush1.msra.mxu0 0.0
    %1807 = vmatprep.subr.mxu0 0.0
    %1808 = vmatpush1.msra.mxu0 0.0
    %1809 = vmatprep.subr.mxu0 0.0
    %1810 = vmatpush1.msra.mxu0 0.0
    %1811 = vmatprep.subr.mxu0 0.0
    %1812 = vmatpush1.msra.mxu0 0.0
    %1813 = vmatprep.subr.mxu0 0.0
    %1814 = vmatpush1.msra.mxu0 0.0
    %1815 = vmatprep.subr.mxu0 0.0
    %1816 = vmatpush1.msra.mxu0 0.0
    %1817 = vmatprep.subr.mxu0 0.0
    %1818 = vmatpush1.msra.mxu0 0.0
    %1819 = vmatprep.subr.mxu0 0.0
    %1820 = vmatpush1.msra.mxu0 0.0
    %1821 = vmatprep.subr.mxu0 0.0
    %1822 = vmatpush1.msra.mxu0 0.0
    %1823 = vmatprep.subr.mxu0 0.0
    %1824 = vmatpush1.msra.mxu0 0.0
    %1825 = vmatprep.subr.mxu0 0.0
    %1826 = vmatpush1.msra.mxu0 0.0
    %1827 = vmatprep.subr.mxu0 0.0
    %1828 = vmatpush1.msra.mxu0 0.0
    %1829 = vmatprep.mubr.f32.mxu0 0.0
    %1830 = vmatmul.mubr.f32.gmra.mrb[0].mxu0 %v1764
    %v1831 = vpop.f32.mrb[0].mxu0
    %v1832 = vadd.f32 %v248, %v1831
    %v1833 = vpop.f32.mrb[0].mxu0
    %1834 = vdwg.mxu0
    %v1835 = vsel %vm652, %v1832, -inf
    %1836 = vmax.xlane.f32.xlu0 %v1835
    %v1837 = vpop.xlane.xlu0 %1836
    %v1838 = vsub.f32 %v1832, %v1837
    %v1839 = vmul.f32 %v1838, 1.442695
    %v1840 = vpow.pop %v1839
    %v1841 = vsel %vm652, %v1840, 0.0
    %1842 = vadd.xlane.f32.xlu0 %v1841
    %v1843 = vpop.xlane.xlu0 %1842
    %v1844 = vlog2.pop %v1843
    %v1845 = vmul.f32 %v1844, 0.6931472
    %v1846 = vsub.f32 %v1838, %v1845
    %1847 = vst [vmem:[#allocation12 + $0x3] sm:$0x1] %v1846
    %s1848 = sld [smem:[#allocation2 + $0x4]]
    %s1849 = scalar_lea.vmem [#allocation6], %s1848
    %v1850 = vld [vmem:[%s1849] sm:$0x1]
    %v1851 = vmax.f32 %v1850, 0.0
    %1852 = vmatprep.subr.mxu0 %v164
    %1853 = vmatpush1.msra.mxu0 %v163
    %1854 = vmatprep.subr.mxu0 %v168
    %1855 = vmatpush1.msra.mxu0 %v167
    %1856 = vmatprep.subr.mxu0 %v172
    %1857 = vmatpush1.msra.mxu0 %v171
    %1858 = vmatprep.subr.mxu0 %v176
    %1859 = vmatpush1.msra.mxu0 %v175
    %1860 = vmatprep.subr.mxu0 %v180
    %1861 = vmatpush1.msra.mxu0 %v179
    %1862 = vmatprep.subr.mxu0 %v184
    %1863 = vmatpush1.msra.mxu0 %v183
    %1864 = vmatprep.subr.mxu0 %v188
    %1865 = vmatpush1.msra.mxu0 %v187
    %1866 = vmatprep.subr.mxu0 %v192
    %1867 = vmatpush1.msra.mxu0 %v191
    %1868 = vmatprep.subr.mxu0 %v196
    %1869 = vmatpush1.msra.mxu0 %v195
    %1870 = vmatprep.subr.mxu0 %v200
    %1871 = vmatpush1.msra.mxu0 %v199
    %1872 = vmatprep.subr.mxu0 %v204
    %1873 = vmatpush1.msra.mxu0 %v203
    %1874 = vmatprep.subr.mxu0 %v208
    %1875 = vmatpush1.msra.mxu0 %v207
    %1876 = vmatprep.subr.mxu0 %v212
    %1877 = vmatpush1.msra.mxu0 %v211
    %1878 = vmatprep.subr.mxu0 %v216
    %1879 = vmatpush1.msra.mxu0 %v215
    %1880 = vmatprep.subr.mxu0 %v220
    %1881 = vmatpush1.msra.mxu0 %v219
    %1882 = vmatprep.subr.mxu0 %v224
    %1883 = vmatpush1.msra.mxu0 %v223
    %1884 = vmatprep.subr.mxu0 0.0
    %1885 = vmatpush1.msra.mxu0 0.0
    %1886 = vmatprep.subr.mxu0 0.0
    %1887 = vmatpush1.msra.mxu0 0.0
    %1888 = vmatprep.subr.mxu0 0.0
    %1889 = vmatpush1.msra.mxu0 0.0
    %1890 = vmatprep.subr.mxu0 0.0
    %1891 = vmatpush1.msra.mxu0 0.0
    %1892 = vmatprep.subr.mxu0 0.0
    %1893 = vmatpush1.msra.mxu0 0.0
    %1894 = vmatprep.subr.mxu0 0.0
    %1895 = vmatpush1.msra.mxu0 0.0
    %1896 = vmatprep.subr.mxu0 0.0
    %1897 = vmatpush1.msra.mxu0 0.0
    %1898 = vmatprep.subr.mxu0 0.0
    %1899 = vmatpush1.msra.mxu0 0.0
    %1900 = vmatprep.subr.mxu0 0.0
    %1901 = vmatpush1.msra.mxu0 0.0
    %1902 = vmatprep.subr.mxu0 0.0
    %1903 = vmatpush1.msra.mxu0 0.0
    %1904 = vmatprep.subr.mxu0 0.0
    %1905 = vmatpush1.msra.mxu0 0.0
    %1906 = vmatprep.subr.mxu0 0.0
    %1907 = vmatpush1.msra.mxu0 0.0
    %1908 = vmatprep.subr.mxu0 0.0
    %1909 = vmatpush1.msra.mxu0 0.0
    %1910 = vmatprep.subr.mxu0 0.0
    %1911 = vmatpush1.msra.mxu0 0.0
    %1912 = vmatprep.subr.mxu0 0.0
    %1913 = vmatpush1.msra.mxu0 0.0
    %1914 = vmatprep.subr.mxu0 0.0
    %1915 = vmatpush1.msra.mxu0 0.0
    %1916 = vmatprep.mubr.f32.mxu0 0.0
    %1917 = vmatmul.mubr.f32.gmra.mrb[0].mxu0 %v1764
    %v1918 = vpop.f32.mrb[0].mxu0
    %v1919 = vadd.f32 0.0, %v1918
    %v1920 = vpop.f32.mrb[0].mxu0
    %v1921 = vadd.f32 0.0, %v1920
    %1922 = vdwg.mxu0
    %1923 = vmatprep.subr.mxu0 %v166
    %1924 = vmatpush1.msra.mxu0 %v165
    %1925 = vmatprep.subr.mxu0 %v170
    %1926 = vmatpush1.msra.mxu0 %v169
    %1927 = vmatprep.subr.mxu0 %v174
    %1928 = vmatpush1.msra.mxu0 %v173
    %1929 = vmatprep.subr.mxu0 %v178
    %1930 = vmatpush1.msra.mxu0 %v177
    %1931 = vmatprep.subr.mxu0 %v182
    %1932 = vmatpush1.msra.mxu0 %v181
    %1933 = vmatprep.subr.mxu0 %v186
    %1934 = vmatpush1.msra.mxu0 %v185
    %1935 = vmatprep.subr.mxu0 %v190
    %1936 = vmatpush1.msra.mxu0 %v189
    %1937 = vmatprep.subr.mxu0 %v194
    %1938 = vmatpush1.msra.mxu0 %v193
    %1939 = vmatprep.subr.mxu0 %v198
    %1940 = vmatpush1.msra.mxu0 %v197
    %1941 = vmatprep.subr.mxu0 %v202
    %1942 = vmatpush1.msra.mxu0 %v201
    %1943 = vmatprep.subr.mxu0 %v206
    %1944 = vmatpush1.msra.mxu0 %v205
    %1945 = vmatprep.subr.mxu0 %v210
    %1946 = vmatpush1.msra.mxu0 %v209
    %1947 = vmatprep.subr.mxu0 %v214
    %1948 = vmatpush1.msra.mxu0 %v213
    %1949 = vmatprep.subr.mxu0 %v218
    %1950 = vmatpush1.msra.mxu0 %v217
    %1951 = vmatprep.subr.mxu0 %v222
    %1952 = vmatpush1.msra.mxu0 %v221
    %1953 = vmatprep.subr.mxu0 %v226
    %1954 = vmatpush1.msra.mxu0 %v225
    %1955 = vmatprep.subr.mxu0 0.0
    %1956 = vmatpush1.msra.mxu0 0.0
    %1957 = vmatprep.subr.mxu0 0.0
    %1958 = vmatpush1.msra.mxu0 0.0
    %1959 = vmatprep.subr.mxu0 0.0
    %1960 = vmatpush1.msra.mxu0 0.0
    %1961 = vmatprep.subr.mxu0 0.0
    %1962 = vmatpush1.msra.mxu0 0.0
    %1963 = vmatprep.subr.mxu0 0.0
    %1964 = vmatpush1.msra.mxu0 0.0
    %1965 = vmatprep.subr.mxu0 0.0
    %1966 = vmatpush1.msra.mxu0 0.0
    %1967 = vmatprep.subr.mxu0 0.0
    %1968 = vmatpush1.msra.mxu0 0.0
    %1969 = vmatprep.subr.mxu0 0.0
    %1970 = vmatpush1.msra.mxu0 0.0
    %1971 = vmatprep.subr.mxu0 0.0
    %1972 = vmatpush1.msra.mxu0 0.0
    %1973 = vmatprep.subr.mxu0 0.0
    %1974 = vmatpush1.msra.mxu0 0.0
    %1975 = vmatprep.subr.mxu0 0.0
    %1976 = vmatpush1.msra.mxu0 0.0
    %1977 = vmatprep.subr.mxu0 0.0
    %1978 = vmatpush1.msra.mxu0 0.0
    %1979 = vmatprep.subr.mxu0 0.0
    %1980 = vmatpush1.msra.mxu0 0.0
    %1981 = vmatprep.subr.mxu0 0.0
    %1982 = vmatpush1.msra.mxu0 0.0
    %1983 = vmatprep.subr.mxu0 0.0
    %1984 = vmatpush1.msra.mxu0 0.0
    %1985 = vmatprep.subr.mxu0 0.0
    %1986 = vmatpush1.msra.mxu0 0.0
    %1987 = vmatprep.mubr.f32.mxu0 0.0
    %1988 = vmatmul.mubr.f32.gmra.mrb[0].mxu0 %v1764
    %v1989 = vpop.f32.mrb[0].mxu0
    %v1990 = vadd.f32 0.0, %v1989
    %v1991 = vpop.f32.mrb[0].mxu0
    %v1992 = vadd.f32 0.0, %v1991
    %1993 = vdwg.mxu0
    %1994 = vmatprep.subr.mxu0 %v100
    %1995 = vmatpush1.msra.mxu0 %v99
    %1996 = vmatprep.subr.mxu0 %v104
    %1997 = vmatpush1.msra.mxu0 %v103
    %1998 = vmatprep.subr.mxu0 %v108
    %1999 = vmatpush1.msra.mxu0 %v107
    %2000 = vmatprep.subr.mxu0 %v112
    %2001 = vmatpush1.msra.mxu0 %v111
    %2002 = vmatprep.subr.mxu0 %v116
    %2003 = vmatpush1.msra.mxu0 %v115
    %2004 = vmatprep.subr.mxu0 %v120
    %2005 = vmatpush1.msra.mxu0 %v119
    %2006 = vmatprep.subr.mxu0 %v124
    %2007 = vmatpush1.msra.mxu0 %v123
    %2008 = vmatprep.subr.mxu0 %v128
    %2009 = vmatpush1.msra.mxu0 %v127
    %2010 = vmatprep.subr.mxu0 %v132
    %2011 = vmatpush1.msra.mxu0 %v131
    %2012 = vmatprep.subr.mxu0 %v136
    %2013 = vmatpush1.msra.mxu0 %v135
    %2014 = vmatprep.subr.mxu0 %v140
    %2015 = vmatpush1.msra.mxu0 %v139
    %2016 = vmatprep.subr.mxu0 %v144
    %2017 = vmatpush1.msra.mxu0 %v143
    %2018 = vmatprep.subr.mxu0 %v148
    %2019 = vmatpush1.msra.mxu0 %v147
    %2020 = vmatprep.subr.mxu0 %v152
    %2021 = vmatpush1.msra.mxu0 %v151
    %2022 = vmatprep.subr.mxu0 %v156
    %2023 = vmatpush1.msra.mxu0 %v155
    %2024 = vmatprep.subr.mxu0 %v160
    %2025 = vmatpush1.msra.mxu0 %v159
    %2026 = vmatprep.subr.mxu0 0.0
    %2027 = vmatpush1.msra.mxu0 0.0
    %2028 = vmatprep.subr.mxu0 0.0
    %2029 = vmatpush1.msra.mxu0 0.0
    %2030 = vmatprep.subr.mxu0 0.0
    %2031 = vmatpush1.msra.mxu0 0.0
    %2032 = vmatprep.subr.mxu0 0.0
    %2033 = vmatpush1.msra.mxu0 0.0
    %2034 = vmatprep.subr.mxu0 0.0
    %2035 = vmatpush1.msra.mxu0 0.0
    %2036 = vmatprep.subr.mxu0 0.0
    %2037 = vmatpush1.msra.mxu0 0.0
    %2038 = vmatprep.subr.mxu0 0.0
    %2039 = vmatpush1.msra.mxu0 0.0
    %2040 = vmatprep.subr.mxu0 0.0
    %2041 = vmatpush1.msra.mxu0 0.0
    %2042 = vmatprep.subr.mxu0 0.0
    %2043 = vmatpush1.msra.mxu0 0.0
    %2044 = vmatprep.subr.mxu0 0.0
    %2045 = vmatpush1.msra.mxu0 0.0
    %2046 = vmatprep.subr.mxu0 0.0
    %2047 = vmatpush1.msra.mxu0 0.0
    %2048 = vmatprep.subr.mxu0 0.0
    %2049 = vmatpush1.msra.mxu0 0.0
    %2050 = vmatprep.subr.mxu0 0.0
    %2051 = vmatpush1.msra.mxu0 0.0
    %2052 = vmatprep.subr.mxu0 0.0
    %2053 = vmatpush1.msra.mxu0 0.0
    %2054 = vmatprep.subr.mxu0 0.0
    %2055 = vmatpush1.msra.mxu0 0.0
    %2056 = vmatprep.subr.mxu0 0.0
    %2057 = vmatpush1.msra.mxu0 0.0
    %2058 = vmatprep.mubr.f32.mxu0 0.0
    %2059 = vmatmul.mubr.f32.gmra.mrb[0].mxu0 %v1851
    %v2060 = vpop.f32.mrb[0].mxu0
    %v2061 = vadd.f32 %v1919, %v2060
    %v2062 = vpop.f32.mrb[0].mxu0
    %v2063 = vadd.f32 %v1921, %v2062
    %2064 = vdwg.mxu0
    %2065 = vmatprep.subr.mxu0 %v102
    %2066 = vmatpush1.msra.mxu0 %v101
    %2067 = vmatprep.subr.mxu0 %v106
    %2068 = vmatpush1.msra.mxu0 %v105
    %2069 = vmatprep.subr.mxu0 %v110
    %2070 = vmatpush1.msra.mxu0 %v109
    %2071 = vmatprep.subr.mxu0 %v114
    %2072 = vmatpush1.msra.mxu0 %v113
    %2073 = vmatprep.subr.mxu0 %v118
    %2074 = vmatpush1.msra.mxu0 %v117
    %2075 = vmatprep.subr.mxu0 %v122
    %2076 = vmatpush1.msra.mxu0 %v121
    %2077 = vmatprep.subr.mxu0 %v126
    %2078 = vmatpush1.msra.mxu0 %v125
    %2079 = vmatprep.subr.mxu0 %v130
    %2080 = vmatpush1.msra.mxu0 %v129
    %2081 = vmatprep.subr.mxu0 %v134
    %2082 = vmatpush1.msra.mxu0 %v133
    %2083 = vmatprep.subr.mxu0 %v138
    %2084 = vmatpush1.msra.mxu0 %v137
    %2085 = vmatprep.subr.mxu0 %v142
    %2086 = vmatpush1.msra.mxu0 %v141
    %2087 = vmatprep.subr.mxu0 %v146
    %2088 = vmatpush1.msra.mxu0 %v145
    %2089 = vmatprep.subr.mxu0 %v150
    %2090 = vmatpush1.msra.mxu0 %v149
    %2091 = vmatprep.subr.mxu0 %v154
    %2092 = vmatpush1.msra.mxu0 %v153
    %2093 = vmatprep.subr.mxu0 %v158
    %2094 = vmatpush1.msra.mxu0 %v157
    %2095 = vmatprep.subr.mxu0 %v162
    %2096 = vmatpush1.msra.mxu0 %v161
    %2097 = vmatprep.subr.mxu0 0.0
    %2098 = vmatpush1.msra.mxu0 0.0
    %2099 = vmatprep.subr.mxu0 0.0
    %2100 = vmatpush1.msra.mxu0 0.0
    %2101 = vmatprep.subr.mxu0 0.0
    %2102 = vmatpush1.msra.mxu0 0.0
    %2103 = vmatprep.subr.mxu0 0.0
    %2104 = vmatpush1.msra.mxu0 0.0
    %2105 = vmatprep.subr.mxu0 0.0
    %2106 = vmatpush1.msra.mxu0 0.0
    %2107 = vmatprep.subr.mxu0 0.0
    %2108 = vmatpush1.msra.mxu0 0.0
    %2109 = vmatprep.subr.mxu0 0.0
    %2110 = vmatpush1.msra.mxu0 0.0
    %2111 = vmatprep.subr.mxu0 0.0
    %2112 = vmatpush1.msra.mxu0 0.0
    %2113 = vmatprep.subr.mxu0 0.0
    %2114 = vmatpush1.msra.mxu0 0.0
    %2115 = vmatprep.subr.mxu0 0.0
    %2116 = vmatpush1.msra.mxu0 0.0
    %2117 = vmatprep.subr.mxu0 0.0
    %2118 = vmatpush1.msra.mxu0 0.0
    %2119 = vmatprep.subr.mxu0 0.0
    %2120 = vmatpush1.msra.mxu0 0.0
    %2121 = vmatprep.subr.mxu0 0.0
    %2122 = vmatpush1.msra.mxu0 0.0
    %2123 = vmatprep.subr.mxu0 0.0
    %2124 = vmatpush1.msra.mxu0 0.0
    %2125 = vmatprep.subr.mxu0 0.0
    %2126 = vmatpush1.msra.mxu0 0.0
    %2127 = vmatprep.subr.mxu0 0.0
    %2128 = vmatpush1.msra.mxu0 0.0
    %2129 = vmatprep.mubr.f32.mxu0 0.0
    %2130 = vmatmul.mubr.f32.gmra.mrb[0].mxu0 %v1851
    %v2131 = vpop.f32.mrb[0].mxu0
    %v2132 = vadd.f32 %v1990, %v2131
    %v2133 = vpop.f32.mrb[0].mxu0
    %v2134 = vadd.f32 %v1992, %v2133
    %2135 = vdwg.mxu0
    %v2136 = vadd.f32 %v2061, %v542
    %v2137 = vadd.f32 %v2063, %v546
    %v2138 = vadd.f32 %v2132, %v550
    %v2139 = vadd.f32 %v2134, %v554
    %v2140 = vxor.u32 %v2136, 2147483648
    %v2141 = vmul.f32 %v2140, 1.442695
    %v2142 = vpow.pop %v2141
    %v2143 = vadd.f32 %v2142, 1.0
    %v2144 = vrcp.pop %v2143
    %v2145 = vmul.f32 1.0, %v2144
    %v2146 = vxor.u32 %v2137, 2147483648
    %v2147 = vmul.f32 %v2146, 1.442695
    %v2148 = vpow.pop %v2147
    %v2149 = vadd.f32 %v2148, 1.0
    %v2150 = vrcp.pop %v2149
    %v2151 = vmul.f32 1.0, %v2150
    %v2152 = vmul.f32 %v2145, %v2139
    %v2153 = vadd.f32 %v2138, %v2152
    %v2154 = vtanh.pop %v2153
    %v2155 = vsub.f32 1.0, %v2151
    %v2156 = vmul.f32 %v2155, %v2154
    %v2157 = vmul.f32 %v2151, %v1764
    %v2158 = vadd.f32 %v2156, %v2157
    %2159 = vmatprep.subr.mxu0 0.0
    %2160 = vmatpush1.msra.mxu0 %v228
    %2161 = vmatprep.subr.mxu0 0.0
    %2162 = vmatpush1.msra.mxu0 %v229
    %2163 = vmatprep.subr.mxu0 0.0
    %2164 = vmatpush1.msra.mxu0 %v230
    %2165 = vmatprep.subr.mxu0 0.0
    %2166 = vmatpush1.msra.mxu0 %v231
    %2167 = vmatprep.subr.mxu0 0.0
    %2168 = vmatpush1.msra.mxu0 %v232
    %2169 = vmatprep.subr.mxu0 0.0
    %2170 = vmatpush1.msra.mxu0 %v233
    %2171 = vmatprep.subr.mxu0 0.0
    %2172 = vmatpush1.msra.mxu0 %v234
    %2173 = vmatprep.subr.mxu0 0.0
    %2174 = vmatpush1.msra.mxu0 %v235
    %2175 = vmatprep.subr.mxu0 0.0
    %2176 = vmatpush1.msra.mxu0 %v236
    %2177 = vmatprep.subr.mxu0 0.0
    %2178 = vmatpush1.msra.mxu0 %v237
    %2179 = vmatprep.subr.mxu0 0.0
    %2180 = vmatpush1.msra.mxu0 %v238
    %2181 = vmatprep.subr.mxu0 0.0
    %2182 = vmatpush1.msra.mxu0 %v239
    %2183 = vmatprep.subr.mxu0 0.0
    %2184 = vmatpush1.msra.mxu0 %v240
    %2185 = vmatprep.subr.mxu0 0.0
    %2186 = vmatpush1.msra.mxu0 %v241
    %2187 = vmatprep.subr.mxu0 0.0
    %2188 = vmatpush1.msra.mxu0 %v242
    %2189 = vmatprep.subr.mxu0 0.0
    %2190 = vmatpush1.msra.mxu0 %v243
    %2191 = vmatprep.subr.mxu0 0.0
    %2192 = vmatpush1.msra.mxu0 0.0
    %2193 = vmatprep.subr.mxu0 0.0
    %2194 = vmatpush1.msra.mxu0 0.0
    %2195 = vmatprep.subr.mxu0 0.0
    %2196 = vmatpush1.msra.mxu0 0.0
    %2197 = vmatprep.subr.mxu0 0.0
    %2198 = vmatpush1.msra.mxu0 0.0
    %2199 = vmatprep.subr.mxu0 0.0
    %2200 = vmatpush1.msra.mxu0 0.0
    %2201 = vmatprep.subr.mxu0 0.0
    %2202 = vmatpush1.msra.mxu0 0.0
    %2203 = vmatprep.subr.mxu0 0.0
    %2204 = vmatpush1.msra.mxu0 0.0
    %2205 = vmatprep.subr.mxu0 0.0
    %2206 = vmatpush1.msra.mxu0 0.0
    %2207 = vmatprep.subr.mxu0 0.0
    %2208 = vmatpush1.msra.mxu0 0.0
    %2209 = vmatprep.subr.mxu0 0.0
    %2210 = vmatpush1.msra.mxu0 0.0
    %2211 = vmatprep.subr.mxu0 0.0
    %2212 = vmatpush1.msra.mxu0 0.0
    %2213 = vmatprep.subr.mxu0 0.0
    %2214 = vmatpush1.msra.mxu0 0.0
    %2215 = vmatprep.subr.mxu0 0.0
    %2216 = vmatpush1.msra.mxu0 0.0
    %2217 = vmatprep.subr.mxu0 0.0
    %2218 = vmatpush1.msra.mxu0 0.0
    %2219 = vmatprep.subr.mxu0 0.0
    %2220 = vmatpush1.msra.mxu0 0.0
    %2221 = vmatprep.subr.mxu0 0.0
    %2222 = vmatpush1.msra.mxu0 0.0
    %2223 = vmatprep.mubr.f32.mxu0 0.0
    %2224 = vmatmul.mubr.f32.gmra.mrb[0].mxu0 %v2158
    %v2225 = vpop.f32.mrb[0].mxu0
    %v2226 = vadd.f32 %v248, %v2225
    %v2227 = vpop.f32.mrb[0].mxu0
    %2228 = vdwg.mxu0
    %v2229 = vsel %vm652, %v2226, -inf
    %2230 = vmax.xlane.f32.xlu0 %v2229
    %v2231 = vpop.xlane.xlu0 %2230
    %v2232 = vsub.f32 %v2226, %v2231
    %v2233 = vmul.f32 %v2232, 1.442695
    %v2234 = vpow.pop %v2233
    %v2235 = vsel %vm652, %v2234, 0.0
    %2236 = vadd.xlane.f32.xlu0 %v2235
    %v2237 = vpop.xlane.xlu0 %2236
    %v2238 = vlog2.pop %v2237
    %v2239 = vmul.f32 %v2238, 0.6931472
    %v2240 = vsub.f32 %v2232, %v2239
    %2241 = vst [vmem:[#allocation12 + $0x4] sm:$0x1] %v2240
    %s2242 = sld [smem:[#allocation2 + $0x5]]
    %s2243 = scalar_lea.vmem [#allocation6], %s2242
    %v2244 = vld [vmem:[%s2243] sm:$0x1]
    %v2245 = vmax.f32 %v2244, 0.0
    %2246 = vmatprep.subr.mxu0 %v164
    %2247 = vmatpush1.msra.mxu0 %v163
    %2248 = vmatprep.subr.mxu0 %v168
    %2249 = vmatpush1.msra.mxu0 %v167
    %2250 = vmatprep.subr.mxu0 %v172
    %2251 = vmatpush1.msra.mxu0 %v171
    %2252 = vmatprep.subr.mxu0 %v176
    %2253 = vmatpush1.msra.mxu0 %v175
    %2254 = vmatprep.subr.mxu0 %v180
    %2255 = vmatpush1.msra.mxu0 %v179
    %2256 = vmatprep.subr.mxu0 %v184
    %2257 = vmatpush1.msra.mxu0 %v183
    %2258 = vmatprep.subr.mxu0 %v188
    %2259 = vmatpush1.msra.mxu0 %v187
    %2260 = vmatprep.subr.mxu0 %v192
    %2261 = vmatpush1.msra.mxu0 %v191
    %2262 = vmatprep.subr.mxu0 %v196
    %2263 = vmatpush1.msra.mxu0 %v195
    %2264 = vmatprep.subr.mxu0 %v200
    %2265 = vmatpush1.msra.mxu0 %v199
    %2266 = vmatprep.subr.mxu0 %v204
    %2267 = vmatpush1.msra.mxu0 %v203
    %2268 = vmatprep.subr.mxu0 %v208
    %2269 = vmatpush1.msra.mxu0 %v207
    %2270 = vmatprep.subr.mxu0 %v212
    %2271 = vmatpush1.msra.mxu0 %v211
    %2272 = vmatprep.subr.mxu0 %v216
    %2273 = vmatpush1.msra.mxu0 %v215
    %2274 = vmatprep.subr.mxu0 %v220
    %2275 = vmatpush1.msra.mxu0 %v219
    %2276 = vmatprep.subr.mxu0 %v224
    %2277 = vmatpush1.msra.mxu0 %v223
    %2278 = vmatprep.subr.mxu0 0.0
    %2279 = vmatpush1.msra.mxu0 0.0
    %2280 = vmatprep.subr.mxu0 0.0
    %2281 = vmatpush1.msra.mxu0 0.0
    %2282 = vmatprep.subr.mxu0 0.0
    %2283 = vmatpush1.msra.mxu0 0.0
    %2284 = vmatprep.subr.mxu0 0.0
    %2285 = vmatpush1.msra.mxu0 0.0
    %2286 = vmatprep.subr.mxu0 0.0
    %2287 = vmatpush1.msra.mxu0 0.0
    %2288 = vmatprep.subr.mxu0 0.0
    %2289 = vmatpush1.msra.mxu0 0.0
    %2290 = vmatprep.subr.mxu0 0.0
    %2291 = vmatpush1.msra.mxu0 0.0
    %2292 = vmatprep.subr.mxu0 0.0
    %2293 = vmatpush1.msra.mxu0 0.0
    %2294 = vmatprep.subr.mxu0 0.0
    %2295 = vmatpush1.msra.mxu0 0.0
    %2296 = vmatprep.subr.mxu0 0.0
    %2297 = vmatpush1.msra.mxu0 0.0
    %2298 = vmatprep.subr.mxu0 0.0
    %2299 = vmatpush1.msra.mxu0 0.0
    %2300 = vmatprep.subr.mxu0 0.0
    %2301 = vmatpush1.msra.mxu0 0.0
    %2302 = vmatprep.subr.mxu0 0.0
    %2303 = vmatpush1.msra.mxu0 0.0
    %2304 = vmatprep.subr.mxu0 0.0
    %2305 = vmatpush1.msra.mxu0 0.0
    %2306 = vmatprep.subr.mxu0 0.0
    %2307 = vmatpush1.msra.mxu0 0.0
    %2308 = vmatprep.subr.mxu0 0.0
    %2309 = vmatpush1.msra.mxu0 0.0
    %2310 = vmatprep.mubr.f32.mxu0 0.0
    %2311 = vmatmul.mubr.f32.gmra.mrb[0].mxu0 %v2158
    %v2312 = vpop.f32.mrb[0].mxu0
    %v2313 = vadd.f32 0.0, %v2312
    %v2314 = vpop.f32.mrb[0].mxu0
    %v2315 = vadd.f32 0.0, %v2314
    %2316 = vdwg.mxu0
    %2317 = vmatprep.subr.mxu0 %v166
    %2318 = vmatpush1.msra.mxu0 %v165
    %2319 = vmatprep.subr.mxu0 %v170
    %2320 = vmatpush1.msra.mxu0 %v169
    %2321 = vmatprep.subr.mxu0 %v174
    %2322 = vmatpush1.msra.mxu0 %v173
    %2323 = vmatprep.subr.mxu0 %v178
    %2324 = vmatpush1.msra.mxu0 %v177
    %2325 = vmatprep.subr.mxu0 %v182
    %2326 = vmatpush1.msra.mxu0 %v181
    %2327 = vmatprep.subr.mxu0 %v186
    %2328 = vmatpush1.msra.mxu0 %v185
    %2329 = vmatprep.subr.mxu0 %v190
    %2330 = vmatpush1.msra.mxu0 %v189
    %2331 = vmatprep.subr.mxu0 %v194
    %2332 = vmatpush1.msra.mxu0 %v193
    %2333 = vmatprep.subr.mxu0 %v198
    %2334 = vmatpush1.msra.mxu0 %v197
    %2335 = vmatprep.subr.mxu0 %v202
    %2336 = vmatpush1.msra.mxu0 %v201
    %2337 = vmatprep.subr.mxu0 %v206
    %2338 = vmatpush1.msra.mxu0 %v205
    %2339 = vmatprep.subr.mxu0 %v210
    %2340 = vmatpush1.msra.mxu0 %v209
    %2341 = vmatprep.subr.mxu0 %v214
    %2342 = vmatpush1.msra.mxu0 %v213
    %2343 = vmatprep.subr.mxu0 %v218
    %2344 = vmatpush1.msra.mxu0 %v217
    %2345 = vmatprep.subr.mxu0 %v222
    %2346 = vmatpush1.msra.mxu0 %v221
    %2347 = vmatprep.subr.mxu0 %v226
    %2348 = vmatpush1.msra.mxu0 %v225
    %2349 = vmatprep.subr.mxu0 0.0
    %2350 = vmatpush1.msra.mxu0 0.0
    %2351 = vmatprep.subr.mxu0 0.0
    %2352 = vmatpush1.msra.mxu0 0.0
    %2353 = vmatprep.subr.mxu0 0.0
    %2354 = vmatpush1.msra.mxu0 0.0
    %2355 = vmatprep.subr.mxu0 0.0
    %2356 = vmatpush1.msra.mxu0 0.0
    %2357 = vmatprep.subr.mxu0 0.0
    %2358 = vmatpush1.msra.mxu0 0.0
    %2359 = vmatprep.subr.mxu0 0.0
    %2360 = vmatpush1.msra.mxu0 0.0
    %2361 = vmatprep.subr.mxu0 0.0
    %2362 = vmatpush1.msra.mxu0 0.0
    %2363 = vmatprep.subr.mxu0 0.0
    %2364 = vmatpush1.msra.mxu0 0.0
    %2365 = vmatprep.subr.mxu0 0.0
    %2366 = vmatpush1.msra.mxu0 0.0
    %2367 = vmatprep.subr.mxu0 0.0
    %2368 = vmatpush1.msra.mxu0 0.0
    %2369 = vmatprep.subr.mxu0 0.0
    %2370 = vmatpush1.msra.mxu0 0.0
    %2371 = vmatprep.subr.mxu0 0.0
    %2372 = vmatpush1.msra.mxu0 0.0
    %2373 = vmatprep.subr.mxu0 0.0
    %2374 = vmatpush1.msra.mxu0 0.0
    %2375 = vmatprep.subr.mxu0 0.0
    %2376 = vmatpush1.msra.mxu0 0.0
    %2377 = vmatprep.subr.mxu0 0.0
    %2378 = vmatpush1.msra.mxu0 0.0
    %2379 = vmatprep.subr.mxu0 0.0
    %2380 = vmatpush1.msra.mxu0 0.0
    %2381 = vmatprep.mubr.f32.mxu0 0.0
    %2382 = vmatmul.mubr.f32.gmra.mrb[0].mxu0 %v2158
    %v2383 = vpop.f32.mrb[0].mxu0
    %v2384 = vadd.f32 0.0, %v2383
    %v2385 = vpop.f32.mrb[0].mxu0
    %v2386 = vadd.f32 0.0, %v2385
    %2387 = vdwg.mxu0
    %2388 = vmatprep.subr.mxu0 %v100
    %2389 = vmatpush1.msra.mxu0 %v99
    %2390 = vmatprep.subr.mxu0 %v104
    %2391 = vmatpush1.msra.mxu0 %v103
    %2392 = vmatprep.subr.mxu0 %v108
    %2393 = vmatpush1.msra.mxu0 %v107
    %2394 = vmatprep.subr.mxu0 %v112
    %2395 = vmatpush1.msra.mxu0 %v111
    %2396 = vmatprep.subr.mxu0 %v116
    %2397 = vmatpush1.msra.mxu0 %v115
    %2398 = vmatprep.subr.mxu0 %v120
    %2399 = vmatpush1.msra.mxu0 %v119
    %2400 = vmatprep.subr.mxu0 %v124
    %2401 = vmatpush1.msra.mxu0 %v123
    %2402 = vmatprep.subr.mxu0 %v128
    %2403 = vmatpush1.msra.mxu0 %v127
    %2404 = vmatprep.subr.mxu0 %v132
    %2405 = vmatpush1.msra.mxu0 %v131
    %2406 = vmatprep.subr.mxu0 %v136
    %2407 = vmatpush1.msra.mxu0 %v135
    %2408 = vmatprep.subr.mxu0 %v140
    %2409 = vmatpush1.msra.mxu0 %v139
    %2410 = vmatprep.subr.mxu0 %v144
    %2411 = vmatpush1.msra.mxu0 %v143
    %2412 = vmatprep.subr.mxu0 %v148
    %2413 = vmatpush1.msra.mxu0 %v147
    %2414 = vmatprep.subr.mxu0 %v152
    %2415 = vmatpush1.msra.mxu0 %v151
    %2416 = vmatprep.subr.mxu0 %v156
    %2417 = vmatpush1.msra.mxu0 %v155
    %2418 = vmatprep.subr.mxu0 %v160
    %2419 = vmatpush1.msra.mxu0 %v159
    %2420 = vmatprep.subr.mxu0 0.0
    %2421 = vmatpush1.msra.mxu0 0.0
    %2422 = vmatprep.subr.mxu0 0.0
    %2423 = vmatpush1.msra.mxu0 0.0
    %2424 = vmatprep.subr.mxu0 0.0
    %2425 = vmatpush1.msra.mxu0 0.0
    %2426 = vmatprep.subr.mxu0 0.0
    %2427 = vmatpush1.msra.mxu0 0.0
    %2428 = vmatprep.subr.mxu0 0.0
    %2429 = vmatpush1.msra.mxu0 0.0
    %2430 = vmatprep.subr.mxu0 0.0
    %2431 = vmatpush1.msra.mxu0 0.0
    %2432 = vmatprep.subr.mxu0 0.0
    %2433 = vmatpush1.msra.mxu0 0.0
    %2434 = vmatprep.subr.mxu0 0.0
    %2435 = vmatpush1.msra.mxu0 0.0
    %2436 = vmatprep.subr.mxu0 0.0
    %2437 = vmatpush1.msra.mxu0 0.0
    %2438 = vmatprep.subr.mxu0 0.0
    %2439 = vmatpush1.msra.mxu0 0.0
    %2440 = vmatprep.subr.mxu0 0.0
    %2441 = vmatpush1.msra.mxu0 0.0
    %2442 = vmatprep.subr.mxu0 0.0
    %2443 = vmatpush1.msra.mxu0 0.0
    %2444 = vmatprep.subr.mxu0 0.0
    %2445 = vmatpush1.msra.mxu0 0.0
    %2446 = vmatprep.subr.mxu0 0.0
    %2447 = vmatpush1.msra.mxu0 0.0
    %2448 = vmatprep.subr.mxu0 0.0
    %2449 = vmatpush1.msra.mxu0 0.0
    %2450 = vmatprep.subr.mxu0 0.0
    %2451 = vmatpush1.msra.mxu0 0.0
    %2452 = vmatprep.mubr.f32.mxu0 0.0
    %2453 = vmatmul.mubr.f32.gmra.mrb[0].mxu0 %v2245
    %v2454 = vpop.f32.mrb[0].mxu0
    %v2455 = vadd.f32 %v2313, %v2454
    %v2456 = vpop.f32.mrb[0].mxu0
    %v2457 = vadd.f32 %v2315, %v2456
    %2458 = vdwg.mxu0
    %2459 = vmatprep.subr.mxu0 %v102
    %2460 = vmatpush1.msra.mxu0 %v101
    %2461 = vmatprep.subr.mxu0 %v106
    %2462 = vmatpush1.msra.mxu0 %v105
    %2463 = vmatprep.subr.mxu0 %v110
    %2464 = vmatpush1.msra.mxu0 %v109
    %2465 = vmatprep.subr.mxu0 %v114
    %2466 = vmatpush1.msra.mxu0 %v113
    %2467 = vmatprep.subr.mxu0 %v118
    %2468 = vmatpush1.msra.mxu0 %v117
    %2469 = vmatprep.subr.mxu0 %v122
    %2470 = vmatpush1.msra.mxu0 %v121
    %2471 = vmatprep.subr.mxu0 %v126
    %2472 = vmatpush1.msra.mxu0 %v125
    %2473 = vmatprep.subr.mxu0 %v130
    %2474 = vmatpush1.msra.mxu0 %v129
    %2475 = vmatprep.subr.mxu0 %v134
    %2476 = vmatpush1.msra.mxu0 %v133
    %2477 = vmatprep.subr.mxu0 %v138
    %2478 = vmatpush1.msra.mxu0 %v137
    %2479 = vmatprep.subr.mxu0 %v142
    %2480 = vmatpush1.msra.mxu0 %v141
    %2481 = vmatprep.subr.mxu0 %v146
    %2482 = vmatpush1.msra.mxu0 %v145
    %2483 = vmatprep.subr.mxu0 %v150
    %2484 = vmatpush1.msra.mxu0 %v149
    %2485 = vmatprep.subr.mxu0 %v154
    %2486 = vmatpush1.msra.mxu0 %v153
    %2487 = vmatprep.subr.mxu0 %v158
    %2488 = vmatpush1.msra.mxu0 %v157
    %2489 = vmatprep.subr.mxu0 %v162
    %2490 = vmatpush1.msra.mxu0 %v161
    %2491 = vmatprep.subr.mxu0 0.0
    %2492 = vmatpush1.msra.mxu0 0.0
    %2493 = vmatprep.subr.mxu0 0.0
    %2494 = vmatpush1.msra.mxu0 0.0
    %2495 = vmatprep.subr.mxu0 0.0
    %2496 = vmatpush1.msra.mxu0 0.0
    %2497 = vmatprep.subr.mxu0 0.0
    %2498 = vmatpush1.msra.mxu0 0.0
    %2499 = vmatprep.subr.mxu0 0.0
    %2500 = vmatpush1.msra.mxu0 0.0
    %2501 = vmatprep.subr.mxu0 0.0
    %2502 = vmatpush1.msra.mxu0 0.0
    %2503 = vmatprep.subr.mxu0 0.0
    %2504 = vmatpush1.msra.mxu0 0.0
    %2505 = vmatprep.subr.mxu0 0.0
    %2506 = vmatpush1.msra.mxu0 0.0
    %2507 = vmatprep.subr.mxu0 0.0
    %2508 = vmatpush1.msra.mxu0 0.0
    %2509 = vmatprep.subr.mxu0 0.0
    %2510 = vmatpush1.msra.mxu0 0.0
    %2511 = vmatprep.subr.mxu0 0.0
    %2512 = vmatpush1.msra.mxu0 0.0
    %2513 = vmatprep.subr.mxu0 0.0
    %2514 = vmatpush1.msra.mxu0 0.0
    %2515 = vmatprep.subr.mxu0 0.0
    %2516 = vmatpush1.msra.mxu0 0.0
    %2517 = vmatprep.subr.mxu0 0.0
    %2518 = vmatpush1.msra.mxu0 0.0
    %2519 = vmatprep.subr.mxu0 0.0
    %2520 = vmatpush1.msra.mxu0 0.0
    %2521 = vmatprep.subr.mxu0 0.0
    %2522 = vmatpush1.msra.mxu0 0.0
    %2523 = vmatprep.mubr.f32.mxu0 0.0
    %2524 = vmatmul.mubr.f32.gmra.mrb[0].mxu0 %v2245
    %v2525 = vpop.f32.mrb[0].mxu0
    %v2526 = vadd.f32 %v2384, %v2525
    %v2527 = vpop.f32.mrb[0].mxu0
    %v2528 = vadd.f32 %v2386, %v2527
    %2529 = vdwg.mxu0
    %v2530 = vadd.f32 %v2455, %v542
    %v2531 = vadd.f32 %v2457, %v546
    %v2532 = vadd.f32 %v2526, %v550
    %v2533 = vadd.f32 %v2528, %v554
    %v2534 = vxor.u32 %v2530, 2147483648
    %v2535 = vmul.f32 %v2534, 1.442695
    %v2536 = vpow.pop %v2535
    %v2537 = vadd.f32 %v2536, 1.0
    %v2538 = vrcp.pop %v2537
    %v2539 = vmul.f32 1.0, %v2538
    %v2540 = vxor.u32 %v2531, 2147483648
    %v2541 = vmul.f32 %v2540, 1.442695
    %v2542 = vpow.pop %v2541
    %v2543 = vadd.f32 %v2542, 1.0
    %v2544 = vrcp.pop %v2543
    %v2545 = vmul.f32 1.0, %v2544
    %v2546 = vmul.f32 %v2539, %v2533
    %v2547 = vadd.f32 %v2532, %v2546
    %v2548 = vtanh.pop %v2547
    %v2549 = vsub.f32 1.0, %v2545
    %v2550 = vmul.f32 %v2549, %v2548
    %v2551 = vmul.f32 %v2545, %v2158
    %v2552 = vadd.f32 %v2550, %v2551
    %2553 = vmatprep.subr.mxu0 0.0
    %2554 = vmatpush1.msra.mxu0 %v228
    %2555 = vmatprep.subr.mxu0 0.0
    %2556 = vmatpush1.msra.mxu0 %v229
    %2557 = vmatprep.subr.mxu0 0.0
    %2558 = vmatpush1.msra.mxu0 %v230
    %2559 = vmatprep.subr.mxu0 0.0
    %2560 = vmatpush1.msra.mxu0 %v231
    %2561 = vmatprep.subr.mxu0 0.0
    %2562 = vmatpush1.msra.mxu0 %v232
    %2563 = vmatprep.subr.mxu0 0.0
    %2564 = vmatpush1.msra.mxu0 %v233
    %2565 = vmatprep.subr.mxu0 0.0
    %2566 = vmatpush1.msra.mxu0 %v234
    %2567 = vmatprep.subr.mxu0 0.0
    %2568 = vmatpush1.msra.mxu0 %v235
    %2569 = vmatprep.subr.mxu0 0.0
    %2570 = vmatpush1.msra.mxu0 %v236
    %2571 = vmatprep.subr.mxu0 0.0
    %2572 = vmatpush1.msra.mxu0 %v237
    %2573 = vmatprep.subr.mxu0 0.0
    %2574 = vmatpush1.msra.mxu0 %v238
    %2575 = vmatprep.subr.mxu0 0.0
    %2576 = vmatpush1.msra.mxu0 %v239
    %2577 = vmatprep.subr.mxu0 0.0
    %2578 = vmatpush1.msra.mxu0 %v240
    %2579 = vmatprep.subr.mxu0 0.0
    %2580 = vmatpush1.msra.mxu0 %v241
    %2581 = vmatprep.subr.mxu0 0.0
    %2582 = vmatpush1.msra.mxu0 %v242
    %2583 = vmatprep.subr.mxu0 0.0
    %2584 = vmatpush1.msra.mxu0 %v243
    %2585 = vmatprep.subr.mxu0 0.0
    %2586 = vmatpush1.msra.mxu0 0.0
    %2587 = vmatprep.subr.mxu0 0.0
    %2588 = vmatpush1.msra.mxu0 0.0
    %2589 = vmatprep.subr.mxu0 0.0
    %2590 = vmatpush1.msra.mxu0 0.0
    %2591 = vmatprep.subr.mxu0 0.0
    %2592 = vmatpush1.msra.mxu0 0.0
    %2593 = vmatprep.subr.mxu0 0.0
    %2594 = vmatpush1.msra.mxu0 0.0
    %2595 = vmatprep.subr.mxu0 0.0
    %2596 = vmatpush1.msra.mxu0 0.0
    %2597 = vmatprep.subr.mxu0 0.0
    %2598 = vmatpush1.msra.mxu0 0.0
    %2599 = vmatprep.subr.mxu0 0.0
    %2600 = vmatpush1.msra.mxu0 0.0
    %2601 = vmatprep.subr.mxu0 0.0
    %2602 = vmatpush1.msra.mxu0 0.0
    %2603 = vmatprep.subr.mxu0 0.0
    %2604 = vmatpush1.msra.mxu0 0.0
    %2605 = vmatprep.subr.mxu0 0.0
    %2606 = vmatpush1.msra.mxu0 0.0
    %2607 = vmatprep.subr.mxu0 0.0
    %2608 = vmatpush1.msra.mxu0 0.0
    %2609 = vmatprep.subr.mxu0 0.0
    %2610 = vmatpush1.msra.mxu0 0.0
    %2611 = vmatprep.subr.mxu0 0.0
    %2612 = vmatpush1.msra.mxu0 0.0
    %2613 = vmatprep.subr.mxu0 0.0
    %2614 = vmatpush1.msra.mxu0 0.0
    %2615 = vmatprep.subr.mxu0 0.0
    %2616 = vmatpush1.msra.mxu0 0.0
    %2617 = vmatprep.mubr.f32.mxu0 0.0
    %2618 = vmatmul.mubr.f32.gmra.mrb[0].mxu0 %v2552
    %v2619 = vpop.f32.mrb[0].mxu0
    %v2620 = vadd.f32 %v248, %v2619
    %v2621 = vpop.f32.mrb[0].mxu0
    %2622 = vdwg.mxu0
    %v2623 = vsel %vm652, %v2620, -inf
    %2624 = vmax.xlane.f32.xlu0 %v2623
    %v2625 = vpop.xlane.xlu0 %2624
    %v2626 = vsub.f32 %v2620, %v2625
    %v2627 = vmul.f32 %v2626, 1.442695
    %v2628 = vpow.pop %v2627
    %v2629 = vsel %vm652, %v2628, 0.0
    %2630 = vadd.xlane.f32.xlu0 %v2629
    %v2631 = vpop.xlane.xlu0 %2630
    %v2632 = vlog2.pop %v2631
    %v2633 = vmul.f32 %v2632, 0.6931472
    %v2634 = vsub.f32 %v2626, %v2633
    %2635 = vst [vmem:[#allocation12 + $0x5] sm:$0x1] %v2634
    %2636 = vst [vmem:[#allocation13] sm:$0x1] %v2552
    // Predicated region
    $region54: #{tpu_custom_call.1} parent=1 // pred_check
      _
    $region55: #{tpu_custom_call.1} parent=1 // pred_check_branch
      %2638 = sbr.rel (0) target = $region57
    $region56: #{tpu_custom_call.1} parent=1 // pred_region
      %s2640 = ssub.s32 128, 128
      %2641 = vsyncadd [#allocation4], %s2640
      %s2643 = sshll.u32 [#allocation12], 4
      %s2644 = int_to_ptr.vmem [resolvable:$true] %s2643
      %2646 = dma.vmem_to_hbm [thread:$0]  %s2644, 128, %s8, [#allocation4]
    $region57: #{tpu_custom_call.1} parent=1 // pred_fallthru
      _
    // Predicated region
    $region58: #{tpu_custom_call.1} parent=1 // pred_check
      _
    $region59: #{tpu_custom_call.1} parent=1 // pred_check_branch
      %2648 = sbr.rel (0) target = $region61
    $region60: #{tpu_custom_call.1} parent=1 // pred_region
      %s2650 = ssub.s32 16, 16
      %2651 = vsyncadd [#allocation14], %s2650
      %s2653 = sshll.u32 [#allocation13], 4
      %s2654 = int_to_ptr.vmem [resolvable:$true] %s2653
      %2656 = dma.vmem_to_hbm [thread:$0]  %s2654, 16, %s9, [#allocation14]
    $region61: #{tpu_custom_call.1} parent=1 // pred_fallthru
      _
    // Predicated region
    $region62: #{tpu_custom_call.1} parent=1 // pred_check
      _
    $region63: #{tpu_custom_call.1} parent=1 // pred_check_branch
      %2658 = sbr.rel (0) target = $region65
    $region64: #{tpu_custom_call.1} parent=1 // pred_region
      %2659 = dma.done [#allocation4], 128
    $region65: #{tpu_custom_call.1} parent=1 // pred_fallthru
      _
    // Predicated region
    $region66: #{tpu_custom_call.1} parent=1 // pred_check
      _
    $region67: #{tpu_custom_call.1} parent=1 // pred_check_branch
      %2661 = sbr.rel (0) target = $region69
    $region68: #{tpu_custom_call.1} parent=1 // pred_region
      %2662 = dma.done [#allocation14], 16
    $region69: #{tpu_custom_call.1} parent=1 // pred_fallthru
      _
    %2663 = vsyncpa [#allocation3], 1
    %2664 = vsyncpa [#allocation8], 1
    %2665 = vsyncpa [#allocation11], 1
    %2666 = vsyncpa [#allocation4], 1
    %2667 = vsyncpa [#allocation14], 1
    %2668 = vsyncpa [#allocation5], 1

</llo_original>
